<compile_context>
chip_gen: v5e
topology: v5e:2x2
jax: 0.10.0
libtpu: 0.0.40
codegen_flags: <defaults>
</compile_context>

<pallas_src>
import functools

import jax
import jax.numpy as jnp
from jax.experimental import pallas as pl
from jax.experimental.pallas import tpu as pltpu


# ---------------------------------------------------------------------------
# Pallas kernels
# ---------------------------------------------------------------------------

def _matmul_bias_kernel(a_ref, b_ref, bias_ref, o_ref, *, relu):
    """Single-shot O = A @ B + bias (full-K block, no accumulator/K loop)."""
    r = jnp.dot(a_ref[...], b_ref[...], preferred_element_type=jnp.float32)
    r = r + bias_ref[...]                       # (tm, N) + (1, N) broadcast
    if relu:
        r = jnp.maximum(r, 0.0)
    o_ref[...] = r.astype(o_ref.dtype)


def _fused_fc_kernel(x_ref, w1_ref, b1_ref, w2_ref, b2_ref, o_ref):
    """out = relu(x @ w1 + b1) @ w2 + b2 — hidden activation stays on-chip."""
    h = jnp.dot(x_ref[...], w1_ref[...], preferred_element_type=jnp.float32)
    h = jnp.maximum(h + b1_ref[...], 0.0)
    o = jnp.dot(h, w2_ref[...], preferred_element_type=jnp.float32)
    o_ref[...] = (o + b2_ref[...]).astype(o_ref.dtype)


def _max4_kernel(a_ref, b_ref, c_ref, d_ref, o_ref):
    """Elementwise max of the four taps of a 2x2/2 max-pool (lane-dense)."""
    o_ref[...] = jnp.maximum(jnp.maximum(a_ref[...], b_ref[...]),
                             jnp.maximum(c_ref[...], d_ref[...]))


# ---------------------------------------------------------------------------
# Wrappers around pallas_call
# ---------------------------------------------------------------------------

def _pick_tm(M, target=2048):
    """Largest row tile <= target that divides M and keeps the 8-sublane rule.

    Falls back to the full M (always legal: block dim == full array dim)."""
    if M <= target or M % 8 != 0:
        return M
    tm = (target // 8) * 8
    while tm >= 8:
        if M % tm == 0:
            return tm
        tm -= 8
    return M


def matmul_bias(a, b, bias_row, *, relu=False, tm=None):
    """a: (M, K), b: (K, N), bias_row: (1, N) -> (M, N) float32.

    No padding: K and N blocks equal the full array dims; only M is tiled."""
    M, K = a.shape
    K2, N = b.shape
    assert K == K2 and bias_row.shape == (1, N)
    if tm is None:
        tm = _pick_tm(M)
    assert M % tm == 0 and (tm == M or tm % 8 == 0), (M, tm)

    kernel = functools.partial(_matmul_bias_kernel, relu=relu)
    return pl.pallas_call(
        kernel,
        out_shape=jax.ShapeDtypeStruct((M, N), jnp.float32),
        grid=(M // tm,),
        in_specs=[
            pl.BlockSpec((tm, K), lambda i: (i, 0)),
            pl.BlockSpec((K, N), lambda i: (0, 0)),
            pl.BlockSpec((1, N), lambda i: (0, 0)),
        ],
        out_specs=pl.BlockSpec((tm, N), lambda i: (i, 0)),
        compiler_params=pltpu.CompilerParams(
            dimension_semantics=("parallel",)),
    )(a, b, bias_row)


def fused_fc(x, w1, b1, w2, b2):
    """relu(x @ w1 + b1) @ w2 + b2 in one pallas_call (single block, tiny M)."""
    M, K1 = x.shape
    _, H = w1.shape
    _, N = w2.shape
    return pl.pallas_call(
        _fused_fc_kernel,
        out_shape=jax.ShapeDtypeStruct((M, N), jnp.float32),
        grid=(1,),
        in_specs=[
            pl.BlockSpec((M, K1), lambda i: (0, 0)),
            pl.BlockSpec((K1, H), lambda i: (0, 0)),
            pl.BlockSpec((1, H), lambda i: (0, 0)),
            pl.BlockSpec((H, N), lambda i: (0, 0)),
            pl.BlockSpec((1, N), lambda i: (0, 0)),
        ],
        out_specs=pl.BlockSpec((M, N), lambda i: (0, 0)),
    )(x, w1, b1, w2, b2)


def maxpool2x2(x):
    """x: (B, H, W, C) NHWC -> (B, H//2, W//2, C), kernel=2, stride=2."""
    B, H, W, C = x.shape
    assert H % 2 == 0 and W % 2 == 0  # guaranteed by ModelB's geometry
    oh, ow = H // 2, W // 2
    taps = [x[:, 0::2, 0::2, :], x[:, 0::2, 1::2, :],
            x[:, 1::2, 0::2, :], x[:, 1::2, 1::2, :]]
    # Lane-dense layout: elementwise max is order-agnostic as long as all four
    # taps (and the output) share the same row-major flattening.
    n = B * oh * ow * C
    shape2d = (n // 128, 128) if n % 128 == 0 else (B * oh * ow, C)
    flat = [t.reshape(shape2d) for t in taps]
    out = pl.pallas_call(
        _max4_kernel,
        out_shape=jax.ShapeDtypeStruct(shape2d, x.dtype),
        grid=(1,),
        in_specs=[pl.BlockSpec(shape2d, lambda i: (0, 0))] * 4,
        out_specs=pl.BlockSpec(shape2d, lambda i: (0, 0)),
    )(*flat)
    return out.reshape(B, oh, ow, C)


def _im2col(x, kh, kw):
    """x: (B, H, W, C) -> (B*oh*ow, kh*kw*C), feature order (di, dj, c)."""
    B, H, W, C = x.shape
    oh, ow = H - kh + 1, W - kw + 1
    cols = [x[:, di:di + oh, dj:dj + ow, :]
            for di in range(kh) for dj in range(kw)]
    return jnp.concatenate(cols, axis=-1).reshape(B * oh * ow, kh * kw * C)


def conv2d_relu(x, w_mat, b_row, *, ksize, tm=None):
    """VALID conv, stride 1, + bias + ReLU.

    x: NHWC, w_mat: (ksize*ksize*IC, OC) pre-laid-out, b_row: (1, OC)."""
    B, H, W_, C = x.shape
    K, OC = w_mat.shape
    oh, ow = H - ksize + 1, W_ - ksize + 1
    # Patch extraction stays as fused XLA glue; streaming taps through a grid
    # axis would save patch HBM traffic on conv1 but is not worth the
    # complexity at this problem size.
    patches = _im2col(x, ksize, ksize)
    y = matmul_bias(patches, w_mat, b_row, relu=True, tm=tm)
    return y.reshape(B, oh, ow, OC)


# ---------------------------------------------------------------------------
# One-time parameter layout preparation (hoisted out of the forward path)
# ---------------------------------------------------------------------------

def prepare_params(p):
    def conv_w(w):  # (OC, IC, KH, KW) -> (KH*KW*IC, OC), matches _im2col order
        OC, IC, KH, KW = w.shape
        return jnp.transpose(w, (2, 3, 1, 0)).reshape(KH * KW * IC, OC)

    return {
        "w1": conv_w(p["w1"]), "b1": p["b1"].reshape(1, -1),
        "w2": conv_w(p["w2"]), "b2": p["b2"].reshape(1, -1),
        "w3": conv_w(p["w3"]), "b3": p["b3"].reshape(1, -1),
        "wf1": p["wf1"], "bf1": p["bf1"].reshape(1, -1),
        "wf2": p["wf2"], "bf2": p["bf2"].reshape(1, -1),
    }


# ---------------------------------------------------------------------------
# ModelB forward (Pallas path)
# ---------------------------------------------------------------------------

@jax.jit
def model_b_forward(x_nchw, pp):
    B = x_nchw.shape[0]
    x = jnp.transpose(x_nchw, (0, 2, 3, 1))                 # NCHW -> NHWC

    h1 = conv2d_relu(x, pp["w1"], pp["b1"], ksize=9)        # (B, 40, 40, f1)
    p1 = maxpool2x2(h1)                                     # (B, 20, 20, f1)
    temp = conv2d_relu(p1, pp["w2"], pp["b2"], ksize=5)     # (B, 16, 16, f2)
    p2 = maxpool2x2(temp)                                   # (B,  8,  8, f2)
    h3 = conv2d_relu(p2, pp["w3"], pp["b3"], ksize=3)       # (B,  6,  6, f3)

    f3, f2 = h3.shape[3], temp.shape[3]
    # PyTorch .view flattens NCHW, i.e. (C, H, W) order per sample.
    x_flat = jnp.transpose(h3, (0, 3, 1, 2)).reshape(B, 6 * 6 * f3)
    temp_flat = jnp.transpose(temp, (0, 3, 1, 2)).reshape(B, 16 * 16 * f2)
    feat = jnp.concatenate([x_flat, temp_flat], axis=1)

    return fused_fc(feat, pp["wf1"], pp["bf1"], pp["wf2"], pp["bf2"])


# ---------------------------------------------------------------------------
# Pure-JAX reference (for validation only)
# ---------------------------------------------------------------------------

def reference_forward(x_nchw, p, feature2, feature3):
    B = x_nchw.shape[0]
    x = jnp.transpose(x_nchw, (0, 2, 3, 1))

    def conv(x, w, b):
        w_hwio = jnp.transpose(w, (2, 3, 1, 0))
        y = jax.lax.conv_general_dilated(
            x, w_hwio, (1, 1), "VALID",
            dimension_numbers=("NHWC", "HWIO", "NHWC"),
            precision=jax.lax.Precision.HIGHEST)
        return jnp.maximum(y + b, 0.0)

    def pool(x):
        return jax.lax.reduce_window(x, -jnp.inf, jax.lax.max,
                                     (1, 2, 2, 1), (1, 2, 2, 1), "VALID")

    h1 = conv(x, p["w1"], p["b1"]); p1 = pool(h1)
    temp = conv(p1, p["w2"], p["b2"]); p2 = pool(temp)
    h3 = conv(p2, p["w3"], p["b3"])
    x_flat = jnp.transpose(h3, (0, 3, 1, 2)).reshape(B, 6 * 6 * feature3)
    temp_flat = jnp.transpose(temp, (0, 3, 1, 2)).reshape(B, 16 * 16 * feature2)
    feat = jnp.concatenate([x_flat, temp_flat], axis=1)
    hp = jax.lax.Precision.HIGHEST
    h = jnp.maximum(jnp.dot(feat, p["wf1"], precision=hp) + p["bf1"], 0.0)
    return jnp.dot(h, p["wf2"], precision=hp) + p["bf2"]


# ---------------------------------------------------------------------------
# Deterministic parameter init (PyTorch-style uniform(-1/sqrt(fan_in), +))
# ---------------------------------------------------------------------------

def init_params(key, feature1, feature2, feature3, hidden1):
    def u(key, shape, fan_in):
        bound = 1.0 / (fan_in ** 0.5)
        return jax.random.uniform(key, shape, jnp.float32, -bound, bound)

    ks = jax.random.split(key, 10)
    fc1_in = 6 * 6 * feature3 + 16 * 16 * feature2
    return {
        "w1": u(ks[0], (feature1, 3, 9, 9), 3 * 9 * 9),
        "b1": u(ks[1], (feature1,), 3 * 9 * 9),
        "w2": u(ks[2], (feature2, feature1, 5, 5), feature1 * 25),
        "b2": u(ks[3], (feature2,), feature1 * 25),
        "w3": u(ks[4], (feature3, feature2, 3, 3), feature2 * 9),
        "b3": u(ks[5], (feature3,), feature2 * 9),
        "wf1": u(ks[6], (fc1_in, hidden1), fc1_in),     # stored (in, out)
        "bf1": u(ks[7], (hidden1,), fc1_in),
        "wf2": u(ks[8], (hidden1, 24), hidden1),
        "bf2": u(ks[9], (24,), hidden1),
    }


if __name__ == "__main__":
    # Geometry forced by the module: 48x48 input -> conv9 -> 40 -> pool -> 20
    # -> conv5 -> 16 (temp) -> pool -> 8 -> conv3 -> 6.
    feature1, feature2, feature3, hidden1 = 8, 8, 8, 32
    B = 2

    key = jax.random.PRNGKey(0)
    k_x, k_p = jax.random.split(key)
    x = jax.random.normal(k_x, (B, 3, 48, 48), jnp.float32)   # NCHW like PyTorch
    params = init_params(k_p, feature1, feature2, feature3, hidden1)
    pp = prepare_params(params)        # one-time weight layout prep (off hot path)

    out = jax.block_until_ready(model_b_forward(x, pp))
    assert out.shape == (B, 24), out.shape
    assert bool(jnp.all(jnp.isfinite(out)))

    ref = jax.block_until_ready(reference_forward(x, params, feature2, feature3))
    # Kernel matmuls run at default MXU precision (single bf16 pass, f32 acc),
    # reference runs at HIGHEST, so allow a modest tolerance.
    err = float(jnp.max(jnp.abs(out - ref)))
    assert jnp.allclose(out, ref, rtol=2e-2, atol=2e-2), err

    print("KERNEL_OK")
</pallas_src>

<mosaic_0001>
module attributes {stable_mosaic.version = 11 : i64} {
  func.func @_matmul_bias_kernel(%arg0: i32, %arg1: memref<1600x243xf32, #tpu.memory_space<vmem>>, %arg2: memref<243x8xf32, #tpu.memory_space<vmem>>, %arg3: memref<1x8xf32, #tpu.memory_space<vmem>>, %arg4: memref<1600x8xf32, #tpu.memory_space<vmem>>) attributes {dimension_semantics = [#tpu.dimension_semantics<parallel>], iteration_bounds = array<i64: 2>, scalar_prefetch = 0 : i64, scratch_operands = 0 : i64, tpu.core_type = #tpu.core_type<tc>, window_params = [{transform_indices = @transform_0, window_bounds = array<i64: 1600, 243>}, {pipeline_mode = #tpu.pipeline_mode<synchronous>, transform_indices = @transform_1, window_bounds = array<i64: 243, 8>}, {pipeline_mode = #tpu.pipeline_mode<synchronous>, transform_indices = @transform_2, window_bounds = array<i64: 1, 8>}, {transform_indices = @transform_3, window_bounds = array<i64: 1600, 8>}]} {
    %c0 = arith.constant 0 : index
    %c0_0 = arith.constant 0 : index
    %0 = vector.load %arg1[%c0, %c0_0] : memref<1600x243xf32, #tpu.memory_space<vmem>>, vector<1600x243xf32>
    %c0_1 = arith.constant 0 : index
    %c0_2 = arith.constant 0 : index
    %1 = vector.load %arg2[%c0_1, %c0_2] : memref<243x8xf32, #tpu.memory_space<vmem>>, vector<243x8xf32>
    %cst = arith.constant dense<0.000000e+00> : vector<1600x8xf32>
    %2 = tpu.matmul %0, %1, %cst {dimension_numbers = #tpu.dot_dimension_numbers<[1], [0], [0], [1], [0, 0, 1, 1], [], []>} : vector<1600x243xf32>, vector<243x8xf32>, vector<1600x8xf32> -> vector<1600x8xf32>
    %c0_3 = arith.constant 0 : index
    %c0_4 = arith.constant 0 : index
    %3 = vector.load %arg3[%c0_3, %c0_4] : memref<1x8xf32, #tpu.memory_space<vmem>>, vector<1x8xf32>
    %4 = vector.broadcast %3 : vector<1x8xf32> to vector<1600x8xf32>
    %5 = arith.addf %2, %4 : vector<1600x8xf32>
    %cst_5 = arith.constant 0.000000e+00 : f32
    %6 = vector.broadcast %cst_5 : f32 to vector<1600x8xf32>
    %7 = arith.maximumf %5, %6 : vector<1600x8xf32>
    %c0_6 = arith.constant 0 : index
    %c0_7 = arith.constant 0 : index
    %8 = vector.load %arg4[%c0_6, %c0_7] : memref<1600x8xf32, #tpu.memory_space<vmem>>, vector<1600x8xf32>
    tpu.vector_store %arg4[%c0_6, %c0_7], %7 {strides = array<i32>} : memref<1600x8xf32, #tpu.memory_space<vmem>>, vector<1600x8xf32>,
    return
  }
  func.func @transform_0(%arg0: i32) -> (i32, i32) {
    %c0_i32 = arith.constant 0 : i32
    %c0_i32_0 = arith.constant 0 : i32
    return %arg0, %c0_i32 : i32, i32
  }
  func.func @transform_1(%arg0: i32) -> (i32, i32) {
    %c0_i32 = arith.constant 0 : i32
    %c0_i32_0 = arith.constant 0 : i32
    %c0_i32_1 = arith.constant 0 : i32
    return %c0_i32, %c0_i32_0 : i32, i32
  }
  func.func @transform_2(%arg0: i32) -> (i32, i32) {
    %c0_i32 = arith.constant 0 : i32
    %c0_i32_0 = arith.constant 0 : i32
    %c0_i32_1 = arith.constant 0 : i32
    return %c0_i32, %c0_i32_0 : i32, i32
  }
  func.func @transform_3(%arg0: i32) -> (i32, i32) {
    %c0_i32 = arith.constant 0 : i32
    %c0_i32_0 = arith.constant 0 : i32
    return %arg0, %c0_i32 : i32, i32
  }
}

module attributes {stable_mosaic.version = 11 : i64} {
  func.func @_max4_kernel(%arg0: i32, %arg1: memref<50x128xf32, #tpu.memory_space<vmem>>, %arg2: memref<50x128xf32, #tpu.memory_space<vmem>>, %arg3: memref<50x128xf32, #tpu.memory_space<vmem>>, %arg4: memref<50x128xf32, #tpu.memory_space<vmem>>, %arg5: memref<50x128xf32, #tpu.memory_space<vmem>>) attributes {dimension_semantics = [#tpu.dimension_semantics<arbitrary>], iteration_bounds = array<i64: 1>, scalar_prefetch = 0 : i64, scratch_operands = 0 : i64, tpu.core_type = #tpu.core_type<tc>, window_params = [{pipeline_mode = #tpu.pipeline_mode<synchronous>, transform_indices = @transform_0, window_bounds = array<i64: 50, 128>}, {pipeline_mode = #tpu.pipeline_mode<synchronous>, transform_indices = @transform_1, window_bounds = array<i64: 50, 128>}, {pipeline_mode = #tpu.pipeline_mode<synchronous>, transform_indices = @transform_2, window_bounds = array<i64: 50, 128>}, {pipeline_mode = #tpu.pipeline_mode<synchronous>, transform_indices = @transform_3, window_bounds = array<i64: 50, 128>}, {pipeline_mode = #tpu.pipeline_mode<synchronous>, transform_indices = @transform_4, window_bounds = array<i64: 50, 128>}]} {
    %c0 = arith.constant 0 : index
    %c0_0 = arith.constant 0 : index
    %0 = vector.load %arg1[%c0, %c0_0] : memref<50x128xf32, #tpu.memory_space<vmem>>, vector<50x128xf32>
    %c0_1 = arith.constant 0 : index
    %c0_2 = arith.constant 0 : index
    %1 = vector.load %arg2[%c0_1, %c0_2] : memref<50x128xf32, #tpu.memory_space<vmem>>, vector<50x128xf32>
    %2 = arith.maximumf %0, %1 : vector<50x128xf32>
    %c0_3 = arith.constant 0 : index
    %c0_4 = arith.constant 0 : index
    %3 = vector.load %arg3[%c0_3, %c0_4] : memref<50x128xf32, #tpu.memory_space<vmem>>, vector<50x128xf32>
    %c0_5 = arith.constant 0 : index
    %c0_6 = arith.constant 0 : index
    %4 = vector.load %arg4[%c0_5, %c0_6] : memref<50x128xf32, #tpu.memory_space<vmem>>, vector<50x128xf32>
    %5 = arith.maximumf %3, %4 : vector<50x128xf32>
    %6 = arith.maximumf %2, %5 : vector<50x128xf32>
    %c0_7 = arith.constant 0 : index
    %c0_8 = arith.constant 0 : index
    %7 = vector.load %arg5[%c0_7, %c0_8] : memref<50x128xf32, #tpu.memory_space<vmem>>, vector<50x128xf32>
    tpu.vector_store %arg5[%c0_7, %c0_8], %6 {strides = array<i32>} : memref<50x128xf32, #tpu.memory_space<vmem>>, vector<50x128xf32>,
    return
  }
  func.func @transform_0(%arg0: i32) -> (i32, i32) {
    %c0_i32 = arith.constant 0 : i32
    %c0_i32_0 = arith.constant 0 : i32
    %c0_i32_1 = arith.constant 0 : i32
    return %c0_i32, %c0_i32_0 : i32, i32
  }
  func.func @transform_1(%arg0: i32) -> (i32, i32) {
    %c0_i32 = arith.constant 0 : i32
    %c0_i32_0 = arith.constant 0 : i32
    %c0_i32_1 = arith.constant 0 : i32
    return %c0_i32, %c0_i32_0 : i32, i32
  }
  func.func @transform_2(%arg0: i32) -> (i32, i32) {
    %c0_i32 = arith.constant 0 : i32
    %c0_i32_0 = arith.constant 0 : i32
    %c0_i32_1 = arith.constant 0 : i32
    return %c0_i32, %c0_i32_0 : i32, i32
  }
  func.func @transform_3(%arg0: i32) -> (i32, i32) {
    %c0_i32 = arith.constant 0 : i32
    %c0_i32_0 = arith.constant 0 : i32
    %c0_i32_1 = arith.constant 0 : i32
    return %c0_i32, %c0_i32_0 : i32, i32
  }
  func.func @transform_4(%arg0: i32) -> (i32, i32) {
    %c0_i32 = arith.constant 0 : i32
    %c0_i32_0 = arith.constant 0 : i32
    %c0_i32_1 = arith.constant 0 : i32
    return %c0_i32, %c0_i32_0 : i32, i32
  }
}

module attributes {stable_mosaic.version = 11 : i64} {
  func.func @_matmul_bias_kernel(%arg0: i32, %arg1: memref<512x200xf32, #tpu.memory_space<vmem>>, %arg2: memref<200x8xf32, #tpu.memory_space<vmem>>, %arg3: memref<1x8xf32, #tpu.memory_space<vmem>>, %arg4: memref<512x8xf32, #tpu.memory_space<vmem>>) attributes {dimension_semantics = [#tpu.dimension_semantics<parallel>], iteration_bounds = array<i64: 1>, scalar_prefetch = 0 : i64, scratch_operands = 0 : i64, tpu.core_type = #tpu.core_type<tc>, window_params = [{transform_indices = @transform_0, window_bounds = array<i64: 512, 200>}, {pipeline_mode = #tpu.pipeline_mode<synchronous>, transform_indices = @transform_1, window_bounds = array<i64: 200, 8>}, {pipeline_mode = #tpu.pipeline_mode<synchronous>, transform_indices = @transform_2, window_bounds = array<i64: 1, 8>}, {transform_indices = @transform_3, window_bounds = array<i64: 512, 8>}]} {
    %c0 = arith.constant 0 : index
    %c0_0 = arith.constant 0 : index
    %0 = vector.load %arg1[%c0, %c0_0] : memref<512x200xf32, #tpu.memory_space<vmem>>, vector<512x200xf32>
    %c0_1 = arith.constant 0 : index
    %c0_2 = arith.constant 0 : index
    %1 = vector.load %arg2[%c0_1, %c0_2] : memref<200x8xf32, #tpu.memory_space<vmem>>, vector<200x8xf32>
    %cst = arith.constant dense<0.000000e+00> : vector<512x8xf32>
    %2 = tpu.matmul %0, %1, %cst {dimension_numbers = #tpu.dot_dimension_numbers<[1], [0], [0], [1], [0, 0, 1, 1], [], []>} : vector<512x200xf32>, vector<200x8xf32>, vector<512x8xf32> -> vector<512x8xf32>
    %c0_3 = arith.constant 0 : index
    %c0_4 = arith.constant 0 : index
    %3 = vector.load %arg3[%c0_3, %c0_4] : memref<1x8xf32, #tpu.memory_space<vmem>>, vector<1x8xf32>
    %4 = vector.broadcast %3 : vector<1x8xf32> to vector<512x8xf32>
    %5 = arith.addf %2, %4 : vector<512x8xf32>
    %cst_5 = arith.constant 0.000000e+00 : f32
    %6 = vector.broadcast %cst_5 : f32 to vector<512x8xf32>
    %7 = arith.maximumf %5, %6 : vector<512x8xf32>
    %c0_6 = arith.constant 0 : index
    %c0_7 = arith.constant 0 : index
    %8 = vector.load %arg4[%c0_6, %c0_7] : memref<512x8xf32, #tpu.memory_space<vmem>>, vector<512x8xf32>
    tpu.vector_store %arg4[%c0_6, %c0_7], %7 {strides = array<i32>} : memref<512x8xf32, #tpu.memory_space<vmem>>, vector<512x8xf32>,
    return
  }
  func.func @transform_0(%arg0: i32) -> (i32, i32) {
    %c0_i32 = arith.constant 0 : i32
    %c0_i32_0 = arith.constant 0 : i32
    return %arg0, %c0_i32 : i32, i32
  }
  func.func @transform_1(%arg0: i32) -> (i32, i32) {
    %c0_i32 = arith.constant 0 : i32
    %c0_i32_0 = arith.constant 0 : i32
    %c0_i32_1 = arith.constant 0 : i32
    return %c0_i32, %c0_i32_0 : i32, i32
  }
  func.func @transform_2(%arg0: i32) -> (i32, i32) {
    %c0_i32 = arith.constant 0 : i32
    %c0_i32_0 = arith.constant 0 : i32
    %c0_i32_1 = arith.constant 0 : i32
    return %c0_i32, %c0_i32_0 : i32, i32
  }
  func.func @transform_3(%arg0: i32) -> (i32, i32) {
    %c0_i32 = arith.constant 0 : i32
    %c0_i32_0 = arith.constant 0 : i32
    return %arg0, %c0_i32 : i32, i32
  }
}

module attributes {stable_mosaic.version = 11 : i64} {
  func.func @_max4_kernel(%arg0: i32, %arg1: memref<8x128xf32, #tpu.memory_space<vmem>>, %arg2: memref<8x128xf32, #tpu.memory_space<vmem>>, %arg3: memref<8x128xf32, #tpu.memory_space<vmem>>, %arg4: memref<8x128xf32, #tpu.memory_space<vmem>>, %arg5: memref<8x128xf32, #tpu.memory_space<vmem>>) attributes {dimension_semantics = [#tpu.dimension_semantics<arbitrary>], iteration_bounds = array<i64: 1>, scalar_prefetch = 0 : i64, scratch_operands = 0 : i64, tpu.core_type = #tpu.core_type<tc>, window_params = [{pipeline_mode = #tpu.pipeline_mode<synchronous>, transform_indices = @transform_0, window_bounds = array<i64: 8, 128>}, {pipeline_mode = #tpu.pipeline_mode<synchronous>, transform_indices = @transform_1, window_bounds = array<i64: 8, 128>}, {pipeline_mode = #tpu.pipeline_mode<synchronous>, transform_indices = @transform_2, window_bounds = array<i64: 8, 128>}, {pipeline_mode = #tpu.pipeline_mode<synchronous>, transform_indices = @transform_3, window_bounds = array<i64: 8, 128>}, {pipeline_mode = #tpu.pipeline_mode<synchronous>, transform_indices = @transform_4, window_bounds = array<i64: 8, 128>}]} {
    %c0 = arith.constant 0 : index
    %c0_0 = arith.constant 0 : index
    %0 = vector.load %arg1[%c0, %c0_0] : memref<8x128xf32, #tpu.memory_space<vmem>>, vector<8x128xf32>
    %c0_1 = arith.constant 0 : index
    %c0_2 = arith.constant 0 : index
    %1 = vector.load %arg2[%c0_1, %c0_2] : memref<8x128xf32, #tpu.memory_space<vmem>>, vector<8x128xf32>
    %2 = arith.maximumf %0, %1 : vector<8x128xf32>
    %c0_3 = arith.constant 0 : index
    %c0_4 = arith.constant 0 : index
    %3 = vector.load %arg3[%c0_3, %c0_4] : memref<8x128xf32, #tpu.memory_space<vmem>>, vector<8x128xf32>
    %c0_5 = arith.constant 0 : index
    %c0_6 = arith.constant 0 : index
    %4 = vector.load %arg4[%c0_5, %c0_6] : memref<8x128xf32, #tpu.memory_space<vmem>>, vector<8x128xf32>
    %5 = arith.maximumf %3, %4 : vector<8x128xf32>
    %6 = arith.maximumf %2, %5 : vector<8x128xf32>
    %c0_7 = arith.constant 0 : index
    %c0_8 = arith.constant 0 : index
    %7 = vector.load %arg5[%c0_7, %c0_8] : memref<8x128xf32, #tpu.memory_space<vmem>>, vector<8x128xf32>
    tpu.vector_store %arg5[%c0_7, %c0_8], %6 {strides = array<i32>} : memref<8x128xf32, #tpu.memory_space<vmem>>, vector<8x128xf32>,
    return
  }
  func.func @transform_0(%arg0: i32) -> (i32, i32) {
    %c0_i32 = arith.constant 0 : i32
    %c0_i32_0 = arith.constant 0 : i32
    %c0_i32_1 = arith.constant 0 : i32
    return %c0_i32, %c0_i32_0 : i32, i32
  }
  func.func @transform_1(%arg0: i32) -> (i32, i32) {
    %c0_i32 = arith.constant 0 : i32
    %c0_i32_0 = arith.constant 0 : i32
    %c0_i32_1 = arith.constant 0 : i32
    return %c0_i32, %c0_i32_0 : i32, i32
  }
  func.func @transform_2(%arg0: i32) -> (i32, i32) {
    %c0_i32 = arith.constant 0 : i32
    %c0_i32_0 = arith.constant 0 : i32
    %c0_i32_1 = arith.constant 0 : i32
    return %c0_i32, %c0_i32_0 : i32, i32
  }
  func.func @transform_3(%arg0: i32) -> (i32, i32) {
    %c0_i32 = arith.constant 0 : i32
    %c0_i32_0 = arith.constant 0 : i32
    %c0_i32_1 = arith.constant 0 : i32
    return %c0_i32, %c0_i32_0 : i32, i32
  }
  func.func @transform_4(%arg0: i32) -> (i32, i32) {
    %c0_i32 = arith.constant 0 : i32
    %c0_i32_0 = arith.constant 0 : i32
    %c0_i32_1 = arith.constant 0 : i32
    return %c0_i32, %c0_i32_0 : i32, i32
  }
}

module attributes {stable_mosaic.version = 11 : i64} {
  func.func @_matmul_bias_kernel(%arg0: i32, %arg1: memref<72x72xf32, #tpu.memory_space<vmem>>, %arg2: memref<72x8xf32, #tpu.memory_space<vmem>>, %arg3: memref<1x8xf32, #tpu.memory_space<vmem>>, %arg4: memref<72x8xf32, #tpu.memory_space<vmem>>) attributes {dimension_semantics = [#tpu.dimension_semantics<parallel>], iteration_bounds = array<i64: 1>, scalar_prefetch = 0 : i64, scratch_operands = 0 : i64, tpu.core_type = #tpu.core_type<tc>, window_params = [{transform_indices = @transform_0, window_bounds = array<i64: 72, 72>}, {pipeline_mode = #tpu.pipeline_mode<synchronous>, transform_indices = @transform_1, window_bounds = array<i64: 72, 8>}, {pipeline_mode = #tpu.pipeline_mode<synchronous>, transform_indices = @transform_2, window_bounds = array<i64: 1, 8>}, {transform_indices = @transform_3, window_bounds = array<i64: 72, 8>}]} {
    %c0 = arith.constant 0 : index
    %c0_0 = arith.constant 0 : index
    %0 = vector.load %arg1[%c0, %c0_0] : memref<72x72xf32, #tpu.memory_space<vmem>>, vector<72x72xf32>
    %c0_1 = arith.constant 0 : index
    %c0_2 = arith.constant 0 : index
    %1 = vector.load %arg2[%c0_1, %c0_2] : memref<72x8xf32, #tpu.memory_space<vmem>>, vector<72x8xf32>
    %cst = arith.constant dense<0.000000e+00> : vector<72x8xf32>
    %2 = tpu.matmul %0, %1, %cst {dimension_numbers = #tpu.dot_dimension_numbers<[1], [0], [0], [1], [0, 0, 1, 1], [], []>} : vector<72x72xf32>, vector<72x8xf32>, vector<72x8xf32> -> vector<72x8xf32>
    %c0_3 = arith.constant 0 : index
    %c0_4 = arith.constant 0 : index
    %3 = vector.load %arg3[%c0_3, %c0_4] : memref<1x8xf32, #tpu.memory_space<vmem>>, vector<1x8xf32>
    %4 = vector.broadcast %3 : vector<1x8xf32> to vector<72x8xf32>
    %5 = arith.addf %2, %4 : vector<72x8xf32>
    %cst_5 = arith.constant 0.000000e+00 : f32
    %6 = vector.broadcast %cst_5 : f32 to vector<72x8xf32>
    %7 = arith.maximumf %5, %6 : vector<72x8xf32>
    %c0_6 = arith.constant 0 : index
    %c0_7 = arith.constant 0 : index
    %8 = vector.load %arg4[%c0_6, %c0_7] : memref<72x8xf32, #tpu.memory_space<vmem>>, vector<72x8xf32>
    tpu.vector_store %arg4[%c0_6, %c0_7], %7 {strides = array<i32>} : memref<72x8xf32, #tpu.memory_space<vmem>>, vector<72x8xf32>,
    return
  }
  func.func @transform_0(%arg0: i32) -> (i32, i32) {
    %c0_i32 = arith.constant 0 : i32
    %c0_i32_0 = arith.constant 0 : i32
    return %arg0, %c0_i32 : i32, i32
  }
  func.func @transform_1(%arg0: i32) -> (i32, i32) {
    %c0_i32 = arith.constant 0 : i32
    %c0_i32_0 = arith.constant 0 : i32
    %c0_i32_1 = arith.constant 0 : i32
    return %c0_i32, %c0_i32_0 : i32, i32
  }
  func.func @transform_2(%arg0: i32) -> (i32, i32) {
    %c0_i32 = arith.constant 0 : i32
    %c0_i32_0 = arith.constant 0 : i32
    %c0_i32_1 = arith.constant 0 : i32
    return %c0_i32, %c0_i32_0 : i32, i32
  }
  func.func @transform_3(%arg0: i32) -> (i32, i32) {
    %c0_i32 = arith.constant 0 : i32
    %c0_i32_0 = arith.constant 0 : i32
    return %arg0, %c0_i32 : i32, i32
  }
}

module attributes {stable_mosaic.version = 11 : i64} {
  func.func @_fused_fc_kernel(%arg0: i32, %arg1: memref<2x2336xf32, #tpu.memory_space<vmem>>, %arg2: memref<2336x32xf32, #tpu.memory_space<vmem>>, %arg3: memref<1x32xf32, #tpu.memory_space<vmem>>, %arg4: memref<32x24xf32, #tpu.memory_space<vmem>>, %arg5: memref<1x24xf32, #tpu.memory_space<vmem>>, %arg6: memref<2x24xf32, #tpu.memory_space<vmem>>) attributes {dimension_semantics = [#tpu.dimension_semantics<arbitrary>], iteration_bounds = array<i64: 1>, scalar_prefetch = 0 : i64, scratch_operands = 0 : i64, tpu.core_type = #tpu.core_type<tc>, window_params = [{pipeline_mode = #tpu.pipeline_mode<synchronous>, transform_indices = @transform_0, window_bounds = array<i64: 2, 2336>}, {pipeline_mode = #tpu.pipeline_mode<synchronous>, transform_indices = @transform_1, window_bounds = array<i64: 2336, 32>}, {pipeline_mode = #tpu.pipeline_mode<synchronous>, transform_indices = @transform_2, window_bounds = array<i64: 1, 32>}, {pipeline_mode = #tpu.pipeline_mode<synchronous>, transform_indices = @transform_3, window_bounds = array<i64: 32, 24>}, {pipeline_mode = #tpu.pipeline_mode<synchronous>, transform_indices = @transform_4, window_bounds = array<i64: 1, 24>}, {pipeline_mode = #tpu.pipeline_mode<synchronous>, transform_indices = @transform_5, window_bounds = array<i64: 2, 24>}]} {
    %c0 = arith.constant 0 : index
    %c0_0 = arith.constant 0 : index
    %0 = vector.load %arg1[%c0, %c0_0] : memref<2x2336xf32, #tpu.memory_space<vmem>>, vector<2x2336xf32>
    %c0_1 = arith.constant 0 : index
    %c0_2 = arith.constant 0 : index
    %1 = vector.load %arg2[%c0_1, %c0_2] : memref<2336x32xf32, #tpu.memory_space<vmem>>, vector<2336x32xf32>
    %cst = arith.constant dense<0.000000e+00> : vector<2x32xf32>
    %2 = tpu.matmul %0, %1, %cst {dimension_numbers = #tpu.dot_dimension_numbers<[1], [0], [0], [1], [0, 0, 1, 1], [], []>} : vector<2x2336xf32>, vector<2336x32xf32>, vector<2x32xf32> -> vector<2x32xf32>
    %c0_3 = arith.constant 0 : index
    %c0_4 = arith.constant 0 : index
    %3 = vector.load %arg3[%c0_3, %c0_4] : memref<1x32xf32, #tpu.memory_space<vmem>>, vector<1x32xf32>
    %4 = vector.broadcast %3 : vector<1x32xf32> to vector<2x32xf32>
    %5 = arith.addf %2, %4 : vector<2x32xf32>
    %cst_5 = arith.constant 0.000000e+00 : f32
    %6 = vector.broadcast %cst_5 : f32 to vector<2x32xf32>
    %7 = arith.maximumf %5, %6 : vector<2x32xf32>
    %c0_6 = arith.constant 0 : index
    %c0_7 = arith.constant 0 : index
    %8 = vector.load %arg4[%c0_6, %c0_7] : memref<32x24xf32, #tpu.memory_space<vmem>>, vector<32x24xf32>
    %cst_8 = arith.constant dense<0.000000e+00> : vector<2x24xf32>
    %9 = tpu.matmul %7, %8, %cst_8 {dimension_numbers = #tpu.dot_dimension_numbers<[1], [0], [0], [1], [0, 0, 1, 1], [], []>} : vector<2x32xf32>, vector<32x24xf32>, vector<2x24xf32> -> vector<2x24xf32>
    %c0_9 = arith.constant 0 : index
    %c0_10 = arith.constant 0 : index
    %10 = vector.load %arg5[%c0_9, %c0_10] : memref<1x24xf32, #tpu.memory_space<vmem>>, vector<1x24xf32>
    %11 = vector.broadcast %10 : vector<1x24xf32> to vector<2x24xf32>
    %12 = arith.addf %9, %11 : vector<2x24xf32>
    %c0_11 = arith.constant 0 : index
    %c0_12 = arith.constant 0 : index
    %13 = vector.load %arg6[%c0_11, %c0_12] : memref<2x24xf32, #tpu.memory_space<vmem>>, vector<2x24xf32>
    tpu.vector_store %arg6[%c0_11, %c0_12], %12 {strides = array<i32>} : memref<2x24xf32, #tpu.memory_space<vmem>>, vector<2x24xf32>,
    return
  }
  func.func @transform_0(%arg0: i32) -> (i32, i32) {
    %c0_i32 = arith.constant 0 : i32
    %c0_i32_0 = arith.constant 0 : i32
    %c0_i32_1 = arith.constant 0 : i32
    return %c0_i32, %c0_i32_0 : i32, i32
  }
  func.func @transform_1(%arg0: i32) -> (i32, i32) {
    %c0_i32 = arith.constant 0 : i32
    %c0_i32_0 = arith.constant 0 : i32
    %c0_i32_1 = arith.constant 0 : i32
    return %c0_i32, %c0_i32_0 : i32, i32
  }
  func.func @transform_2(%arg0: i32) -> (i32, i32) {
    %c0_i32 = arith.constant 0 : i32
    %c0_i32_0 = arith.constant 0 : i32
    %c0_i32_1 = arith.constant 0 : i32
    return %c0_i32, %c0_i32_0 : i32, i32
  }
  func.func @transform_3(%arg0: i32) -> (i32, i32) {
    %c0_i32 = arith.constant 0 : i32
    %c0_i32_0 = arith.constant 0 : i32
    %c0_i32_1 = arith.constant 0 : i32
    return %c0_i32, %c0_i32_0 : i32, i32
  }
  func.func @transform_4(%arg0: i32) -> (i32, i32) {
    %c0_i32 = arith.constant 0 : i32
    %c0_i32_0 = arith.constant 0 : i32
    %c0_i32_1 = arith.constant 0 : i32
    return %c0_i32, %c0_i32_0 : i32, i32
  }
  func.func @transform_5(%arg0: i32) -> (i32, i32) {
    %c0_i32 = arith.constant 0 : i32
    %c0_i32_0 = arith.constant 0 : i32
    %c0_i32_1 = arith.constant 0 : i32
    return %c0_i32, %c0_i32_0 : i32, i32
  }
}

</mosaic_0001>

<llo_original>
// kernel: model_b_forward.7
$region0: #{model_b_forward.7}
  #allocation0 [shape = 'u32[]', space=smem, size = 0x4, offset = 0x4, fixed_abs, tag = 'smem constant byte address 0x4 - core index']
  #allocation1 [shape = 'u32[72,128]{1,0:T(1,128)}', space=vmem, size = 0x9000, scoped, tag = 'internal scratch']
  %s0 = inlined_call_operand.vmem [shape: f32[50,128], index: 0, kind: input, shape index: {}]
  %s1 = inlined_call_operand.vmem [shape: f32[50,128], index: 1, kind: input, shape index: {}]
  %s2 = inlined_call_operand.vmem [shape: f32[50,128], index: 2, kind: input, shape index: {}]
  %s3 = inlined_call_operand.vmem [shape: f32[50,128], index: 3, kind: input, shape index: {}]
  %s4 = inlined_call_operand.vmem [shape: f32[50,128], index: 4, kind: output, shape index: {}]
  %s5 = sld [smem:[#allocation0]]
  $region26: #{model_b_forward.7} parent=0
    _
  %s7 = ssub.s32 1, %s5
  %s8 = scalar_select 0, %s7, %s5
  // Predicated region
  $region2: #{model_b_forward.7} parent=0 // pred_check
    _
  $region3: #{model_b_forward.7} parent=0 // pred_check_branch
    %10 = sbr.rel (0) target = $region5
  $region4: #{model_b_forward.7} parent=0 // pred_region
    _
  $region5: #{model_b_forward.7} parent=0 // pred_fallthru
    _
  // Predicated region
  $region6: #{model_b_forward.7} parent=0 // pred_check
    _
  $region7: #{model_b_forward.7} parent=0 // pred_check_branch
    %12 = sbr.rel (0) target = $region9
  $region8: #{model_b_forward.7} parent=0 // pred_region
    _
  $region9: #{model_b_forward.7} parent=0 // pred_fallthru
    _
  // Predicated region
  $region10: #{model_b_forward.7} parent=0 // pred_check
    _
  $region11: #{model_b_forward.7} parent=0 // pred_check_branch
    %14 = sbr.rel (0) target = $region13
  $region12: #{model_b_forward.7} parent=0 // pred_region
    _
  $region13: #{model_b_forward.7} parent=0 // pred_fallthru
    _
  // Predicated region
  $region14: #{model_b_forward.7} parent=0 // pred_check
    _
  $region15: #{model_b_forward.7} parent=0 // pred_check_branch
    %16 = sbr.rel (0) target = $region17
  $region16: #{model_b_forward.7} parent=0 // pred_region
    _
  $region17: #{model_b_forward.7} parent=0 // pred_fallthru
    _
  %v17 = vld [vmem:[%s0] sm:$0xff]
  %v18 = vld [vmem:[%s0 + $0x8] sm:$0xff]
  %v19 = vld [vmem:[%s0 + $0x10] sm:$0xff]
  %v20 = vld [vmem:[%s0 + $0x18] sm:$0xff]
  %v21 = vld [vmem:[%s0 + $0x20] sm:$0xff]
  %v22 = vld [vmem:[%s0 + $0x28] sm:$0xff]
  %v23 = vld [vmem:[%s0 + $0x30] sm:$0x3]
  %v24 = vld [vmem:[%s1] sm:$0xff]
  %v25 = vld [vmem:[%s1 + $0x8] sm:$0xff]
  %v26 = vld [vmem:[%s1 + $0x10] sm:$0xff]
  %v27 = vld [vmem:[%s1 + $0x18] sm:$0xff]
  %v28 = vld [vmem:[%s1 + $0x20] sm:$0xff]
  %v29 = vld [vmem:[%s1 + $0x28] sm:$0xff]
  %v30 = vld [vmem:[%s1 + $0x30] sm:$0x3]
  %v31 = vmax.f32 %v17, %v24
  %v32 = vmax.f32 %v18, %v25
  %v33 = vmax.f32 %v19, %v26
  %v34 = vmax.f32 %v20, %v27
  %v35 = vmax.f32 %v21, %v28
  %v36 = vmax.f32 %v22, %v29
  %v37 = vmax.f32 %v23, %v30
  %v38 = vld [vmem:[%s2] sm:$0xff]
  %v39 = vld [vmem:[%s2 + $0x8] sm:$0xff]
  %v40 = vld [vmem:[%s2 + $0x10] sm:$0xff]
  %v41 = vld [vmem:[%s2 + $0x18] sm:$0xff]
  %v42 = vld [vmem:[%s2 + $0x20] sm:$0xff]
  %v43 = vld [vmem:[%s2 + $0x28] sm:$0xff]
  %v44 = vld [vmem:[%s2 + $0x30] sm:$0x3]
  %v45 = vld [vmem:[%s3] sm:$0xff]
  %v46 = vld [vmem:[%s3 + $0x8] sm:$0xff]
  %v47 = vld [vmem:[%s3 + $0x10] sm:$0xff]
  %v48 = vld [vmem:[%s3 + $0x18] sm:$0xff]
  %v49 = vld [vmem:[%s3 + $0x20] sm:$0xff]
  %v50 = vld [vmem:[%s3 + $0x28] sm:$0xff]
  %v51 = vld [vmem:[%s3 + $0x30] sm:$0x3]
  %v52 = vmax.f32 %v38, %v45
  %v53 = vmax.f32 %v39, %v46
  %v54 = vmax.f32 %v40, %v47
  %v55 = vmax.f32 %v41, %v48
  %v56 = vmax.f32 %v42, %v49
  %v57 = vmax.f32 %v43, %v50
  %v58 = vmax.f32 %v44, %v51
  %v59 = vmax.f32 %v31, %v52
  %v60 = vmax.f32 %v32, %v53
  %v61 = vmax.f32 %v33, %v54
  %v62 = vmax.f32 %v34, %v55
  %v63 = vmax.f32 %v35, %v56
  %v64 = vmax.f32 %v36, %v57
  %v65 = vmax.f32 %v37, %v58
  %66 = vst [vmem:[%s4] sm:$0xff] %v59
  %67 = vst [vmem:[%s4 + $0x8] sm:$0xff] %v60
  %68 = vst [vmem:[%s4 + $0x10] sm:$0xff] %v61
  %69 = vst [vmem:[%s4 + $0x18] sm:$0xff] %v62
  %70 = vst [vmem:[%s4 + $0x20] sm:$0xff] %v63
  %71 = vst [vmem:[%s4 + $0x28] sm:$0xff] %v64
  %72 = vst [vmem:[%s4 + $0x30] sm:$0x3] %v65
  // Predicated region
  $region18: #{model_b_forward.7} parent=0 // pred_check
    _
  $region19: #{model_b_forward.7} parent=0 // pred_check_branch
    %74 = sbr.rel (0) target = $region21
  $region20: #{model_b_forward.7} parent=0 // pred_region
    _
  $region21: #{model_b_forward.7} parent=0 // pred_fallthru
    _
  // Predicated region
  $region22: #{model_b_forward.7} parent=0 // pred_check
    _
  $region23: #{model_b_forward.7} parent=0 // pred_check_branch
    %76 = sbr.rel (0) target = $region25
  $region24: #{model_b_forward.7} parent=0 // pred_region
    _
  $region25: #{model_b_forward.7} parent=0 // pred_fallthru
    _

// kernel: model_b_forward.6
$region0: #{model_b_forward.6}
  #allocation0 [shape = 'u32[]', space=smem, size = 0x4, offset = 0x4, fixed_abs, tag = 'smem constant byte address 0x4 - core index']
  #allocation1 [shape = 'u32[72,128]{1,0:T(1,128)}', space=vmem, size = 0x9000, scoped, tag = 'internal scratch']
  %s0 = inlined_call_operand.hbm [shape: f32[3200,243], index: 0, kind: input, shape index: {}]
  %s1 = inlined_call_operand.vmem [shape: f32[243,8], index: 1, kind: input, shape index: {}]
  %s2 = inlined_call_operand.vmem [shape: f32[1,8], index: 2, kind: input, shape index: {}]
  %s3 = inlined_call_operand.vmem [shape: f32[3200,8], index: 3, kind: output, shape index: {}]
  %s4 = sld [smem:[#allocation0]]
  $region49: #{model_b_forward.6} parent=0
    _
  %s6 = ssub.s32 1, %s4
  %s7 = scalar_select 0, %s6, %s4
  $region1: #{model_b_forward.6} parent=0
    #allocation2 [shape = 'u8[3276800]{0}', space=vmem, size = 0x320000, scoped, tag = 'input window, operand 0']
    #allocation3 [shape = 's32[2]{0}', space=sflag, size = 0x8, scoped, tag = 'scoped memory for model_b_forward.6']
    %8 = vsyncpa [#allocation3], 0
    %s9 = scalar_lea.sflag [#allocation3], 1
    %10 = vsyncpa %s9, 0
    loop: start=0, step=1, limit=4
    $region2: #{model_b_forward.6} parent=1 // loop_pre_header
      _
    $region3: #{model_b_forward.6} parent=1 // loop_header
      %s12 = sphi 0, %s16
      %p13 = scmp.ge.s32.totalorder %s12, 4
      %s22 = sphi 0, %s24
      %s25 = sphi 0, %s22
      %s26 = sphi 0, %s25
      %s42 = sphi 0, %s26
      %s46 = sphi 0, %s46
      %s48 = sphi 0, %s46
      %s49 = sphi 0, %s48
      %s63 = sphi 0, %s49
      %s67 = sphi 0, %s67
      %s69 = sphi 0, %s67
      %s70 = sphi 0, %s69
      %s84 = sphi 0, %s70
      %s90 = sphi 0, %s92
      %s93 = sphi 0, %s90
      %s94 = sphi 0, %s93
      %s110 = sphi 0, %s94
    $region4: #{model_b_forward.6} parent=1 // loop_header_branch
      %15 = sbr.rel (%p13) target = $region8
    $region5: #{model_b_forward.6} parent=1 // loop_body
      %s17 = ssub.s32 %s12, 1
      %s18 = ssub.s32 %s12, 2
      %s19 = sadd.s32 %s12, 1
      %s20 = ssub.s32 %s12, %s19
      %p21 = scmp.eq.s32.totalorder %s20, 0
      %s23 = sadd.s32 %s22, 1
      %s24 = scalar_select %p21, %s22, %s23
      %p27 = pneg %p21
      %p28 = scmp.eq.s32.totalorder %s12, 1
      %p29 = por %p27, %p28
      %p30 = scmp.ne.s32.totalorder %s22, %s25
      %p31 = scmp.eq.s32.totalorder %s12, 0
      %p32 = por %p30, %p31
      %p33 = scmp.ne.s32.totalorder %s22, %s25
      %p34 = scmp.eq.s32.totalorder %s17, 1
      %p35 = por %p33, %p34
      %p36 = scmp.ne.s32.totalorder %s25, %s26
      %p37 = scmp.eq.s32.totalorder %s17, 0
      %p38 = por %p36, %p37
      %p39 = scmp.ne.s32.totalorder %s25, %s26
      %p40 = scmp.eq.s32.totalorder %s18, 1
      %p41 = por %p39, %p40
      %p43 = scmp.ne.s32.totalorder %s26, %s42
      %p44 = scmp.eq.s32.totalorder %s18, 0
      %p45 = por %p43, %p44
      %s47 = sadd.s32 %s46, 1
      %p50 = scmp.eq.s32.totalorder %s12, 1
      %p51 = scmp.ne.s32.totalorder %s46, %s48
      %p52 = scmp.eq.s32.totalorder %s12, 0
      %p53 = por %p51, %p52
      %p54 = scmp.ne.s32.totalorder %s46, %s48
      %p55 = scmp.eq.s32.totalorder %s17, 1
      %p56 = por %p54, %p55
      %p57 = scmp.ne.s32.totalorder %s48, %s49
      %p58 = scmp.eq.s32.totalorder %s17, 0
      %p59 = por %p57, %p58
      %p60 = scmp.ne.s32.totalorder %s48, %s49
      %p61 = scmp.eq.s32.totalorder %s18, 1
      %p62 = por %p60, %p61
      %p64 = scmp.ne.s32.totalorder %s49, %s63
      %p65 = scmp.eq.s32.totalorder %s18, 0
      %p66 = por %p64, %p65
      %s68 = sadd.s32 %s67, 1
      %p71 = scmp.eq.s32.totalorder %s12, 1
      %p72 = scmp.ne.s32.totalorder %s67, %s69
      %p73 = scmp.eq.s32.totalorder %s12, 0
      %p74 = por %p72, %p73
      %p75 = scmp.ne.s32.totalorder %s67, %s69
      %p76 = scmp.eq.s32.totalorder %s17, 1
      %p77 = por %p75, %p76
      %p78 = scmp.ne.s32.totalorder %s69, %s70
      %p79 = scmp.eq.s32.totalorder %s17, 0
      %p80 = por %p78, %p79
      %p81 = scmp.ne.s32.totalorder %s69, %s70
      %p82 = scmp.eq.s32.totalorder %s18, 1
      %p83 = por %p81, %p82
      %p85 = scmp.ne.s32.totalorder %s70, %s84
      %p86 = scmp.eq.s32.totalorder %s18, 0
      %p87 = por %p85, %p86
      %s88 = ssub.s32 %s12, %s19
      %p89 = scmp.eq.s32.totalorder %s88, 0
      %s91 = sadd.s32 %s90, 1
      %s92 = scalar_select %p89, %s90, %s91
      %p95 = pneg %p89
      %p96 = scmp.eq.s32.totalorder %s12, 1
      %p97 = por %p95, %p96
      %p98 = scmp.ne.s32.totalorder %s90, %s93
      %p99 = scmp.eq.s32.totalorder %s12, 0
      %p100 = por %p98, %p99
      %p101 = scmp.ne.s32.totalorder %s90, %s93
      %p102 = scmp.eq.s32.totalorder %s17, 1
      %p103 = por %p101, %p102
      %p104 = scmp.ne.s32.totalorder %s93, %s94
      %p105 = scmp.eq.s32.totalorder %s17, 0
      %p106 = por %p104, %p105
      %p107 = scmp.ne.s32.totalorder %s93, %s94
      %p108 = scmp.eq.s32.totalorder %s18, 1
      %p109 = por %p107, %p108
      %p111 = scmp.ne.s32.totalorder %s94, %s110
      %p112 = scmp.eq.s32.totalorder %s18, 0
      %p113 = por %p111, %p112
      %p114 = scmp.le.s32.totalorder 1, %s12
      %p115 = scmp.lt.s32.totalorder %s12, 3
      %p116 = pnand %p114, %p115
      %p117 = pneg %p116
      // Predicated region
      $region9: #{model_b_forward.6} parent=5 // pred_check
        _
      $region10: #{model_b_forward.6} parent=5 // pred_check_branch
        %119 = sbr.rel (%p116) target = $region12
      $region11: #{model_b_forward.6} parent=5 // pred_region
        %s120 = ssub.s32 %s12, 1
        // Predicated region
        $region13: #{model_b_forward.6} parent=11 // pred_check
          %p121 = pneg %p59
        $region14: #{model_b_forward.6} parent=11 // pred_check_branch
          %123 = sbr.rel (%p121) target = $region16
        $region15: #{model_b_forward.6} parent=11 // pred_region
          _
        $region16: #{model_b_forward.6} parent=11 // pred_fallthru
          _
        // Predicated region
        $region17: #{model_b_forward.6} parent=11 // pred_check
          %p124 = pneg %p80
        $region18: #{model_b_forward.6} parent=11 // pred_check_branch
          %126 = sbr.rel (%p124) target = $region20
        $region19: #{model_b_forward.6} parent=11 // pred_region
          _
        $region20: #{model_b_forward.6} parent=11 // pred_fallthru
          _
      $region12: #{model_b_forward.6} parent=5 // pred_fallthru
        _
      %p127 = scmp.lt.s32.totalorder %s12, 2
      // Predicated region
      $region21: #{model_b_forward.6} parent=5 // pred_check
        %p128 = pneg %p127
      $region22: #{model_b_forward.6} parent=5 // pred_check_branch
        %130 = sbr.rel (%p128) target = $region24
      $region23: #{model_b_forward.6} parent=5 // pred_region
        // Predicated region
        $region25: #{model_b_forward.6} parent=23 // pred_check
          %p131 = pneg %p32
        $region26: #{model_b_forward.6} parent=23 // pred_check_branch
          %133 = sbr.rel (%p131) target = $region28
        $region27: #{model_b_forward.6} parent=23 // pred_region
          %s134 = sand.u32 %s22, 1
          %s135 = scalar_lea.sflag [#allocation3], %s134
          %s136 = sand.u32 %s22, 1
          %s137 = smul.addr %s136, 3200
          %s138 = scalar_lea.vmem [#allocation2], %s137
          %s139 = smul.u32 200, %s12
          %141 = vsyncadd %s135, 0
          %s142 = smul.addr %s139, 2
          %s143 = smul.addr %s142, 8
          %s144 = scalar_lea.hbm %s0, %s143
          %s145 = sshll.u32 %s144, 4
          %s146 = int_to_ptr.hbm [resolvable:$true] %s145
          %s147 = sshll.u32 %s138, 4
          %s148 = int_to_ptr.vmem [resolvable:$true] %s147
          %153 = dma.hbm_to_vmem [thread:$0]  %s146, 51200, %s148, %s135, 256, 256, 16
        $region28: #{model_b_forward.6} parent=23 // pred_fallthru
          _
      $region24: #{model_b_forward.6} parent=5 // pred_fallthru
        _
      %p154 = scmp.le.s32.totalorder 1, %s12
      %p155 = scmp.lt.s32.totalorder %s12, 3
      %p156 = pnand %p154, %p155
      %p157 = pneg %p156
      // Predicated region
      $region29: #{model_b_forward.6} parent=5 // pred_check
        _
      $region30: #{model_b_forward.6} parent=5 // pred_check_branch
        %159 = sbr.rel (%p156) target = $region32
      $region31: #{model_b_forward.6} parent=5 // pred_region
        %s160 = ssub.s32 %s12, 1
        %s161 = sand.u32 %s25, 1
        %s162 = scalar_lea.sflag [#allocation3], %s161
        %s163 = sand.u32 %s25, 1
        %s164 = smul.addr %s163, 3200
        %s165 = scalar_lea.vmem [#allocation2], %s164
        // Predicated region
        $region33: #{model_b_forward.6} parent=31 // pred_check
          %p166 = pneg %p38
        $region34: #{model_b_forward.6} parent=31 // pred_check_branch
          %168 = sbr.rel (%p166) target = $region36
        $region35: #{model_b_forward.6} parent=31 // pred_region
          %170 = dma.done %s162, 51200
        $region36: #{model_b_forward.6} parent=31 // pred_fallthru
          _
        %s171 = sand.u32 %s25, 1
        %s172 = scalar_lea.sflag [#allocation3], %s171
        %s173 = sand.u32 %s25, 1
        %s174 = smul.addr %s173, 3200
        %s175 = scalar_lea.vmem [#allocation2], %s174
        %p176 = pneg %p38
        %p177 = pneg %p35
        %p178 = pneg %p59
        %p179 = pneg %p56
        %p180 = pneg %p80
        %p181 = pneg %p77
        %p182 = pneg %p106
        %p183 = pneg %p103
        %s184 = smul.u32 200, %s17
        %p185 = scmp.lt.s32.totalorder %s184, 399
        %s186 = scalar_select %p185, %s184, 399
        %s187 = smul.addr %s186, 8
        %s188 = scalar_lea.vmem %s3, %s187
        %s189 = smul.u32 200, %s17
        %s190 = smul.u32 200, %s17
        %p191 = scmp.lt.s32.totalorder %s190, 399
        %s192 = scalar_select %p191, %s190, 399
        %s193 = smul.addr %s192, 8
        %s194 = scalar_lea.vmem %s3, %s193
        %s195 = smul.u32 200, %s17
        %v196 = vld [vmem:[%s165] sm:$0xff]
        %v197 = vld [vmem:[%s165 + $0x8] sm:$0xff]
        %v198 = vld [vmem:[%s165 + $0x10] sm:$0xff]
        %v199 = vld [vmem:[%s165 + $0x18] sm:$0xff]
        %v200 = vld [vmem:[%s165 + $0x20] sm:$0xff]
        %v201 = vld [vmem:[%s165 + $0x28] sm:$0xff]
        %v202 = vld [vmem:[%s165 + $0x30] sm:$0xff]
        %v203 = vld [vmem:[%s165 + $0x38] sm:$0xff]
        %v204 = vld [vmem:[%s165 + $0x40] sm:$0xff]
        %v205 = vld [vmem:[%s165 + $0x48] sm:$0xff]
        %v206 = vld [vmem:[%s165 + $0x50] sm:$0xff]
        %v207 = vld [vmem:[%s165 + $0x58] sm:$0xff]
        %v208 = vld [vmem:[%s165 + $0x60] sm:$0xff]
        %v209 = vld [vmem:[%s165 + $0x68] sm:$0xff]
        %v210 = vld [vmem:[%s165 + $0x70] sm:$0xff]
        %v211 = vld [vmem:[%s165 + $0x78] sm:$0xff]
        %v212 = vld [vmem:[%s165 + $0x80] sm:$0xff]
        %v213 = vld [vmem:[%s165 + $0x88] sm:$0xff]
        %v214 = vld [vmem:[%s165 + $0x90] sm:$0xff]
        %v215 = vld [vmem:[%s165 + $0x98] sm:$0xff]
        %v216 = vld [vmem:[%s165 + $0xa0] sm:$0xff]
        %v217 = vld [vmem:[%s165 + $0xa8] sm:$0xff]
        %v218 = vld [vmem:[%s165 + $0xb0] sm:$0xff]
        %v219 = vld [vmem:[%s165 + $0xb8] sm:$0xff]
        %v220 = vld [vmem:[%s165 + $0xc0] sm:$0xff]
        %v221 = vld [vmem:[%s165 + $0xc8] sm:$0xff]
        %v222 = vld [vmem:[%s165 + $0xd0] sm:$0xff]
        %v223 = vld [vmem:[%s165 + $0xd8] sm:$0xff]
        %v224 = vld [vmem:[%s165 + $0xe0] sm:$0xff]
        %v225 = vld [vmem:[%s165 + $0xe8] sm:$0xff]
        %v226 = vld [vmem:[%s165 + $0xf0] sm:$0xff]
        %v227 = vld [vmem:[%s165 + $0xf8] sm:$0xff]
        %v228 = vld [vmem:[%s165 + $0x100] sm:$0xff]
        %v229 = vld [vmem:[%s165 + $0x108] sm:$0xff]
        %v230 = vld [vmem:[%s165 + $0x110] sm:$0xff]
        %v231 = vld [vmem:[%s165 + $0x118] sm:$0xff]
        %v232 = vld [vmem:[%s165 + $0x120] sm:$0xff]
        %v233 = vld [vmem:[%s165 + $0x128] sm:$0xff]
        %v234 = vld [vmem:[%s165 + $0x130] sm:$0xff]
        %v235 = vld [vmem:[%s165 + $0x138] sm:$0xff]
        %v236 = vld [vmem:[%s165 + $0x140] sm:$0xff]
        %v237 = vld [vmem:[%s165 + $0x148] sm:$0xff]
        %v238 = vld [vmem:[%s165 + $0x150] sm:$0xff]
        %v239 = vld [vmem:[%s165 + $0x158] sm:$0xff]
        %v240 = vld [vmem:[%s165 + $0x160] sm:$0xff]
        %v241 = vld [vmem:[%s165 + $0x168] sm:$0xff]
        %v242 = vld [vmem:[%s165 + $0x170] sm:$0xff]
        %v243 = vld [vmem:[%s165 + $0x178] sm:$0xff]
        %v244 = vld [vmem:[%s165 + $0x180] sm:$0xff]
        %v245 = vld [vmem:[%s165 + $0x188] sm:$0xff]
        %v246 = vld [vmem:[%s165 + $0x190] sm:$0xff]
        %v247 = vld [vmem:[%s165 + $0x198] sm:$0xff]
        %v248 = vld [vmem:[%s165 + $0x1a0] sm:$0xff]
        %v249 = vld [vmem:[%s165 + $0x1a8] sm:$0xff]
        %v250 = vld [vmem:[%s165 + $0x1b0] sm:$0xff]
        %v251 = vld [vmem:[%s165 + $0x1b8] sm:$0xff]
        %v252 = vld [vmem:[%s165 + $0x1c0] sm:$0xff]
        %v253 = vld [vmem:[%s165 + $0x1c8] sm:$0xff]
        %v254 = vld [vmem:[%s165 + $0x1d0] sm:$0xff]
        %v255 = vld [vmem:[%s165 + $0x1d8] sm:$0xff]
        %v256 = vld [vmem:[%s165 + $0x1e0] sm:$0xff]
        %v257 = vld [vmem:[%s165 + $0x1e8] sm:$0xff]
        %v258 = vld [vmem:[%s165 + $0x1f0] sm:$0xff]
        %v259 = vld [vmem:[%s165 + $0x1f8] sm:$0xff]
        %v260 = vld [vmem:[%s165 + $0x200] sm:$0xff]
        %v261 = vld [vmem:[%s165 + $0x208] sm:$0xff]
        %v262 = vld [vmem:[%s165 + $0x210] sm:$0xff]
        %v263 = vld [vmem:[%s165 + $0x218] sm:$0xff]
        %v264 = vld [vmem:[%s165 + $0x220] sm:$0xff]
        %v265 = vld [vmem:[%s165 + $0x228] sm:$0xff]
        %v266 = vld [vmem:[%s165 + $0x230] sm:$0xff]
        %v267 = vld [vmem:[%s165 + $0x238] sm:$0xff]
        %v268 = vld [vmem:[%s165 + $0x240] sm:$0xff]
        %v269 = vld [vmem:[%s165 + $0x248] sm:$0xff]
        %v270 = vld [vmem:[%s165 + $0x250] sm:$0xff]
        %v271 = vld [vmem:[%s165 + $0x258] sm:$0xff]
        %v272 = vld [vmem:[%s165 + $0x260] sm:$0xff]
        %v273 = vld [vmem:[%s165 + $0x268] sm:$0xff]
        %v274 = vld [vmem:[%s165 + $0x270] sm:$0xff]
        %v275 = vld [vmem:[%s165 + $0x278] sm:$0xff]
        %v276 = vld [vmem:[%s165 + $0x280] sm:$0xff]
        %v277 = vld [vmem:[%s165 + $0x288] sm:$0xff]
        %v278 = vld [vmem:[%s165 + $0x290] sm:$0xff]
        %v279 = vld [vmem:[%s165 + $0x298] sm:$0xff]
        %v280 = vld [vmem:[%s165 + $0x2a0] sm:$0xff]
        %v281 = vld [vmem:[%s165 + $0x2a8] sm:$0xff]
        %v282 = vld [vmem:[%s165 + $0x2b0] sm:$0xff]
        %v283 = vld [vmem:[%s165 + $0x2b8] sm:$0xff]
        %v284 = vld [vmem:[%s165 + $0x2c0] sm:$0xff]
        %v285 = vld [vmem:[%s165 + $0x2c8] sm:$0xff]
        %v286 = vld [vmem:[%s165 + $0x2d0] sm:$0xff]
        %v287 = vld [vmem:[%s165 + $0x2d8] sm:$0xff]
        %v288 = vld [vmem:[%s165 + $0x2e0] sm:$0xff]
        %v289 = vld [vmem:[%s165 + $0x2e8] sm:$0xff]
        %v290 = vld [vmem:[%s165 + $0x2f0] sm:$0xff]
        %v291 = vld [vmem:[%s165 + $0x2f8] sm:$0xff]
        %v292 = vld [vmem:[%s165 + $0x300] sm:$0xff]
        %v293 = vld [vmem:[%s165 + $0x308] sm:$0xff]
        %v294 = vld [vmem:[%s165 + $0x310] sm:$0xff]
        %v295 = vld [vmem:[%s165 + $0x318] sm:$0xff]
        %v296 = vld [vmem:[%s165 + $0x320] sm:$0xff]
        %v297 = vld [vmem:[%s165 + $0x328] sm:$0xff]
        %v298 = vld [vmem:[%s165 + $0x330] sm:$0xff]
        %v299 = vld [vmem:[%s165 + $0x338] sm:$0xff]
        %v300 = vld [vmem:[%s165 + $0x340] sm:$0xff]
        %v301 = vld [vmem:[%s165 + $0x348] sm:$0xff]
        %v302 = vld [vmem:[%s165 + $0x350] sm:$0xff]
        %v303 = vld [vmem:[%s165 + $0x358] sm:$0xff]
        %v304 = vld [vmem:[%s165 + $0x360] sm:$0xff]
        %v305 = vld [vmem:[%s165 + $0x368] sm:$0xff]
        %v306 = vld [vmem:[%s165 + $0x370] sm:$0xff]
        %v307 = vld [vmem:[%s165 + $0x378] sm:$0xff]
        %v308 = vld [vmem:[%s165 + $0x380] sm:$0xff]
        %v309 = vld [vmem:[%s165 + $0x388] sm:$0xff]
        %v310 = vld [vmem:[%s165 + $0x390] sm:$0xff]
        %v311 = vld [vmem:[%s165 + $0x398] sm:$0xff]
        %v312 = vld [vmem:[%s165 + $0x3a0] sm:$0xff]
        %v313 = vld [vmem:[%s165 + $0x3a8] sm:$0xff]
        %v314 = vld [vmem:[%s165 + $0x3b0] sm:$0xff]
        %v315 = vld [vmem:[%s165 + $0x3b8] sm:$0xff]
        %v316 = vld [vmem:[%s165 + $0x3c0] sm:$0xff]
        %v317 = vld [vmem:[%s165 + $0x3c8] sm:$0xff]
        %v318 = vld [vmem:[%s165 + $0x3d0] sm:$0xff]
        %v319 = vld [vmem:[%s165 + $0x3d8] sm:$0xff]
        %v320 = vld [vmem:[%s165 + $0x3e0] sm:$0xff]
        %v321 = vld [vmem:[%s165 + $0x3e8] sm:$0xff]
        %v322 = vld [vmem:[%s165 + $0x3f0] sm:$0xff]
        %v323 = vld [vmem:[%s165 + $0x3f8] sm:$0xff]
        %v324 = vld [vmem:[%s165 + $0x400] sm:$0xff]
        %v325 = vld [vmem:[%s165 + $0x408] sm:$0xff]
        %v326 = vld [vmem:[%s165 + $0x410] sm:$0xff]
        %v327 = vld [vmem:[%s165 + $0x418] sm:$0xff]
        %v328 = vld [vmem:[%s165 + $0x420] sm:$0xff]
        %v329 = vld [vmem:[%s165 + $0x428] sm:$0xff]
        %v330 = vld [vmem:[%s165 + $0x430] sm:$0xff]
        %v331 = vld [vmem:[%s165 + $0x438] sm:$0xff]
        %v332 = vld [vmem:[%s165 + $0x440] sm:$0xff]
        %v333 = vld [vmem:[%s165 + $0x448] sm:$0xff]
        %v334 = vld [vmem:[%s165 + $0x450] sm:$0xff]
        %v335 = vld [vmem:[%s165 + $0x458] sm:$0xff]
        %v336 = vld [vmem:[%s165 + $0x460] sm:$0xff]
        %v337 = vld [vmem:[%s165 + $0x468] sm:$0xff]
        %v338 = vld [vmem:[%s165 + $0x470] sm:$0xff]
        %v339 = vld [vmem:[%s165 + $0x478] sm:$0xff]
        %v340 = vld [vmem:[%s165 + $0x480] sm:$0xff]
        %v341 = vld [vmem:[%s165 + $0x488] sm:$0xff]
        %v342 = vld [vmem:[%s165 + $0x490] sm:$0xff]
        %v343 = vld [vmem:[%s165 + $0x498] sm:$0xff]
        %v344 = vld [vmem:[%s165 + $0x4a0] sm:$0xff]
        %v345 = vld [vmem:[%s165 + $0x4a8] sm:$0xff]
        %v346 = vld [vmem:[%s165 + $0x4b0] sm:$0xff]
        %v347 = vld [vmem:[%s165 + $0x4b8] sm:$0xff]
        %v348 = vld [vmem:[%s165 + $0x4c0] sm:$0xff]
        %v349 = vld [vmem:[%s165 + $0x4c8] sm:$0xff]
        %v350 = vld [vmem:[%s165 + $0x4d0] sm:$0xff]
        %v351 = vld [vmem:[%s165 + $0x4d8] sm:$0xff]
        %v352 = vld [vmem:[%s165 + $0x4e0] sm:$0xff]
        %v353 = vld [vmem:[%s165 + $0x4e8] sm:$0xff]
        %v354 = vld [vmem:[%s165 + $0x4f0] sm:$0xff]
        %v355 = vld [vmem:[%s165 + $0x4f8] sm:$0xff]
        %v356 = vld [vmem:[%s165 + $0x500] sm:$0xff]
        %v357 = vld [vmem:[%s165 + $0x508] sm:$0xff]
        %v358 = vld [vmem:[%s165 + $0x510] sm:$0xff]
        %v359 = vld [vmem:[%s165 + $0x518] sm:$0xff]
        %v360 = vld [vmem:[%s165 + $0x520] sm:$0xff]
        %v361 = vld [vmem:[%s165 + $0x528] sm:$0xff]
        %v362 = vld [vmem:[%s165 + $0x530] sm:$0xff]
        %v363 = vld [vmem:[%s165 + $0x538] sm:$0xff]
        %v364 = vld [vmem:[%s165 + $0x540] sm:$0xff]
        %v365 = vld [vmem:[%s165 + $0x548] sm:$0xff]
        %v366 = vld [vmem:[%s165 + $0x550] sm:$0xff]
        %v367 = vld [vmem:[%s165 + $0x558] sm:$0xff]
        %v368 = vld [vmem:[%s165 + $0x560] sm:$0xff]
        %v369 = vld [vmem:[%s165 + $0x568] sm:$0xff]
        %v370 = vld [vmem:[%s165 + $0x570] sm:$0xff]
        %v371 = vld [vmem:[%s165 + $0x578] sm:$0xff]
        %v372 = vld [vmem:[%s165 + $0x580] sm:$0xff]
        %v373 = vld [vmem:[%s165 + $0x588] sm:$0xff]
        %v374 = vld [vmem:[%s165 + $0x590] sm:$0xff]
        %v375 = vld [vmem:[%s165 + $0x598] sm:$0xff]
        %v376 = vld [vmem:[%s165 + $0x5a0] sm:$0xff]
        %v377 = vld [vmem:[%s165 + $0x5a8] sm:$0xff]
        %v378 = vld [vmem:[%s165 + $0x5b0] sm:$0xff]
        %v379 = vld [vmem:[%s165 + $0x5b8] sm:$0xff]
        %v380 = vld [vmem:[%s165 + $0x5c0] sm:$0xff]
        %v381 = vld [vmem:[%s165 + $0x5c8] sm:$0xff]
        %v382 = vld [vmem:[%s165 + $0x5d0] sm:$0xff]
        %v383 = vld [vmem:[%s165 + $0x5d8] sm:$0xff]
        %v384 = vld [vmem:[%s165 + $0x5e0] sm:$0xff]
        %v385 = vld [vmem:[%s165 + $0x5e8] sm:$0xff]
        %v386 = vld [vmem:[%s165 + $0x5f0] sm:$0xff]
        %v387 = vld [vmem:[%s165 + $0x5f8] sm:$0xff]
        %v388 = vld [vmem:[%s165 + $0x600] sm:$0xff]
        %v389 = vld [vmem:[%s165 + $0x608] sm:$0xff]
        %v390 = vld [vmem:[%s165 + $0x610] sm:$0xff]
        %v391 = vld [vmem:[%s165 + $0x618] sm:$0xff]
        %v392 = vld [vmem:[%s165 + $0x620] sm:$0xff]
        %v393 = vld [vmem:[%s165 + $0x628] sm:$0xff]
        %v394 = vld [vmem:[%s165 + $0x630] sm:$0xff]
        %v395 = vld [vmem:[%s165 + $0x638] sm:$0xff]
        %v396 = vld [vmem:[%s165 + $0x640] sm:$0xff]
        %v397 = vld [vmem:[%s165 + $0x648] sm:$0xff]
        %v398 = vld [vmem:[%s165 + $0x650] sm:$0xff]
        %v399 = vld [vmem:[%s165 + $0x658] sm:$0xff]
        %v400 = vld [vmem:[%s165 + $0x660] sm:$0xff]
        %v401 = vld [vmem:[%s165 + $0x668] sm:$0xff]
        %v402 = vld [vmem:[%s165 + $0x670] sm:$0xff]
        %v403 = vld [vmem:[%s165 + $0x678] sm:$0xff]
        %v404 = vld [vmem:[%s165 + $0x680] sm:$0xff]
        %v405 = vld [vmem:[%s165 + $0x688] sm:$0xff]
        %v406 = vld [vmem:[%s165 + $0x690] sm:$0xff]
        %v407 = vld [vmem:[%s165 + $0x698] sm:$0xff]
        %v408 = vld [vmem:[%s165 + $0x6a0] sm:$0xff]
        %v409 = vld [vmem:[%s165 + $0x6a8] sm:$0xff]
        %v410 = vld [vmem:[%s165 + $0x6b0] sm:$0xff]
        %v411 = vld [vmem:[%s165 + $0x6b8] sm:$0xff]
        %v412 = vld [vmem:[%s165 + $0x6c0] sm:$0xff]
        %v413 = vld [vmem:[%s165 + $0x6c8] sm:$0xff]
        %v414 = vld [vmem:[%s165 + $0x6d0] sm:$0xff]
        %v415 = vld [vmem:[%s165 + $0x6d8] sm:$0xff]
        %v416 = vld [vmem:[%s165 + $0x6e0] sm:$0xff]
        %v417 = vld [vmem:[%s165 + $0x6e8] sm:$0xff]
        %v418 = vld [vmem:[%s165 + $0x6f0] sm:$0xff]
        %v419 = vld [vmem:[%s165 + $0x6f8] sm:$0xff]
        %v420 = vld [vmem:[%s165 + $0x700] sm:$0xff]
        %v421 = vld [vmem:[%s165 + $0x708] sm:$0xff]
        %v422 = vld [vmem:[%s165 + $0x710] sm:$0xff]
        %v423 = vld [vmem:[%s165 + $0x718] sm:$0xff]
        %v424 = vld [vmem:[%s165 + $0x720] sm:$0xff]
        %v425 = vld [vmem:[%s165 + $0x728] sm:$0xff]
        %v426 = vld [vmem:[%s165 + $0x730] sm:$0xff]
        %v427 = vld [vmem:[%s165 + $0x738] sm:$0xff]
        %v428 = vld [vmem:[%s165 + $0x740] sm:$0xff]
        %v429 = vld [vmem:[%s165 + $0x748] sm:$0xff]
        %v430 = vld [vmem:[%s165 + $0x750] sm:$0xff]
        %v431 = vld [vmem:[%s165 + $0x758] sm:$0xff]
        %v432 = vld [vmem:[%s165 + $0x760] sm:$0xff]
        %v433 = vld [vmem:[%s165 + $0x768] sm:$0xff]
        %v434 = vld [vmem:[%s165 + $0x770] sm:$0xff]
        %v435 = vld [vmem:[%s165 + $0x778] sm:$0xff]
        %v436 = vld [vmem:[%s165 + $0x780] sm:$0xff]
        %v437 = vld [vmem:[%s165 + $0x788] sm:$0xff]
        %v438 = vld [vmem:[%s165 + $0x790] sm:$0xff]
        %v439 = vld [vmem:[%s165 + $0x798] sm:$0xff]
        %v440 = vld [vmem:[%s165 + $0x7a0] sm:$0xff]
        %v441 = vld [vmem:[%s165 + $0x7a8] sm:$0xff]
        %v442 = vld [vmem:[%s165 + $0x7b0] sm:$0xff]
        %v443 = vld [vmem:[%s165 + $0x7b8] sm:$0xff]
        %v444 = vld [vmem:[%s165 + $0x7c0] sm:$0xff]
        %v445 = vld [vmem:[%s165 + $0x7c8] sm:$0xff]
        %v446 = vld [vmem:[%s165 + $0x7d0] sm:$0xff]
        %v447 = vld [vmem:[%s165 + $0x7d8] sm:$0xff]
        %v448 = vld [vmem:[%s165 + $0x7e0] sm:$0xff]
        %v449 = vld [vmem:[%s165 + $0x7e8] sm:$0xff]
        %v450 = vld [vmem:[%s165 + $0x7f0] sm:$0xff]
        %v451 = vld [vmem:[%s165 + $0x7f8] sm:$0xff]
        %v452 = vld [vmem:[%s165 + $0x800] sm:$0xff]
        %v453 = vld [vmem:[%s165 + $0x808] sm:$0xff]
        %v454 = vld [vmem:[%s165 + $0x810] sm:$0xff]
        %v455 = vld [vmem:[%s165 + $0x818] sm:$0xff]
        %v456 = vld [vmem:[%s165 + $0x820] sm:$0xff]
        %v457 = vld [vmem:[%s165 + $0x828] sm:$0xff]
        %v458 = vld [vmem:[%s165 + $0x830] sm:$0xff]
        %v459 = vld [vmem:[%s165 + $0x838] sm:$0xff]
        %v460 = vld [vmem:[%s165 + $0x840] sm:$0xff]
        %v461 = vld [vmem:[%s165 + $0x848] sm:$0xff]
        %v462 = vld [vmem:[%s165 + $0x850] sm:$0xff]
        %v463 = vld [vmem:[%s165 + $0x858] sm:$0xff]
        %v464 = vld [vmem:[%s165 + $0x860] sm:$0xff]
        %v465 = vld [vmem:[%s165 + $0x868] sm:$0xff]
        %v466 = vld [vmem:[%s165 + $0x870] sm:$0xff]
        %v467 = vld [vmem:[%s165 + $0x878] sm:$0xff]
        %v468 = vld [vmem:[%s165 + $0x880] sm:$0xff]
        %v469 = vld [vmem:[%s165 + $0x888] sm:$0xff]
        %v470 = vld [vmem:[%s165 + $0x890] sm:$0xff]
        %v471 = vld [vmem:[%s165 + $0x898] sm:$0xff]
        %v472 = vld [vmem:[%s165 + $0x8a0] sm:$0xff]
        %v473 = vld [vmem:[%s165 + $0x8a8] sm:$0xff]
        %v474 = vld [vmem:[%s165 + $0x8b0] sm:$0xff]
        %v475 = vld [vmem:[%s165 + $0x8b8] sm:$0xff]
        %v476 = vld [vmem:[%s165 + $0x8c0] sm:$0xff]
        %v477 = vld [vmem:[%s165 + $0x8c8] sm:$0xff]
        %v478 = vld [vmem:[%s165 + $0x8d0] sm:$0xff]
        %v479 = vld [vmem:[%s165 + $0x8d8] sm:$0xff]
        %v480 = vld [vmem:[%s165 + $0x8e0] sm:$0xff]
        %v481 = vld [vmem:[%s165 + $0x8e8] sm:$0xff]
        %v482 = vld [vmem:[%s165 + $0x8f0] sm:$0xff]
        %v483 = vld [vmem:[%s165 + $0x8f8] sm:$0xff]
        %v484 = vld [vmem:[%s165 + $0x900] sm:$0xff]
        %v485 = vld [vmem:[%s165 + $0x908] sm:$0xff]
        %v486 = vld [vmem:[%s165 + $0x910] sm:$0xff]
        %v487 = vld [vmem:[%s165 + $0x918] sm:$0xff]
        %v488 = vld [vmem:[%s165 + $0x920] sm:$0xff]
        %v489 = vld [vmem:[%s165 + $0x928] sm:$0xff]
        %v490 = vld [vmem:[%s165 + $0x930] sm:$0xff]
        %v491 = vld [vmem:[%s165 + $0x938] sm:$0xff]
        %v492 = vld [vmem:[%s165 + $0x940] sm:$0xff]
        %v493 = vld [vmem:[%s165 + $0x948] sm:$0xff]
        %v494 = vld [vmem:[%s165 + $0x950] sm:$0xff]
        %v495 = vld [vmem:[%s165 + $0x958] sm:$0xff]
        %v496 = vld [vmem:[%s165 + $0x960] sm:$0xff]
        %v497 = vld [vmem:[%s165 + $0x968] sm:$0xff]
        %v498 = vld [vmem:[%s165 + $0x970] sm:$0xff]
        %v499 = vld [vmem:[%s165 + $0x978] sm:$0xff]
        %v500 = vld [vmem:[%s165 + $0x980] sm:$0xff]
        %v501 = vld [vmem:[%s165 + $0x988] sm:$0xff]
        %v502 = vld [vmem:[%s165 + $0x990] sm:$0xff]
        %v503 = vld [vmem:[%s165 + $0x998] sm:$0xff]
        %v504 = vld [vmem:[%s165 + $0x9a0] sm:$0xff]
        %v505 = vld [vmem:[%s165 + $0x9a8] sm:$0xff]
        %v506 = vld [vmem:[%s165 + $0x9b0] sm:$0xff]
        %v507 = vld [vmem:[%s165 + $0x9b8] sm:$0xff]
        %v508 = vld [vmem:[%s165 + $0x9c0] sm:$0xff]
        %v509 = vld [vmem:[%s165 + $0x9c8] sm:$0xff]
        %v510 = vld [vmem:[%s165 + $0x9d0] sm:$0xff]
        %v511 = vld [vmem:[%s165 + $0x9d8] sm:$0xff]
        %v512 = vld [vmem:[%s165 + $0x9e0] sm:$0xff]
        %v513 = vld [vmem:[%s165 + $0x9e8] sm:$0xff]
        %v514 = vld [vmem:[%s165 + $0x9f0] sm:$0xff]
        %v515 = vld [vmem:[%s165 + $0x9f8] sm:$0xff]
        %v516 = vld [vmem:[%s165 + $0xa00] sm:$0xff]
        %v517 = vld [vmem:[%s165 + $0xa08] sm:$0xff]
        %v518 = vld [vmem:[%s165 + $0xa10] sm:$0xff]
        %v519 = vld [vmem:[%s165 + $0xa18] sm:$0xff]
        %v520 = vld [vmem:[%s165 + $0xa20] sm:$0xff]
        %v521 = vld [vmem:[%s165 + $0xa28] sm:$0xff]
        %v522 = vld [vmem:[%s165 + $0xa30] sm:$0xff]
        %v523 = vld [vmem:[%s165 + $0xa38] sm:$0xff]
        %v524 = vld [vmem:[%s165 + $0xa40] sm:$0xff]
        %v525 = vld [vmem:[%s165 + $0xa48] sm:$0xff]
        %v526 = vld [vmem:[%s165 + $0xa50] sm:$0xff]
        %v527 = vld [vmem:[%s165 + $0xa58] sm:$0xff]
        %v528 = vld [vmem:[%s165 + $0xa60] sm:$0xff]
        %v529 = vld [vmem:[%s165 + $0xa68] sm:$0xff]
        %v530 = vld [vmem:[%s165 + $0xa70] sm:$0xff]
        %v531 = vld [vmem:[%s165 + $0xa78] sm:$0xff]
        %v532 = vld [vmem:[%s165 + $0xa80] sm:$0xff]
        %v533 = vld [vmem:[%s165 + $0xa88] sm:$0xff]
        %v534 = vld [vmem:[%s165 + $0xa90] sm:$0xff]
        %v535 = vld [vmem:[%s165 + $0xa98] sm:$0xff]
        %v536 = vld [vmem:[%s165 + $0xaa0] sm:$0xff]
        %v537 = vld [vmem:[%s165 + $0xaa8] sm:$0xff]
        %v538 = vld [vmem:[%s165 + $0xab0] sm:$0xff]
        %v539 = vld [vmem:[%s165 + $0xab8] sm:$0xff]
        %v540 = vld [vmem:[%s165 + $0xac0] sm:$0xff]
        %v541 = vld [vmem:[%s165 + $0xac8] sm:$0xff]
        %v542 = vld [vmem:[%s165 + $0xad0] sm:$0xff]
        %v543 = vld [vmem:[%s165 + $0xad8] sm:$0xff]
        %v544 = vld [vmem:[%s165 + $0xae0] sm:$0xff]
        %v545 = vld [vmem:[%s165 + $0xae8] sm:$0xff]
        %v546 = vld [vmem:[%s165 + $0xaf0] sm:$0xff]
        %v547 = vld [vmem:[%s165 + $0xaf8] sm:$0xff]
        %v548 = vld [vmem:[%s165 + $0xb00] sm:$0xff]
        %v549 = vld [vmem:[%s165 + $0xb08] sm:$0xff]
        %v550 = vld [vmem:[%s165 + $0xb10] sm:$0xff]
        %v551 = vld [vmem:[%s165 + $0xb18] sm:$0xff]
        %v552 = vld [vmem:[%s165 + $0xb20] sm:$0xff]
        %v553 = vld [vmem:[%s165 + $0xb28] sm:$0xff]
        %v554 = vld [vmem:[%s165 + $0xb30] sm:$0xff]
        %v555 = vld [vmem:[%s165 + $0xb38] sm:$0xff]
        %v556 = vld [vmem:[%s165 + $0xb40] sm:$0xff]
        %v557 = vld [vmem:[%s165 + $0xb48] sm:$0xff]
        %v558 = vld [vmem:[%s165 + $0xb50] sm:$0xff]
        %v559 = vld [vmem:[%s165 + $0xb58] sm:$0xff]
        %v560 = vld [vmem:[%s165 + $0xb60] sm:$0xff]
        %v561 = vld [vmem:[%s165 + $0xb68] sm:$0xff]
        %v562 = vld [vmem:[%s165 + $0xb70] sm:$0xff]
        %v563 = vld [vmem:[%s165 + $0xb78] sm:$0xff]
        %v564 = vld [vmem:[%s165 + $0xb80] sm:$0xff]
        %v565 = vld [vmem:[%s165 + $0xb88] sm:$0xff]
        %v566 = vld [vmem:[%s165 + $0xb90] sm:$0xff]
        %v567 = vld [vmem:[%s165 + $0xb98] sm:$0xff]
        %v568 = vld [vmem:[%s165 + $0xba0] sm:$0xff]
        %v569 = vld [vmem:[%s165 + $0xba8] sm:$0xff]
        %v570 = vld [vmem:[%s165 + $0xbb0] sm:$0xff]
        %v571 = vld [vmem:[%s165 + $0xbb8] sm:$0xff]
        %v572 = vld [vmem:[%s165 + $0xbc0] sm:$0xff]
        %v573 = vld [vmem:[%s165 + $0xbc8] sm:$0xff]
        %v574 = vld [vmem:[%s165 + $0xbd0] sm:$0xff]
        %v575 = vld [vmem:[%s165 + $0xbd8] sm:$0xff]
        %v576 = vld [vmem:[%s165 + $0xbe0] sm:$0xff]
        %v577 = vld [vmem:[%s165 + $0xbe8] sm:$0xff]
        %v578 = vld [vmem:[%s165 + $0xbf0] sm:$0xff]
        %v579 = vld [vmem:[%s165 + $0xbf8] sm:$0xff]
        %v580 = vld [vmem:[%s165 + $0xc00] sm:$0xff]
        %v581 = vld [vmem:[%s165 + $0xc08] sm:$0xff]
        %v582 = vld [vmem:[%s165 + $0xc10] sm:$0xff]
        %v583 = vld [vmem:[%s165 + $0xc18] sm:$0xff]
        %v584 = vld [vmem:[%s165 + $0xc20] sm:$0xff]
        %v585 = vld [vmem:[%s165 + $0xc28] sm:$0xff]
        %v586 = vld [vmem:[%s165 + $0xc30] sm:$0xff]
        %v587 = vld [vmem:[%s165 + $0xc38] sm:$0xff]
        %v588 = vld [vmem:[%s165 + $0xc40] sm:$0xff]
        %v589 = vld [vmem:[%s165 + $0xc48] sm:$0xff]
        %v590 = vld [vmem:[%s165 + $0xc50] sm:$0xff]
        %v591 = vld [vmem:[%s165 + $0xc58] sm:$0xff]
        %v592 = vld [vmem:[%s165 + $0xc60] sm:$0xff]
        %v593 = vld [vmem:[%s165 + $0xc68] sm:$0xff]
        %v594 = vld [vmem:[%s165 + $0xc70] sm:$0xff]
        %v595 = vld [vmem:[%s165 + $0xc78] sm:$0xff]
        %v596 = vld [vmem:[%s1] sm:$0xff]
        %v597 = vld [vmem:[%s1 + $0x8] sm:$0xff]
        %v598 = vld [vmem:[%s1 + $0x10] sm:$0xff]
        %v599 = vld [vmem:[%s1 + $0x18] sm:$0xff]
        %v600 = vld [vmem:[%s1 + $0x20] sm:$0xff]
        %v601 = vld [vmem:[%s1 + $0x28] sm:$0xff]
        %v602 = vld [vmem:[%s1 + $0x30] sm:$0xff]
        %v603 = vld [vmem:[%s1 + $0x38] sm:$0xff]
        %v604 = vld [vmem:[%s1 + $0x40] sm:$0xff]
        %v605 = vld [vmem:[%s1 + $0x48] sm:$0xff]
        %v606 = vld [vmem:[%s1 + $0x50] sm:$0xff]
        %v607 = vld [vmem:[%s1 + $0x58] sm:$0xff]
        %v608 = vld [vmem:[%s1 + $0x60] sm:$0xff]
        %v609 = vld [vmem:[%s1 + $0x68] sm:$0xff]
        %v610 = vld [vmem:[%s1 + $0x70] sm:$0xff]
        %v611 = vld [vmem:[%s1 + $0x78] sm:$0xff]
        %v612 = vld [vmem:[%s1 + $0x80] sm:$0xff]
        %v613 = vld [vmem:[%s1 + $0x88] sm:$0xff]
        %v614 = vld [vmem:[%s1 + $0x90] sm:$0xff]
        %v615 = vld [vmem:[%s1 + $0x98] sm:$0xff]
        %v616 = vld [vmem:[%s1 + $0xa0] sm:$0xff]
        %v617 = vld [vmem:[%s1 + $0xa8] sm:$0xff]
        %v618 = vld [vmem:[%s1 + $0xb0] sm:$0xff]
        %v619 = vld [vmem:[%s1 + $0xb8] sm:$0xff]
        %v620 = vld [vmem:[%s1 + $0xc0] sm:$0xff]
        %v621 = vld [vmem:[%s1 + $0xc8] sm:$0xff]
        %v622 = vld [vmem:[%s1 + $0xd0] sm:$0xff]
        %v623 = vld [vmem:[%s1 + $0xd8] sm:$0xff]
        %v624 = vld [vmem:[%s1 + $0xe0] sm:$0xff]
        %v625 = vld [vmem:[%s1 + $0xe8] sm:$0xff]
        %v626 = vld [vmem:[%s1 + $0xf0] sm:$0x7]
        %v627 = vld [vmem:[%s2] sm:$0x1]
        %v629 = vperm.slane %v627, 0
        %vm631 = vcmask 941056
        %v633 = vsel %vm631, %v197, 0
        %v636 = vsel %vm631, %v199, 0
        %v639 = vsel %vm631, %v201, 0
        %v642 = vsel %vm631, %v203, 0
        %v645 = vsel %vm631, %v205, 0
        %v648 = vsel %vm631, %v207, 0
        %v651 = vsel %vm631, %v209, 0
        %v654 = vsel %vm631, %v211, 0
        %v657 = vsel %vm631, %v213, 0
        %v660 = vsel %vm631, %v215, 0
        %v663 = vsel %vm631, %v217, 0
        %v666 = vsel %vm631, %v219, 0
        %v669 = vsel %vm631, %v221, 0
        %v672 = vsel %vm631, %v223, 0
        %v675 = vsel %vm631, %v225, 0
        %v678 = vsel %vm631, %v227, 0
        %v681 = vsel %vm631, %v229, 0
        %v684 = vsel %vm631, %v231, 0
        %v687 = vsel %vm631, %v233, 0
        %v690 = vsel %vm631, %v235, 0
        %v693 = vsel %vm631, %v237, 0
        %v696 = vsel %vm631, %v239, 0
        %v699 = vsel %vm631, %v241, 0
        %v702 = vsel %vm631, %v243, 0
        %v705 = vsel %vm631, %v245, 0
        %v708 = vsel %vm631, %v247, 0
        %v711 = vsel %vm631, %v249, 0
        %v714 = vsel %vm631, %v251, 0
        %v717 = vsel %vm631, %v253, 0
        %v720 = vsel %vm631, %v255, 0
        %v723 = vsel %vm631, %v257, 0
        %v726 = vsel %vm631, %v259, 0
        %v729 = vsel %vm631, %v261, 0
        %v732 = vsel %vm631, %v263, 0
        %v735 = vsel %vm631, %v265, 0
        %v738 = vsel %vm631, %v267, 0
        %v741 = vsel %vm631, %v269, 0
        %v744 = vsel %vm631, %v271, 0
        %v747 = vsel %vm631, %v273, 0
        %v750 = vsel %vm631, %v275, 0
        %v753 = vsel %vm631, %v277, 0
        %v756 = vsel %vm631, %v279, 0
        %v759 = vsel %vm631, %v281, 0
        %v762 = vsel %vm631, %v283, 0
        %v765 = vsel %vm631, %v285, 0
        %v768 = vsel %vm631, %v287, 0
        %v771 = vsel %vm631, %v289, 0
        %v774 = vsel %vm631, %v291, 0
        %v777 = vsel %vm631, %v293, 0
        %v780 = vsel %vm631, %v295, 0
        %v783 = vsel %vm631, %v297, 0
        %v786 = vsel %vm631, %v299, 0
        %v789 = vsel %vm631, %v301, 0
        %v792 = vsel %vm631, %v303, 0
        %v795 = vsel %vm631, %v305, 0
        %v798 = vsel %vm631, %v307, 0
        %v801 = vsel %vm631, %v309, 0
        %v804 = vsel %vm631, %v311, 0
        %v807 = vsel %vm631, %v313, 0
        %v810 = vsel %vm631, %v315, 0
        %v813 = vsel %vm631, %v317, 0
        %v816 = vsel %vm631, %v319, 0
        %v819 = vsel %vm631, %v321, 0
        %v822 = vsel %vm631, %v323, 0
        %v825 = vsel %vm631, %v325, 0
        %v828 = vsel %vm631, %v327, 0
        %v831 = vsel %vm631, %v329, 0
        %v834 = vsel %vm631, %v331, 0
        %v837 = vsel %vm631, %v333, 0
        %v840 = vsel %vm631, %v335, 0
        %v843 = vsel %vm631, %v337, 0
        %v846 = vsel %vm631, %v339, 0
        %v849 = vsel %vm631, %v341, 0
        %v852 = vsel %vm631, %v343, 0
        %v855 = vsel %vm631, %v345, 0
        %v858 = vsel %vm631, %v347, 0
        %v861 = vsel %vm631, %v349, 0
        %v864 = vsel %vm631, %v351, 0
        %v867 = vsel %vm631, %v353, 0
        %v870 = vsel %vm631, %v355, 0
        %v873 = vsel %vm631, %v357, 0
        %v876 = vsel %vm631, %v359, 0
        %v879 = vsel %vm631, %v361, 0
        %v882 = vsel %vm631, %v363, 0
        %v885 = vsel %vm631, %v365, 0
        %v888 = vsel %vm631, %v367, 0
        %v891 = vsel %vm631, %v369, 0
        %v894 = vsel %vm631, %v371, 0
        %v897 = vsel %vm631, %v373, 0
        %v900 = vsel %vm631, %v375, 0
        %v903 = vsel %vm631, %v377, 0
        %v906 = vsel %vm631, %v379, 0
        %v909 = vsel %vm631, %v381, 0
        %v912 = vsel %vm631, %v383, 0
        %v915 = vsel %vm631, %v385, 0
        %v918 = vsel %vm631, %v387, 0
        %v921 = vsel %vm631, %v389, 0
        %v924 = vsel %vm631, %v391, 0
        %v927 = vsel %vm631, %v393, 0
        %v930 = vsel %vm631, %v395, 0
        %v933 = vsel %vm631, %v397, 0
        %v936 = vsel %vm631, %v399, 0
        %v939 = vsel %vm631, %v401, 0
        %v942 = vsel %vm631, %v403, 0
        %v945 = vsel %vm631, %v405, 0
        %v948 = vsel %vm631, %v407, 0
        %v951 = vsel %vm631, %v409, 0
        %v954 = vsel %vm631, %v411, 0
        %v957 = vsel %vm631, %v413, 0
        %v960 = vsel %vm631, %v415, 0
        %v963 = vsel %vm631, %v417, 0
        %v966 = vsel %vm631, %v419, 0
        %v969 = vsel %vm631, %v421, 0
        %v972 = vsel %vm631, %v423, 0
        %v975 = vsel %vm631, %v425, 0
        %v978 = vsel %vm631, %v427, 0
        %v981 = vsel %vm631, %v429, 0
        %v984 = vsel %vm631, %v431, 0
        %v987 = vsel %vm631, %v433, 0
        %v990 = vsel %vm631, %v435, 0
        %v993 = vsel %vm631, %v437, 0
        %v996 = vsel %vm631, %v439, 0
        %v999 = vsel %vm631, %v441, 0
        %v1002 = vsel %vm631, %v443, 0
        %v1005 = vsel %vm631, %v445, 0
        %v1008 = vsel %vm631, %v447, 0
        %v1011 = vsel %vm631, %v449, 0
        %v1014 = vsel %vm631, %v451, 0
        %v1017 = vsel %vm631, %v453, 0
        %v1020 = vsel %vm631, %v455, 0
        %v1023 = vsel %vm631, %v457, 0
        %v1026 = vsel %vm631, %v459, 0
        %v1029 = vsel %vm631, %v461, 0
        %v1032 = vsel %vm631, %v463, 0
        %v1035 = vsel %vm631, %v465, 0
        %v1038 = vsel %vm631, %v467, 0
        %v1041 = vsel %vm631, %v469, 0
        %v1044 = vsel %vm631, %v471, 0
        %v1047 = vsel %vm631, %v473, 0
        %v1050 = vsel %vm631, %v475, 0
        %v1053 = vsel %vm631, %v477, 0
        %v1056 = vsel %vm631, %v479, 0
        %v1059 = vsel %vm631, %v481, 0
        %v1062 = vsel %vm631, %v483, 0
        %v1065 = vsel %vm631, %v485, 0
        %v1068 = vsel %vm631, %v487, 0
        %v1071 = vsel %vm631, %v489, 0
        %v1074 = vsel %vm631, %v491, 0
        %v1077 = vsel %vm631, %v493, 0
        %v1080 = vsel %vm631, %v495, 0
        %v1083 = vsel %vm631, %v497, 0
        %v1086 = vsel %vm631, %v499, 0
        %v1089 = vsel %vm631, %v501, 0
        %v1092 = vsel %vm631, %v503, 0
        %v1095 = vsel %vm631, %v505, 0
        %v1098 = vsel %vm631, %v507, 0
        %v1101 = vsel %vm631, %v509, 0
        %v1104 = vsel %vm631, %v511, 0
        %v1107 = vsel %vm631, %v513, 0
        %v1110 = vsel %vm631, %v515, 0
        %v1113 = vsel %vm631, %v517, 0
        %v1116 = vsel %vm631, %v519, 0
        %v1119 = vsel %vm631, %v521, 0
        %v1122 = vsel %vm631, %v523, 0
        %v1125 = vsel %vm631, %v525, 0
        %v1128 = vsel %vm631, %v527, 0
        %v1131 = vsel %vm631, %v529, 0
        %v1134 = vsel %vm631, %v531, 0
        %v1137 = vsel %vm631, %v533, 0
        %v1140 = vsel %vm631, %v535, 0
        %v1143 = vsel %vm631, %v537, 0
        %v1146 = vsel %vm631, %v539, 0
        %v1149 = vsel %vm631, %v541, 0
        %v1152 = vsel %vm631, %v543, 0
        %v1155 = vsel %vm631, %v545, 0
        %v1158 = vsel %vm631, %v547, 0
        %v1161 = vsel %vm631, %v549, 0
        %v1164 = vsel %vm631, %v551, 0
        %v1167 = vsel %vm631, %v553, 0
        %v1170 = vsel %vm631, %v555, 0
        %v1173 = vsel %vm631, %v557, 0
        %v1176 = vsel %vm631, %v559, 0
        %v1179 = vsel %vm631, %v561, 0
        %v1182 = vsel %vm631, %v563, 0
        %v1185 = vsel %vm631, %v565, 0
        %v1188 = vsel %vm631, %v567, 0
        %v1191 = vsel %vm631, %v569, 0
        %v1194 = vsel %vm631, %v571, 0
        %v1197 = vsel %vm631, %v573, 0
        %v1200 = vsel %vm631, %v575, 0
        %v1203 = vsel %vm631, %v577, 0
        %v1206 = vsel %vm631, %v579, 0
        %v1209 = vsel %vm631, %v581, 0
        %v1212 = vsel %vm631, %v583, 0
        %v1215 = vsel %vm631, %v585, 0
        %v1218 = vsel %vm631, %v587, 0
        %v1221 = vsel %vm631, %v589, 0
        %v1224 = vsel %vm631, %v591, 0
        %v1227 = vsel %vm631, %v593, 0
        %v1230 = vsel %vm631, %v595, 0
        %vm1232 = vcmask 1042432
        %v1234 = vsel %vm1232, %v626, 0
        %1236 = vmatpush.msra.mxu0 %v611
        %1237 = vmatpush.msra.mxu0 %v610
        %1238 = vmatpush.msra.mxu0 %v609
        %1239 = vmatpush.msra.mxu0 %v608
        %1240 = vmatpush.msra.mxu0 %v607
        %1241 = vmatpush.msra.mxu0 %v606
        %1242 = vmatpush.msra.mxu0 %v605
        %1243 = vmatpush.msra.mxu0 %v604
        %1244 = vmatpush.msra.mxu0 %v603
        %1245 = vmatpush.msra.mxu0 %v602
        %1246 = vmatpush.msra.mxu0 %v601
        %1247 = vmatpush.msra.mxu0 %v600
        %1248 = vmatpush.msra.mxu0 %v599
        %1249 = vmatpush.msra.mxu0 %v598
        %1250 = vmatpush.msra.mxu0 %v597
        %1251 = vmatpush.msra.mxu0 %v596
        %1252 = vmatmul.f32.gmra.mxu0 %v196
        %v1253 = vpop.f32.mrf.mxu0
        %v1254 = vadd.f32 %v629, %v1253
        %1255 = vmatmul.f32.gmra.mxu0 %v198
        %v1256 = vpop.f32.mrf.mxu0
        %v1257 = vadd.f32 %v629, %v1256
        %1258 = vmatmul.f32.gmra.mxu0 %v200
        %v1259 = vpop.f32.mrf.mxu0
        %v1260 = vadd.f32 %v629, %v1259
        %1261 = vmatmul.f32.gmra.mxu0 %v202
        %v1262 = vpop.f32.mrf.mxu0
        %v1263 = vadd.f32 %v629, %v1262
        %1264 = vmatmul.f32.gmra.mxu0 %v204
        %v1265 = vpop.f32.mrf.mxu0
        %v1266 = vadd.f32 %v629, %v1265
        %1267 = vmatmul.f32.gmra.mxu0 %v206
        %v1268 = vpop.f32.mrf.mxu0
        %v1269 = vadd.f32 %v629, %v1268
        %1270 = vmatmul.f32.gmra.mxu0 %v208
        %v1271 = vpop.f32.mrf.mxu0
        %v1272 = vadd.f32 %v629, %v1271
        %1273 = vmatmul.f32.gmra.mxu0 %v210
        %v1274 = vpop.f32.mrf.mxu0
        %v1275 = vadd.f32 %v629, %v1274
        %1276 = vmatmul.f32.gmra.mxu0 %v212
        %v1277 = vpop.f32.mrf.mxu0
        %v1278 = vadd.f32 %v629, %v1277
        %1279 = vmatmul.f32.gmra.mxu0 %v214
        %v1280 = vpop.f32.mrf.mxu0
        %v1281 = vadd.f32 %v629, %v1280
        %1282 = vmatmul.f32.gmra.mxu0 %v216
        %v1283 = vpop.f32.mrf.mxu0
        %v1284 = vadd.f32 %v629, %v1283
        %1285 = vmatmul.f32.gmra.mxu0 %v218
        %v1286 = vpop.f32.mrf.mxu0
        %v1287 = vadd.f32 %v629, %v1286
        %1288 = vmatmul.f32.gmra.mxu0 %v220
        %v1289 = vpop.f32.mrf.mxu0
        %v1290 = vadd.f32 %v629, %v1289
        %1291 = vmatmul.f32.gmra.mxu0 %v222
        %v1292 = vpop.f32.mrf.mxu0
        %v1293 = vadd.f32 %v629, %v1292
        %1294 = vmatmul.f32.gmra.mxu0 %v224
        %v1295 = vpop.f32.mrf.mxu0
        %v1296 = vadd.f32 %v629, %v1295
        %1297 = vmatmul.f32.gmra.mxu0 %v226
        %v1298 = vpop.f32.mrf.mxu0
        %v1299 = vadd.f32 %v629, %v1298
        %1300 = vmatmul.f32.gmra.mxu0 %v228
        %v1301 = vpop.f32.mrf.mxu0
        %v1302 = vadd.f32 %v629, %v1301
        %1303 = vmatmul.f32.gmra.mxu0 %v230
        %v1304 = vpop.f32.mrf.mxu0
        %v1305 = vadd.f32 %v629, %v1304
        %1306 = vmatmul.f32.gmra.mxu0 %v232
        %v1307 = vpop.f32.mrf.mxu0
        %v1308 = vadd.f32 %v629, %v1307
        %1309 = vmatmul.f32.gmra.mxu0 %v234
        %v1310 = vpop.f32.mrf.mxu0
        %v1311 = vadd.f32 %v629, %v1310
        %1312 = vmatmul.f32.gmra.mxu0 %v236
        %v1313 = vpop.f32.mrf.mxu0
        %v1314 = vadd.f32 %v629, %v1313
        %1315 = vmatmul.f32.gmra.mxu0 %v238
        %v1316 = vpop.f32.mrf.mxu0
        %v1317 = vadd.f32 %v629, %v1316
        %1318 = vmatmul.f32.gmra.mxu0 %v240
        %v1319 = vpop.f32.mrf.mxu0
        %v1320 = vadd.f32 %v629, %v1319
        %1321 = vmatmul.f32.gmra.mxu0 %v242
        %v1322 = vpop.f32.mrf.mxu0
        %v1323 = vadd.f32 %v629, %v1322
        %1324 = vmatmul.f32.gmra.mxu0 %v244
        %v1325 = vpop.f32.mrf.mxu0
        %v1326 = vadd.f32 %v629, %v1325
        %1327 = vmatmul.f32.gmra.mxu0 %v246
        %v1328 = vpop.f32.mrf.mxu0
        %v1329 = vadd.f32 %v629, %v1328
        %1330 = vmatmul.f32.gmra.mxu0 %v248
        %v1331 = vpop.f32.mrf.mxu0
        %v1332 = vadd.f32 %v629, %v1331
        %1333 = vmatmul.f32.gmra.mxu0 %v250
        %v1334 = vpop.f32.mrf.mxu0
        %v1335 = vadd.f32 %v629, %v1334
        %1336 = vmatmul.f32.gmra.mxu0 %v252
        %v1337 = vpop.f32.mrf.mxu0
        %v1338 = vadd.f32 %v629, %v1337
        %1339 = vmatmul.f32.gmra.mxu0 %v254
        %v1340 = vpop.f32.mrf.mxu0
        %v1341 = vadd.f32 %v629, %v1340
        %1342 = vmatmul.f32.gmra.mxu0 %v256
        %v1343 = vpop.f32.mrf.mxu0
        %v1344 = vadd.f32 %v629, %v1343
        %1345 = vmatmul.f32.gmra.mxu0 %v258
        %v1346 = vpop.f32.mrf.mxu0
        %v1347 = vadd.f32 %v629, %v1346
        %1348 = vmatmul.f32.gmra.mxu0 %v260
        %v1349 = vpop.f32.mrf.mxu0
        %v1350 = vadd.f32 %v629, %v1349
        %1351 = vmatmul.f32.gmra.mxu0 %v262
        %v1352 = vpop.f32.mrf.mxu0
        %v1353 = vadd.f32 %v629, %v1352
        %1354 = vmatmul.f32.gmra.mxu0 %v264
        %v1355 = vpop.f32.mrf.mxu0
        %v1356 = vadd.f32 %v629, %v1355
        %1357 = vmatmul.f32.gmra.mxu0 %v266
        %v1358 = vpop.f32.mrf.mxu0
        %v1359 = vadd.f32 %v629, %v1358
        %1360 = vmatmul.f32.gmra.mxu0 %v268
        %v1361 = vpop.f32.mrf.mxu0
        %v1362 = vadd.f32 %v629, %v1361
        %1363 = vmatmul.f32.gmra.mxu0 %v270
        %v1364 = vpop.f32.mrf.mxu0
        %v1365 = vadd.f32 %v629, %v1364
        %1366 = vmatmul.f32.gmra.mxu0 %v272
        %v1367 = vpop.f32.mrf.mxu0
        %v1368 = vadd.f32 %v629, %v1367
        %1369 = vmatmul.f32.gmra.mxu0 %v274
        %v1370 = vpop.f32.mrf.mxu0
        %v1371 = vadd.f32 %v629, %v1370
        %1372 = vmatmul.f32.gmra.mxu0 %v276
        %v1373 = vpop.f32.mrf.mxu0
        %v1374 = vadd.f32 %v629, %v1373
        %1375 = vmatmul.f32.gmra.mxu0 %v278
        %v1376 = vpop.f32.mrf.mxu0
        %v1377 = vadd.f32 %v629, %v1376
        %1378 = vmatmul.f32.gmra.mxu0 %v280
        %v1379 = vpop.f32.mrf.mxu0
        %v1380 = vadd.f32 %v629, %v1379
        %1381 = vmatmul.f32.gmra.mxu0 %v282
        %v1382 = vpop.f32.mrf.mxu0
        %v1383 = vadd.f32 %v629, %v1382
        %1384 = vmatmul.f32.gmra.mxu0 %v284
        %v1385 = vpop.f32.mrf.mxu0
        %v1386 = vadd.f32 %v629, %v1385
        %1387 = vmatmul.f32.gmra.mxu0 %v286
        %v1388 = vpop.f32.mrf.mxu0
        %v1389 = vadd.f32 %v629, %v1388
        %1390 = vmatmul.f32.gmra.mxu0 %v288
        %v1391 = vpop.f32.mrf.mxu0
        %v1392 = vadd.f32 %v629, %v1391
        %1393 = vmatmul.f32.gmra.mxu0 %v290
        %v1394 = vpop.f32.mrf.mxu0
        %v1395 = vadd.f32 %v629, %v1394
        %1396 = vmatmul.f32.gmra.mxu0 %v292
        %v1397 = vpop.f32.mrf.mxu0
        %v1398 = vadd.f32 %v629, %v1397
        %1399 = vmatmul.f32.gmra.mxu0 %v294
        %v1400 = vpop.f32.mrf.mxu0
        %v1401 = vadd.f32 %v629, %v1400
        %1402 = vmatmul.f32.gmra.mxu0 %v296
        %v1403 = vpop.f32.mrf.mxu0
        %v1404 = vadd.f32 %v629, %v1403
        %1405 = vmatmul.f32.gmra.mxu0 %v298
        %v1406 = vpop.f32.mrf.mxu0
        %v1407 = vadd.f32 %v629, %v1406
        %1408 = vmatmul.f32.gmra.mxu0 %v300
        %v1409 = vpop.f32.mrf.mxu0
        %v1410 = vadd.f32 %v629, %v1409
        %1411 = vmatmul.f32.gmra.mxu0 %v302
        %v1412 = vpop.f32.mrf.mxu0
        %v1413 = vadd.f32 %v629, %v1412
        %1414 = vmatmul.f32.gmra.mxu0 %v304
        %v1415 = vpop.f32.mrf.mxu0
        %v1416 = vadd.f32 %v629, %v1415
        %1417 = vmatmul.f32.gmra.mxu0 %v306
        %v1418 = vpop.f32.mrf.mxu0
        %v1419 = vadd.f32 %v629, %v1418
        %1420 = vmatmul.f32.gmra.mxu0 %v308
        %v1421 = vpop.f32.mrf.mxu0
        %v1422 = vadd.f32 %v629, %v1421
        %1423 = vmatmul.f32.gmra.mxu0 %v310
        %v1424 = vpop.f32.mrf.mxu0
        %v1425 = vadd.f32 %v629, %v1424
        %1426 = vmatmul.f32.gmra.mxu0 %v312
        %v1427 = vpop.f32.mrf.mxu0
        %v1428 = vadd.f32 %v629, %v1427
        %1429 = vmatmul.f32.gmra.mxu0 %v314
        %v1430 = vpop.f32.mrf.mxu0
        %v1431 = vadd.f32 %v629, %v1430
        %1432 = vmatmul.f32.gmra.mxu0 %v316
        %v1433 = vpop.f32.mrf.mxu0
        %v1434 = vadd.f32 %v629, %v1433
        %1435 = vmatmul.f32.gmra.mxu0 %v318
        %v1436 = vpop.f32.mrf.mxu0
        %v1437 = vadd.f32 %v629, %v1436
        %1438 = vmatmul.f32.gmra.mxu0 %v320
        %v1439 = vpop.f32.mrf.mxu0
        %v1440 = vadd.f32 %v629, %v1439
        %1441 = vmatmul.f32.gmra.mxu0 %v322
        %v1442 = vpop.f32.mrf.mxu0
        %v1443 = vadd.f32 %v629, %v1442
        %1444 = vmatmul.f32.gmra.mxu0 %v324
        %v1445 = vpop.f32.mrf.mxu0
        %v1446 = vadd.f32 %v629, %v1445
        %1447 = vmatmul.f32.gmra.mxu0 %v326
        %v1448 = vpop.f32.mrf.mxu0
        %v1449 = vadd.f32 %v629, %v1448
        %1450 = vmatmul.f32.gmra.mxu0 %v328
        %v1451 = vpop.f32.mrf.mxu0
        %v1452 = vadd.f32 %v629, %v1451
        %1453 = vmatmul.f32.gmra.mxu0 %v330
        %v1454 = vpop.f32.mrf.mxu0
        %v1455 = vadd.f32 %v629, %v1454
        %1456 = vmatmul.f32.gmra.mxu0 %v332
        %v1457 = vpop.f32.mrf.mxu0
        %v1458 = vadd.f32 %v629, %v1457
        %1459 = vmatmul.f32.gmra.mxu0 %v334
        %v1460 = vpop.f32.mrf.mxu0
        %v1461 = vadd.f32 %v629, %v1460
        %1462 = vmatmul.f32.gmra.mxu0 %v336
        %v1463 = vpop.f32.mrf.mxu0
        %v1464 = vadd.f32 %v629, %v1463
        %1465 = vmatmul.f32.gmra.mxu0 %v338
        %v1466 = vpop.f32.mrf.mxu0
        %v1467 = vadd.f32 %v629, %v1466
        %1468 = vmatmul.f32.gmra.mxu0 %v340
        %v1469 = vpop.f32.mrf.mxu0
        %v1470 = vadd.f32 %v629, %v1469
        %1471 = vmatmul.f32.gmra.mxu0 %v342
        %v1472 = vpop.f32.mrf.mxu0
        %v1473 = vadd.f32 %v629, %v1472
        %1474 = vmatmul.f32.gmra.mxu0 %v344
        %v1475 = vpop.f32.mrf.mxu0
        %v1476 = vadd.f32 %v629, %v1475
        %1477 = vmatmul.f32.gmra.mxu0 %v346
        %v1478 = vpop.f32.mrf.mxu0
        %v1479 = vadd.f32 %v629, %v1478
        %1480 = vmatmul.f32.gmra.mxu0 %v348
        %v1481 = vpop.f32.mrf.mxu0
        %v1482 = vadd.f32 %v629, %v1481
        %1483 = vmatmul.f32.gmra.mxu0 %v350
        %v1484 = vpop.f32.mrf.mxu0
        %v1485 = vadd.f32 %v629, %v1484
        %1486 = vmatmul.f32.gmra.mxu0 %v352
        %v1487 = vpop.f32.mrf.mxu0
        %v1488 = vadd.f32 %v629, %v1487
        %1489 = vmatmul.f32.gmra.mxu0 %v354
        %v1490 = vpop.f32.mrf.mxu0
        %v1491 = vadd.f32 %v629, %v1490
        %1492 = vmatmul.f32.gmra.mxu0 %v356
        %v1493 = vpop.f32.mrf.mxu0
        %v1494 = vadd.f32 %v629, %v1493
        %1495 = vmatmul.f32.gmra.mxu0 %v358
        %v1496 = vpop.f32.mrf.mxu0
        %v1497 = vadd.f32 %v629, %v1496
        %1498 = vmatmul.f32.gmra.mxu0 %v360
        %v1499 = vpop.f32.mrf.mxu0
        %v1500 = vadd.f32 %v629, %v1499
        %1501 = vmatmul.f32.gmra.mxu0 %v362
        %v1502 = vpop.f32.mrf.mxu0
        %v1503 = vadd.f32 %v629, %v1502
        %1504 = vmatmul.f32.gmra.mxu0 %v364
        %v1505 = vpop.f32.mrf.mxu0
        %v1506 = vadd.f32 %v629, %v1505
        %1507 = vmatmul.f32.gmra.mxu0 %v366
        %v1508 = vpop.f32.mrf.mxu0
        %v1509 = vadd.f32 %v629, %v1508
        %1510 = vmatmul.f32.gmra.mxu0 %v368
        %v1511 = vpop.f32.mrf.mxu0
        %v1512 = vadd.f32 %v629, %v1511
        %1513 = vmatmul.f32.gmra.mxu0 %v370
        %v1514 = vpop.f32.mrf.mxu0
        %v1515 = vadd.f32 %v629, %v1514
        %1516 = vmatmul.f32.gmra.mxu0 %v372
        %v1517 = vpop.f32.mrf.mxu0
        %v1518 = vadd.f32 %v629, %v1517
        %1519 = vmatmul.f32.gmra.mxu0 %v374
        %v1520 = vpop.f32.mrf.mxu0
        %v1521 = vadd.f32 %v629, %v1520
        %1522 = vmatmul.f32.gmra.mxu0 %v376
        %v1523 = vpop.f32.mrf.mxu0
        %v1524 = vadd.f32 %v629, %v1523
        %1525 = vmatmul.f32.gmra.mxu0 %v378
        %v1526 = vpop.f32.mrf.mxu0
        %v1527 = vadd.f32 %v629, %v1526
        %1528 = vmatmul.f32.gmra.mxu0 %v380
        %v1529 = vpop.f32.mrf.mxu0
        %v1530 = vadd.f32 %v629, %v1529
        %1531 = vmatmul.f32.gmra.mxu0 %v382
        %v1532 = vpop.f32.mrf.mxu0
        %v1533 = vadd.f32 %v629, %v1532
        %1534 = vmatmul.f32.gmra.mxu0 %v384
        %v1535 = vpop.f32.mrf.mxu0
        %v1536 = vadd.f32 %v629, %v1535
        %1537 = vmatmul.f32.gmra.mxu0 %v386
        %v1538 = vpop.f32.mrf.mxu0
        %v1539 = vadd.f32 %v629, %v1538
        %1540 = vmatmul.f32.gmra.mxu0 %v388
        %v1541 = vpop.f32.mrf.mxu0
        %v1542 = vadd.f32 %v629, %v1541
        %1543 = vmatmul.f32.gmra.mxu0 %v390
        %v1544 = vpop.f32.mrf.mxu0
        %v1545 = vadd.f32 %v629, %v1544
        %1546 = vmatmul.f32.gmra.mxu0 %v392
        %v1547 = vpop.f32.mrf.mxu0
        %v1548 = vadd.f32 %v629, %v1547
        %1549 = vmatmul.f32.gmra.mxu0 %v394
        %v1550 = vpop.f32.mrf.mxu0
        %v1551 = vadd.f32 %v629, %v1550
        %1552 = vmatmul.f32.gmra.mxu0 %v396
        %v1553 = vpop.f32.mrf.mxu0
        %v1554 = vadd.f32 %v629, %v1553
        %1555 = vmatmul.f32.gmra.mxu0 %v398
        %v1556 = vpop.f32.mrf.mxu0
        %v1557 = vadd.f32 %v629, %v1556
        %1558 = vmatmul.f32.gmra.mxu0 %v400
        %v1559 = vpop.f32.mrf.mxu0
        %v1560 = vadd.f32 %v629, %v1559
        %1561 = vmatmul.f32.gmra.mxu0 %v402
        %v1562 = vpop.f32.mrf.mxu0
        %v1563 = vadd.f32 %v629, %v1562
        %1564 = vmatmul.f32.gmra.mxu0 %v404
        %v1565 = vpop.f32.mrf.mxu0
        %v1566 = vadd.f32 %v629, %v1565
        %1567 = vmatmul.f32.gmra.mxu0 %v406
        %v1568 = vpop.f32.mrf.mxu0
        %v1569 = vadd.f32 %v629, %v1568
        %1570 = vmatmul.f32.gmra.mxu0 %v408
        %v1571 = vpop.f32.mrf.mxu0
        %v1572 = vadd.f32 %v629, %v1571
        %1573 = vmatmul.f32.gmra.mxu0 %v410
        %v1574 = vpop.f32.mrf.mxu0
        %v1575 = vadd.f32 %v629, %v1574
        %1576 = vmatmul.f32.gmra.mxu0 %v412
        %v1577 = vpop.f32.mrf.mxu0
        %v1578 = vadd.f32 %v629, %v1577
        %1579 = vmatmul.f32.gmra.mxu0 %v414
        %v1580 = vpop.f32.mrf.mxu0
        %v1581 = vadd.f32 %v629, %v1580
        %1582 = vmatmul.f32.gmra.mxu0 %v416
        %v1583 = vpop.f32.mrf.mxu0
        %v1584 = vadd.f32 %v629, %v1583
        %1585 = vmatmul.f32.gmra.mxu0 %v418
        %v1586 = vpop.f32.mrf.mxu0
        %v1587 = vadd.f32 %v629, %v1586
        %1588 = vmatmul.f32.gmra.mxu0 %v420
        %v1589 = vpop.f32.mrf.mxu0
        %v1590 = vadd.f32 %v629, %v1589
        %1591 = vmatmul.f32.gmra.mxu0 %v422
        %v1592 = vpop.f32.mrf.mxu0
        %v1593 = vadd.f32 %v629, %v1592
        %1594 = vmatmul.f32.gmra.mxu0 %v424
        %v1595 = vpop.f32.mrf.mxu0
        %v1596 = vadd.f32 %v629, %v1595
        %1597 = vmatmul.f32.gmra.mxu0 %v426
        %v1598 = vpop.f32.mrf.mxu0
        %v1599 = vadd.f32 %v629, %v1598
        %1600 = vmatmul.f32.gmra.mxu0 %v428
        %v1601 = vpop.f32.mrf.mxu0
        %v1602 = vadd.f32 %v629, %v1601
        %1603 = vmatmul.f32.gmra.mxu0 %v430
        %v1604 = vpop.f32.mrf.mxu0
        %v1605 = vadd.f32 %v629, %v1604
        %1606 = vmatmul.f32.gmra.mxu0 %v432
        %v1607 = vpop.f32.mrf.mxu0
        %v1608 = vadd.f32 %v629, %v1607
        %1609 = vmatmul.f32.gmra.mxu0 %v434
        %v1610 = vpop.f32.mrf.mxu0
        %v1611 = vadd.f32 %v629, %v1610
        %1612 = vmatmul.f32.gmra.mxu0 %v436
        %v1613 = vpop.f32.mrf.mxu0
        %v1614 = vadd.f32 %v629, %v1613
        %1615 = vmatmul.f32.gmra.mxu0 %v438
        %v1616 = vpop.f32.mrf.mxu0
        %v1617 = vadd.f32 %v629, %v1616
        %1618 = vmatmul.f32.gmra.mxu0 %v440
        %v1619 = vpop.f32.mrf.mxu0
        %v1620 = vadd.f32 %v629, %v1619
        %1621 = vmatmul.f32.gmra.mxu0 %v442
        %v1622 = vpop.f32.mrf.mxu0
        %v1623 = vadd.f32 %v629, %v1622
        %1624 = vmatmul.f32.gmra.mxu0 %v444
        %v1625 = vpop.f32.mrf.mxu0
        %v1626 = vadd.f32 %v629, %v1625
        %1627 = vmatmul.f32.gmra.mxu0 %v446
        %v1628 = vpop.f32.mrf.mxu0
        %v1629 = vadd.f32 %v629, %v1628
        %1630 = vmatmul.f32.gmra.mxu0 %v448
        %v1631 = vpop.f32.mrf.mxu0
        %v1632 = vadd.f32 %v629, %v1631
        %1633 = vmatmul.f32.gmra.mxu0 %v450
        %v1634 = vpop.f32.mrf.mxu0
        %v1635 = vadd.f32 %v629, %v1634
        %1636 = vmatmul.f32.gmra.mxu0 %v452
        %v1637 = vpop.f32.mrf.mxu0
        %v1638 = vadd.f32 %v629, %v1637
        %1639 = vmatmul.f32.gmra.mxu0 %v454
        %v1640 = vpop.f32.mrf.mxu0
        %v1641 = vadd.f32 %v629, %v1640
        %1642 = vmatmul.f32.gmra.mxu0 %v456
        %v1643 = vpop.f32.mrf.mxu0
        %v1644 = vadd.f32 %v629, %v1643
        %1645 = vmatmul.f32.gmra.mxu0 %v458
        %v1646 = vpop.f32.mrf.mxu0
        %v1647 = vadd.f32 %v629, %v1646
        %1648 = vmatmul.f32.gmra.mxu0 %v460
        %v1649 = vpop.f32.mrf.mxu0
        %v1650 = vadd.f32 %v629, %v1649
        %1651 = vmatmul.f32.gmra.mxu0 %v462
        %v1652 = vpop.f32.mrf.mxu0
        %v1653 = vadd.f32 %v629, %v1652
        %1654 = vmatmul.f32.gmra.mxu0 %v464
        %v1655 = vpop.f32.mrf.mxu0
        %v1656 = vadd.f32 %v629, %v1655
        %1657 = vmatmul.f32.gmra.mxu0 %v466
        %v1658 = vpop.f32.mrf.mxu0
        %v1659 = vadd.f32 %v629, %v1658
        %1660 = vmatmul.f32.gmra.mxu0 %v468
        %v1661 = vpop.f32.mrf.mxu0
        %v1662 = vadd.f32 %v629, %v1661
        %1663 = vmatmul.f32.gmra.mxu0 %v470
        %v1664 = vpop.f32.mrf.mxu0
        %v1665 = vadd.f32 %v629, %v1664
        %1666 = vmatmul.f32.gmra.mxu0 %v472
        %v1667 = vpop.f32.mrf.mxu0
        %v1668 = vadd.f32 %v629, %v1667
        %1669 = vmatmul.f32.gmra.mxu0 %v474
        %v1670 = vpop.f32.mrf.mxu0
        %v1671 = vadd.f32 %v629, %v1670
        %1672 = vmatmul.f32.gmra.mxu0 %v476
        %v1673 = vpop.f32.mrf.mxu0
        %v1674 = vadd.f32 %v629, %v1673
        %1675 = vmatmul.f32.gmra.mxu0 %v478
        %v1676 = vpop.f32.mrf.mxu0
        %v1677 = vadd.f32 %v629, %v1676
        %1678 = vmatmul.f32.gmra.mxu0 %v480
        %v1679 = vpop.f32.mrf.mxu0
        %v1680 = vadd.f32 %v629, %v1679
        %1681 = vmatmul.f32.gmra.mxu0 %v482
        %v1682 = vpop.f32.mrf.mxu0
        %v1683 = vadd.f32 %v629, %v1682
        %1684 = vmatmul.f32.gmra.mxu0 %v484
        %v1685 = vpop.f32.mrf.mxu0
        %v1686 = vadd.f32 %v629, %v1685
        %1687 = vmatmul.f32.gmra.mxu0 %v486
        %v1688 = vpop.f32.mrf.mxu0
        %v1689 = vadd.f32 %v629, %v1688
        %1690 = vmatmul.f32.gmra.mxu0 %v488
        %v1691 = vpop.f32.mrf.mxu0
        %v1692 = vadd.f32 %v629, %v1691
        %1693 = vmatmul.f32.gmra.mxu0 %v490
        %v1694 = vpop.f32.mrf.mxu0
        %v1695 = vadd.f32 %v629, %v1694
        %1696 = vmatmul.f32.gmra.mxu0 %v492
        %v1697 = vpop.f32.mrf.mxu0
        %v1698 = vadd.f32 %v629, %v1697
        %1699 = vmatmul.f32.gmra.mxu0 %v494
        %v1700 = vpop.f32.mrf.mxu0
        %v1701 = vadd.f32 %v629, %v1700
        %1702 = vmatmul.f32.gmra.mxu0 %v496
        %v1703 = vpop.f32.mrf.mxu0
        %v1704 = vadd.f32 %v629, %v1703
        %1705 = vmatmul.f32.gmra.mxu0 %v498
        %v1706 = vpop.f32.mrf.mxu0
        %v1707 = vadd.f32 %v629, %v1706
        %1708 = vmatmul.f32.gmra.mxu0 %v500
        %v1709 = vpop.f32.mrf.mxu0
        %v1710 = vadd.f32 %v629, %v1709
        %1711 = vmatmul.f32.gmra.mxu0 %v502
        %v1712 = vpop.f32.mrf.mxu0
        %v1713 = vadd.f32 %v629, %v1712
        %1714 = vmatmul.f32.gmra.mxu0 %v504
        %v1715 = vpop.f32.mrf.mxu0
        %v1716 = vadd.f32 %v629, %v1715
        %1717 = vmatmul.f32.gmra.mxu0 %v506
        %v1718 = vpop.f32.mrf.mxu0
        %v1719 = vadd.f32 %v629, %v1718
        %1720 = vmatmul.f32.gmra.mxu0 %v508
        %v1721 = vpop.f32.mrf.mxu0
        %v1722 = vadd.f32 %v629, %v1721
        %1723 = vmatmul.f32.gmra.mxu0 %v510
        %v1724 = vpop.f32.mrf.mxu0
        %v1725 = vadd.f32 %v629, %v1724
        %1726 = vmatmul.f32.gmra.mxu0 %v512
        %v1727 = vpop.f32.mrf.mxu0
        %v1728 = vadd.f32 %v629, %v1727
        %1729 = vmatmul.f32.gmra.mxu0 %v514
        %v1730 = vpop.f32.mrf.mxu0
        %v1731 = vadd.f32 %v629, %v1730
        %1732 = vmatmul.f32.gmra.mxu0 %v516
        %v1733 = vpop.f32.mrf.mxu0
        %v1734 = vadd.f32 %v629, %v1733
        %1735 = vmatmul.f32.gmra.mxu0 %v518
        %v1736 = vpop.f32.mrf.mxu0
        %v1737 = vadd.f32 %v629, %v1736
        %1738 = vmatmul.f32.gmra.mxu0 %v520
        %v1739 = vpop.f32.mrf.mxu0
        %v1740 = vadd.f32 %v629, %v1739
        %1741 = vmatmul.f32.gmra.mxu0 %v522
        %v1742 = vpop.f32.mrf.mxu0
        %v1743 = vadd.f32 %v629, %v1742
        %1744 = vmatmul.f32.gmra.mxu0 %v524
        %v1745 = vpop.f32.mrf.mxu0
        %v1746 = vadd.f32 %v629, %v1745
        %1747 = vmatmul.f32.gmra.mxu0 %v526
        %v1748 = vpop.f32.mrf.mxu0
        %v1749 = vadd.f32 %v629, %v1748
        %1750 = vmatmul.f32.gmra.mxu0 %v528
        %v1751 = vpop.f32.mrf.mxu0
        %v1752 = vadd.f32 %v629, %v1751
        %1753 = vmatmul.f32.gmra.mxu0 %v530
        %v1754 = vpop.f32.mrf.mxu0
        %v1755 = vadd.f32 %v629, %v1754
        %1756 = vmatmul.f32.gmra.mxu0 %v532
        %v1757 = vpop.f32.mrf.mxu0
        %v1758 = vadd.f32 %v629, %v1757
        %1759 = vmatmul.f32.gmra.mxu0 %v534
        %v1760 = vpop.f32.mrf.mxu0
        %v1761 = vadd.f32 %v629, %v1760
        %1762 = vmatmul.f32.gmra.mxu0 %v536
        %v1763 = vpop.f32.mrf.mxu0
        %v1764 = vadd.f32 %v629, %v1763
        %1765 = vmatmul.f32.gmra.mxu0 %v538
        %v1766 = vpop.f32.mrf.mxu0
        %v1767 = vadd.f32 %v629, %v1766
        %1768 = vmatmul.f32.gmra.mxu0 %v540
        %v1769 = vpop.f32.mrf.mxu0
        %v1770 = vadd.f32 %v629, %v1769
        %1771 = vmatmul.f32.gmra.mxu0 %v542
        %v1772 = vpop.f32.mrf.mxu0
        %v1773 = vadd.f32 %v629, %v1772
        %1774 = vmatmul.f32.gmra.mxu0 %v544
        %v1775 = vpop.f32.mrf.mxu0
        %v1776 = vadd.f32 %v629, %v1775
        %1777 = vmatmul.f32.gmra.mxu0 %v546
        %v1778 = vpop.f32.mrf.mxu0
        %v1779 = vadd.f32 %v629, %v1778
        %1780 = vmatmul.f32.gmra.mxu0 %v548
        %v1781 = vpop.f32.mrf.mxu0
        %v1782 = vadd.f32 %v629, %v1781
        %1783 = vmatmul.f32.gmra.mxu0 %v550
        %v1784 = vpop.f32.mrf.mxu0
        %v1785 = vadd.f32 %v629, %v1784
        %1786 = vmatmul.f32.gmra.mxu0 %v552
        %v1787 = vpop.f32.mrf.mxu0
        %v1788 = vadd.f32 %v629, %v1787
        %1789 = vmatmul.f32.gmra.mxu0 %v554
        %v1790 = vpop.f32.mrf.mxu0
        %v1791 = vadd.f32 %v629, %v1790
        %1792 = vmatmul.f32.gmra.mxu0 %v556
        %v1793 = vpop.f32.mrf.mxu0
        %v1794 = vadd.f32 %v629, %v1793
        %1795 = vmatmul.f32.gmra.mxu0 %v558
        %v1796 = vpop.f32.mrf.mxu0
        %v1797 = vadd.f32 %v629, %v1796
        %1798 = vmatmul.f32.gmra.mxu0 %v560
        %v1799 = vpop.f32.mrf.mxu0
        %v1800 = vadd.f32 %v629, %v1799
        %1801 = vmatmul.f32.gmra.mxu0 %v562
        %v1802 = vpop.f32.mrf.mxu0
        %v1803 = vadd.f32 %v629, %v1802
        %1804 = vmatmul.f32.gmra.mxu0 %v564
        %v1805 = vpop.f32.mrf.mxu0
        %v1806 = vadd.f32 %v629, %v1805
        %1807 = vmatmul.f32.gmra.mxu0 %v566
        %v1808 = vpop.f32.mrf.mxu0
        %v1809 = vadd.f32 %v629, %v1808
        %1810 = vmatmul.f32.gmra.mxu0 %v568
        %v1811 = vpop.f32.mrf.mxu0
        %v1812 = vadd.f32 %v629, %v1811
        %1813 = vmatmul.f32.gmra.mxu0 %v570
        %v1814 = vpop.f32.mrf.mxu0
        %v1815 = vadd.f32 %v629, %v1814
        %1816 = vmatmul.f32.gmra.mxu0 %v572
        %v1817 = vpop.f32.mrf.mxu0
        %v1818 = vadd.f32 %v629, %v1817
        %1819 = vmatmul.f32.gmra.mxu0 %v574
        %v1820 = vpop.f32.mrf.mxu0
        %v1821 = vadd.f32 %v629, %v1820
        %1822 = vmatmul.f32.gmra.mxu0 %v576
        %v1823 = vpop.f32.mrf.mxu0
        %v1824 = vadd.f32 %v629, %v1823
        %1825 = vmatmul.f32.gmra.mxu0 %v578
        %v1826 = vpop.f32.mrf.mxu0
        %v1827 = vadd.f32 %v629, %v1826
        %1828 = vmatmul.f32.gmra.mxu0 %v580
        %v1829 = vpop.f32.mrf.mxu0
        %v1830 = vadd.f32 %v629, %v1829
        %1831 = vmatmul.f32.gmra.mxu0 %v582
        %v1832 = vpop.f32.mrf.mxu0
        %v1833 = vadd.f32 %v629, %v1832
        %1834 = vmatmul.f32.gmra.mxu0 %v584
        %v1835 = vpop.f32.mrf.mxu0
        %v1836 = vadd.f32 %v629, %v1835
        %1837 = vmatmul.f32.gmra.mxu0 %v586
        %v1838 = vpop.f32.mrf.mxu0
        %v1839 = vadd.f32 %v629, %v1838
        %1840 = vmatmul.f32.gmra.mxu0 %v588
        %v1841 = vpop.f32.mrf.mxu0
        %v1842 = vadd.f32 %v629, %v1841
        %1843 = vmatmul.f32.gmra.mxu0 %v590
        %v1844 = vpop.f32.mrf.mxu0
        %v1845 = vadd.f32 %v629, %v1844
        %1846 = vmatmul.f32.gmra.mxu0 %v592
        %v1847 = vpop.f32.mrf.mxu0
        %v1848 = vadd.f32 %v629, %v1847
        %1849 = vmatmul.f32.gmra.mxu0 %v594
        %v1850 = vpop.f32.mrf.mxu0
        %v1851 = vadd.f32 %v629, %v1850
        %1852 = vdwg.mxu0
        %1853 = vmatpush.msra.mxu0 0.0
        %1854 = vmatpush.msra.mxu0 %v1234
        %1855 = vmatpush.msra.mxu0 %v625
        %1856 = vmatpush.msra.mxu0 %v624
        %1857 = vmatpush.msra.mxu0 %v623
        %1858 = vmatpush.msra.mxu0 %v622
        %1859 = vmatpush.msra.mxu0 %v621
        %1860 = vmatpush.msra.mxu0 %v620
        %1861 = vmatpush.msra.mxu0 %v619
        %1862 = vmatpush.msra.mxu0 %v618
        %1863 = vmatpush.msra.mxu0 %v617
        %1864 = vmatpush.msra.mxu0 %v616
        %1865 = vmatpush.msra.mxu0 %v615
        %1866 = vmatpush.msra.mxu0 %v614
        %1867 = vmatpush.msra.mxu0 %v613
        %1868 = vmatpush.msra.mxu0 %v612
        %1869 = vmatmul.f32.gmra.mxu0 %v633
        %v1870 = vpop.f32.mrf.mxu0
        %v1871 = vadd.f32 %v1254, %v1870
        %1872 = vmatmul.f32.gmra.mxu0 %v636
        %v1873 = vpop.f32.mrf.mxu0
        %v1874 = vadd.f32 %v1257, %v1873
        %1875 = vmatmul.f32.gmra.mxu0 %v639
        %v1876 = vpop.f32.mrf.mxu0
        %v1877 = vadd.f32 %v1260, %v1876
        %1878 = vmatmul.f32.gmra.mxu0 %v642
        %v1879 = vpop.f32.mrf.mxu0
        %v1880 = vadd.f32 %v1263, %v1879
        %1881 = vmatmul.f32.gmra.mxu0 %v645
        %v1882 = vpop.f32.mrf.mxu0
        %v1883 = vadd.f32 %v1266, %v1882
        %1884 = vmatmul.f32.gmra.mxu0 %v648
        %v1885 = vpop.f32.mrf.mxu0
        %v1886 = vadd.f32 %v1269, %v1885
        %1887 = vmatmul.f32.gmra.mxu0 %v651
        %v1888 = vpop.f32.mrf.mxu0
        %v1889 = vadd.f32 %v1272, %v1888
        %1890 = vmatmul.f32.gmra.mxu0 %v654
        %v1891 = vpop.f32.mrf.mxu0
        %v1892 = vadd.f32 %v1275, %v1891
        %1893 = vmatmul.f32.gmra.mxu0 %v657
        %v1894 = vpop.f32.mrf.mxu0
        %v1895 = vadd.f32 %v1278, %v1894
        %1896 = vmatmul.f32.gmra.mxu0 %v660
        %v1897 = vpop.f32.mrf.mxu0
        %v1898 = vadd.f32 %v1281, %v1897
        %1899 = vmatmul.f32.gmra.mxu0 %v663
        %v1900 = vpop.f32.mrf.mxu0
        %v1901 = vadd.f32 %v1284, %v1900
        %1902 = vmatmul.f32.gmra.mxu0 %v666
        %v1903 = vpop.f32.mrf.mxu0
        %v1904 = vadd.f32 %v1287, %v1903
        %1905 = vmatmul.f32.gmra.mxu0 %v669
        %v1906 = vpop.f32.mrf.mxu0
        %v1907 = vadd.f32 %v1290, %v1906
        %1908 = vmatmul.f32.gmra.mxu0 %v672
        %v1909 = vpop.f32.mrf.mxu0
        %v1910 = vadd.f32 %v1293, %v1909
        %1911 = vmatmul.f32.gmra.mxu0 %v675
        %v1912 = vpop.f32.mrf.mxu0
        %v1913 = vadd.f32 %v1296, %v1912
        %1914 = vmatmul.f32.gmra.mxu0 %v678
        %v1915 = vpop.f32.mrf.mxu0
        %v1916 = vadd.f32 %v1299, %v1915
        %1917 = vmatmul.f32.gmra.mxu0 %v681
        %v1918 = vpop.f32.mrf.mxu0
        %v1919 = vadd.f32 %v1302, %v1918
        %1920 = vmatmul.f32.gmra.mxu0 %v684
        %v1921 = vpop.f32.mrf.mxu0
        %v1922 = vadd.f32 %v1305, %v1921
        %1923 = vmatmul.f32.gmra.mxu0 %v687
        %v1924 = vpop.f32.mrf.mxu0
        %v1925 = vadd.f32 %v1308, %v1924
        %1926 = vmatmul.f32.gmra.mxu0 %v690
        %v1927 = vpop.f32.mrf.mxu0
        %v1928 = vadd.f32 %v1311, %v1927
        %1929 = vmatmul.f32.gmra.mxu0 %v693
        %v1930 = vpop.f32.mrf.mxu0
        %v1931 = vadd.f32 %v1314, %v1930
        %1932 = vmatmul.f32.gmra.mxu0 %v696
        %v1933 = vpop.f32.mrf.mxu0
        %v1934 = vadd.f32 %v1317, %v1933
        %1935 = vmatmul.f32.gmra.mxu0 %v699
        %v1936 = vpop.f32.mrf.mxu0
        %v1937 = vadd.f32 %v1320, %v1936
        %1938 = vmatmul.f32.gmra.mxu0 %v702
        %v1939 = vpop.f32.mrf.mxu0
        %v1940 = vadd.f32 %v1323, %v1939
        %1941 = vmatmul.f32.gmra.mxu0 %v705
        %v1942 = vpop.f32.mrf.mxu0
        %v1943 = vadd.f32 %v1326, %v1942
        %1944 = vmatmul.f32.gmra.mxu0 %v708
        %v1945 = vpop.f32.mrf.mxu0
        %v1946 = vadd.f32 %v1329, %v1945
        %1947 = vmatmul.f32.gmra.mxu0 %v711
        %v1948 = vpop.f32.mrf.mxu0
        %v1949 = vadd.f32 %v1332, %v1948
        %1950 = vmatmul.f32.gmra.mxu0 %v714
        %v1951 = vpop.f32.mrf.mxu0
        %v1952 = vadd.f32 %v1335, %v1951
        %1953 = vmatmul.f32.gmra.mxu0 %v717
        %v1954 = vpop.f32.mrf.mxu0
        %v1955 = vadd.f32 %v1338, %v1954
        %1956 = vmatmul.f32.gmra.mxu0 %v720
        %v1957 = vpop.f32.mrf.mxu0
        %v1958 = vadd.f32 %v1341, %v1957
        %1959 = vmatmul.f32.gmra.mxu0 %v723
        %v1960 = vpop.f32.mrf.mxu0
        %v1961 = vadd.f32 %v1344, %v1960
        %1962 = vmatmul.f32.gmra.mxu0 %v726
        %v1963 = vpop.f32.mrf.mxu0
        %v1964 = vadd.f32 %v1347, %v1963
        %1965 = vmatmul.f32.gmra.mxu0 %v729
        %v1966 = vpop.f32.mrf.mxu0
        %v1967 = vadd.f32 %v1350, %v1966
        %1968 = vmatmul.f32.gmra.mxu0 %v732
        %v1969 = vpop.f32.mrf.mxu0
        %v1970 = vadd.f32 %v1353, %v1969
        %1971 = vmatmul.f32.gmra.mxu0 %v735
        %v1972 = vpop.f32.mrf.mxu0
        %v1973 = vadd.f32 %v1356, %v1972
        %1974 = vmatmul.f32.gmra.mxu0 %v738
        %v1975 = vpop.f32.mrf.mxu0
        %v1976 = vadd.f32 %v1359, %v1975
        %1977 = vmatmul.f32.gmra.mxu0 %v741
        %v1978 = vpop.f32.mrf.mxu0
        %v1979 = vadd.f32 %v1362, %v1978
        %1980 = vmatmul.f32.gmra.mxu0 %v744
        %v1981 = vpop.f32.mrf.mxu0
        %v1982 = vadd.f32 %v1365, %v1981
        %1983 = vmatmul.f32.gmra.mxu0 %v747
        %v1984 = vpop.f32.mrf.mxu0
        %v1985 = vadd.f32 %v1368, %v1984
        %1986 = vmatmul.f32.gmra.mxu0 %v750
        %v1987 = vpop.f32.mrf.mxu0
        %v1988 = vadd.f32 %v1371, %v1987
        %1989 = vmatmul.f32.gmra.mxu0 %v753
        %v1990 = vpop.f32.mrf.mxu0
        %v1991 = vadd.f32 %v1374, %v1990
        %1992 = vmatmul.f32.gmra.mxu0 %v756
        %v1993 = vpop.f32.mrf.mxu0
        %v1994 = vadd.f32 %v1377, %v1993
        %1995 = vmatmul.f32.gmra.mxu0 %v759
        %v1996 = vpop.f32.mrf.mxu0
        %v1997 = vadd.f32 %v1380, %v1996
        %1998 = vmatmul.f32.gmra.mxu0 %v762
        %v1999 = vpop.f32.mrf.mxu0
        %v2000 = vadd.f32 %v1383, %v1999
        %2001 = vmatmul.f32.gmra.mxu0 %v765
        %v2002 = vpop.f32.mrf.mxu0
        %v2003 = vadd.f32 %v1386, %v2002
        %2004 = vmatmul.f32.gmra.mxu0 %v768
        %v2005 = vpop.f32.mrf.mxu0
        %v2006 = vadd.f32 %v1389, %v2005
        %2007 = vmatmul.f32.gmra.mxu0 %v771
        %v2008 = vpop.f32.mrf.mxu0
        %v2009 = vadd.f32 %v1392, %v2008
        %2010 = vmatmul.f32.gmra.mxu0 %v774
        %v2011 = vpop.f32.mrf.mxu0
        %v2012 = vadd.f32 %v1395, %v2011
        %2013 = vmatmul.f32.gmra.mxu0 %v777
        %v2014 = vpop.f32.mrf.mxu0
        %v2015 = vadd.f32 %v1398, %v2014
        %2016 = vmatmul.f32.gmra.mxu0 %v780
        %v2017 = vpop.f32.mrf.mxu0
        %v2018 = vadd.f32 %v1401, %v2017
        %2019 = vmatmul.f32.gmra.mxu0 %v783
        %v2020 = vpop.f32.mrf.mxu0
        %v2021 = vadd.f32 %v1404, %v2020
        %2022 = vmatmul.f32.gmra.mxu0 %v786
        %v2023 = vpop.f32.mrf.mxu0
        %v2024 = vadd.f32 %v1407, %v2023
        %2025 = vmatmul.f32.gmra.mxu0 %v789
        %v2026 = vpop.f32.mrf.mxu0
        %v2027 = vadd.f32 %v1410, %v2026
        %2028 = vmatmul.f32.gmra.mxu0 %v792
        %v2029 = vpop.f32.mrf.mxu0
        %v2030 = vadd.f32 %v1413, %v2029
        %2031 = vmatmul.f32.gmra.mxu0 %v795
        %v2032 = vpop.f32.mrf.mxu0
        %v2033 = vadd.f32 %v1416, %v2032
        %2034 = vmatmul.f32.gmra.mxu0 %v798
        %v2035 = vpop.f32.mrf.mxu0
        %v2036 = vadd.f32 %v1419, %v2035
        %2037 = vmatmul.f32.gmra.mxu0 %v801
        %v2038 = vpop.f32.mrf.mxu0
        %v2039 = vadd.f32 %v1422, %v2038
        %2040 = vmatmul.f32.gmra.mxu0 %v804
        %v2041 = vpop.f32.mrf.mxu0
        %v2042 = vadd.f32 %v1425, %v2041
        %2043 = vmatmul.f32.gmra.mxu0 %v807
        %v2044 = vpop.f32.mrf.mxu0
        %v2045 = vadd.f32 %v1428, %v2044
        %2046 = vmatmul.f32.gmra.mxu0 %v810
        %v2047 = vpop.f32.mrf.mxu0
        %v2048 = vadd.f32 %v1431, %v2047
        %2049 = vmatmul.f32.gmra.mxu0 %v813
        %v2050 = vpop.f32.mrf.mxu0
        %v2051 = vadd.f32 %v1434, %v2050
        %2052 = vmatmul.f32.gmra.mxu0 %v816
        %v2053 = vpop.f32.mrf.mxu0
        %v2054 = vadd.f32 %v1437, %v2053
        %2055 = vmatmul.f32.gmra.mxu0 %v819
        %v2056 = vpop.f32.mrf.mxu0
        %v2057 = vadd.f32 %v1440, %v2056
        %2058 = vmatmul.f32.gmra.mxu0 %v822
        %v2059 = vpop.f32.mrf.mxu0
        %v2060 = vadd.f32 %v1443, %v2059
        %2061 = vmatmul.f32.gmra.mxu0 %v825
        %v2062 = vpop.f32.mrf.mxu0
        %v2063 = vadd.f32 %v1446, %v2062
        %2064 = vmatmul.f32.gmra.mxu0 %v828
        %v2065 = vpop.f32.mrf.mxu0
        %v2066 = vadd.f32 %v1449, %v2065
        %2067 = vmatmul.f32.gmra.mxu0 %v831
        %v2068 = vpop.f32.mrf.mxu0
        %v2069 = vadd.f32 %v1452, %v2068
        %2070 = vmatmul.f32.gmra.mxu0 %v834
        %v2071 = vpop.f32.mrf.mxu0
        %v2072 = vadd.f32 %v1455, %v2071
        %2073 = vmatmul.f32.gmra.mxu0 %v837
        %v2074 = vpop.f32.mrf.mxu0
        %v2075 = vadd.f32 %v1458, %v2074
        %2076 = vmatmul.f32.gmra.mxu0 %v840
        %v2077 = vpop.f32.mrf.mxu0
        %v2078 = vadd.f32 %v1461, %v2077
        %2079 = vmatmul.f32.gmra.mxu0 %v843
        %v2080 = vpop.f32.mrf.mxu0
        %v2081 = vadd.f32 %v1464, %v2080
        %2082 = vmatmul.f32.gmra.mxu0 %v846
        %v2083 = vpop.f32.mrf.mxu0
        %v2084 = vadd.f32 %v1467, %v2083
        %2085 = vmatmul.f32.gmra.mxu0 %v849
        %v2086 = vpop.f32.mrf.mxu0
        %v2087 = vadd.f32 %v1470, %v2086
        %2088 = vmatmul.f32.gmra.mxu0 %v852
        %v2089 = vpop.f32.mrf.mxu0
        %v2090 = vadd.f32 %v1473, %v2089
        %2091 = vmatmul.f32.gmra.mxu0 %v855
        %v2092 = vpop.f32.mrf.mxu0
        %v2093 = vadd.f32 %v1476, %v2092
        %2094 = vmatmul.f32.gmra.mxu0 %v858
        %v2095 = vpop.f32.mrf.mxu0
        %v2096 = vadd.f32 %v1479, %v2095
        %2097 = vmatmul.f32.gmra.mxu0 %v861
        %v2098 = vpop.f32.mrf.mxu0
        %v2099 = vadd.f32 %v1482, %v2098
        %2100 = vmatmul.f32.gmra.mxu0 %v864
        %v2101 = vpop.f32.mrf.mxu0
        %v2102 = vadd.f32 %v1485, %v2101
        %2103 = vmatmul.f32.gmra.mxu0 %v867
        %v2104 = vpop.f32.mrf.mxu0
        %v2105 = vadd.f32 %v1488, %v2104
        %2106 = vmatmul.f32.gmra.mxu0 %v870
        %v2107 = vpop.f32.mrf.mxu0
        %v2108 = vadd.f32 %v1491, %v2107
        %2109 = vmatmul.f32.gmra.mxu0 %v873
        %v2110 = vpop.f32.mrf.mxu0
        %v2111 = vadd.f32 %v1494, %v2110
        %2112 = vmatmul.f32.gmra.mxu0 %v876
        %v2113 = vpop.f32.mrf.mxu0
        %v2114 = vadd.f32 %v1497, %v2113
        %2115 = vmatmul.f32.gmra.mxu0 %v879
        %v2116 = vpop.f32.mrf.mxu0
        %v2117 = vadd.f32 %v1500, %v2116
        %2118 = vmatmul.f32.gmra.mxu0 %v882
        %v2119 = vpop.f32.mrf.mxu0
        %v2120 = vadd.f32 %v1503, %v2119
        %2121 = vmatmul.f32.gmra.mxu0 %v885
        %v2122 = vpop.f32.mrf.mxu0
        %v2123 = vadd.f32 %v1506, %v2122
        %2124 = vmatmul.f32.gmra.mxu0 %v888
        %v2125 = vpop.f32.mrf.mxu0
        %v2126 = vadd.f32 %v1509, %v2125
        %2127 = vmatmul.f32.gmra.mxu0 %v891
        %v2128 = vpop.f32.mrf.mxu0
        %v2129 = vadd.f32 %v1512, %v2128
        %2130 = vmatmul.f32.gmra.mxu0 %v894
        %v2131 = vpop.f32.mrf.mxu0
        %v2132 = vadd.f32 %v1515, %v2131
        %2133 = vmatmul.f32.gmra.mxu0 %v897
        %v2134 = vpop.f32.mrf.mxu0
        %v2135 = vadd.f32 %v1518, %v2134
        %2136 = vmatmul.f32.gmra.mxu0 %v900
        %v2137 = vpop.f32.mrf.mxu0
        %v2138 = vadd.f32 %v1521, %v2137
        %2139 = vmatmul.f32.gmra.mxu0 %v903
        %v2140 = vpop.f32.mrf.mxu0
        %v2141 = vadd.f32 %v1524, %v2140
        %2142 = vmatmul.f32.gmra.mxu0 %v906
        %v2143 = vpop.f32.mrf.mxu0
        %v2144 = vadd.f32 %v1527, %v2143
        %2145 = vmatmul.f32.gmra.mxu0 %v909
        %v2146 = vpop.f32.mrf.mxu0
        %v2147 = vadd.f32 %v1530, %v2146
        %2148 = vmatmul.f32.gmra.mxu0 %v912
        %v2149 = vpop.f32.mrf.mxu0
        %v2150 = vadd.f32 %v1533, %v2149
        %2151 = vmatmul.f32.gmra.mxu0 %v915
        %v2152 = vpop.f32.mrf.mxu0
        %v2153 = vadd.f32 %v1536, %v2152
        %2154 = vmatmul.f32.gmra.mxu0 %v918
        %v2155 = vpop.f32.mrf.mxu0
        %v2156 = vadd.f32 %v1539, %v2155
        %2157 = vmatmul.f32.gmra.mxu0 %v921
        %v2158 = vpop.f32.mrf.mxu0
        %v2159 = vadd.f32 %v1542, %v2158
        %2160 = vmatmul.f32.gmra.mxu0 %v924
        %v2161 = vpop.f32.mrf.mxu0
        %v2162 = vadd.f32 %v1545, %v2161
        %2163 = vmatmul.f32.gmra.mxu0 %v927
        %v2164 = vpop.f32.mrf.mxu0
        %v2165 = vadd.f32 %v1548, %v2164
        %2166 = vmatmul.f32.gmra.mxu0 %v930
        %v2167 = vpop.f32.mrf.mxu0
        %v2168 = vadd.f32 %v1551, %v2167
        %2169 = vmatmul.f32.gmra.mxu0 %v933
        %v2170 = vpop.f32.mrf.mxu0
        %v2171 = vadd.f32 %v1554, %v2170
        %2172 = vmatmul.f32.gmra.mxu0 %v936
        %v2173 = vpop.f32.mrf.mxu0
        %v2174 = vadd.f32 %v1557, %v2173
        %2175 = vmatmul.f32.gmra.mxu0 %v939
        %v2176 = vpop.f32.mrf.mxu0
        %v2177 = vadd.f32 %v1560, %v2176
        %2178 = vmatmul.f32.gmra.mxu0 %v942
        %v2179 = vpop.f32.mrf.mxu0
        %v2180 = vadd.f32 %v1563, %v2179
        %2181 = vmatmul.f32.gmra.mxu0 %v945
        %v2182 = vpop.f32.mrf.mxu0
        %v2183 = vadd.f32 %v1566, %v2182
        %2184 = vmatmul.f32.gmra.mxu0 %v948
        %v2185 = vpop.f32.mrf.mxu0
        %v2186 = vadd.f32 %v1569, %v2185
        %2187 = vmatmul.f32.gmra.mxu0 %v951
        %v2188 = vpop.f32.mrf.mxu0
        %v2189 = vadd.f32 %v1572, %v2188
        %2190 = vmatmul.f32.gmra.mxu0 %v954
        %v2191 = vpop.f32.mrf.mxu0
        %v2192 = vadd.f32 %v1575, %v2191
        %2193 = vmatmul.f32.gmra.mxu0 %v957
        %v2194 = vpop.f32.mrf.mxu0
        %v2195 = vadd.f32 %v1578, %v2194
        %2196 = vmatmul.f32.gmra.mxu0 %v960
        %v2197 = vpop.f32.mrf.mxu0
        %v2198 = vadd.f32 %v1581, %v2197
        %2199 = vmatmul.f32.gmra.mxu0 %v963
        %v2200 = vpop.f32.mrf.mxu0
        %v2201 = vadd.f32 %v1584, %v2200
        %2202 = vmatmul.f32.gmra.mxu0 %v966
        %v2203 = vpop.f32.mrf.mxu0
        %v2204 = vadd.f32 %v1587, %v2203
        %2205 = vmatmul.f32.gmra.mxu0 %v969
        %v2206 = vpop.f32.mrf.mxu0
        %v2207 = vadd.f32 %v1590, %v2206
        %2208 = vmatmul.f32.gmra.mxu0 %v972
        %v2209 = vpop.f32.mrf.mxu0
        %v2210 = vadd.f32 %v1593, %v2209
        %2211 = vmatmul.f32.gmra.mxu0 %v975
        %v2212 = vpop.f32.mrf.mxu0
        %v2213 = vadd.f32 %v1596, %v2212
        %2214 = vmatmul.f32.gmra.mxu0 %v978
        %v2215 = vpop.f32.mrf.mxu0
        %v2216 = vadd.f32 %v1599, %v2215
        %2217 = vmatmul.f32.gmra.mxu0 %v981
        %v2218 = vpop.f32.mrf.mxu0
        %v2219 = vadd.f32 %v1602, %v2218
        %2220 = vmatmul.f32.gmra.mxu0 %v984
        %v2221 = vpop.f32.mrf.mxu0
        %v2222 = vadd.f32 %v1605, %v2221
        %2223 = vmatmul.f32.gmra.mxu0 %v987
        %v2224 = vpop.f32.mrf.mxu0
        %v2225 = vadd.f32 %v1608, %v2224
        %2226 = vmatmul.f32.gmra.mxu0 %v990
        %v2227 = vpop.f32.mrf.mxu0
        %v2228 = vadd.f32 %v1611, %v2227
        %2229 = vmatmul.f32.gmra.mxu0 %v993
        %v2230 = vpop.f32.mrf.mxu0
        %v2231 = vadd.f32 %v1614, %v2230
        %2232 = vmatmul.f32.gmra.mxu0 %v996
        %v2233 = vpop.f32.mrf.mxu0
        %v2234 = vadd.f32 %v1617, %v2233
        %2235 = vmatmul.f32.gmra.mxu0 %v999
        %v2236 = vpop.f32.mrf.mxu0
        %v2237 = vadd.f32 %v1620, %v2236
        %2238 = vmatmul.f32.gmra.mxu0 %v1002
        %v2239 = vpop.f32.mrf.mxu0
        %v2240 = vadd.f32 %v1623, %v2239
        %2241 = vmatmul.f32.gmra.mxu0 %v1005
        %v2242 = vpop.f32.mrf.mxu0
        %v2243 = vadd.f32 %v1626, %v2242
        %2244 = vmatmul.f32.gmra.mxu0 %v1008
        %v2245 = vpop.f32.mrf.mxu0
        %v2246 = vadd.f32 %v1629, %v2245
        %2247 = vmatmul.f32.gmra.mxu0 %v1011
        %v2248 = vpop.f32.mrf.mxu0
        %v2249 = vadd.f32 %v1632, %v2248
        %2250 = vmatmul.f32.gmra.mxu0 %v1014
        %v2251 = vpop.f32.mrf.mxu0
        %v2252 = vadd.f32 %v1635, %v2251
        %2253 = vmatmul.f32.gmra.mxu0 %v1017
        %v2254 = vpop.f32.mrf.mxu0
        %v2255 = vadd.f32 %v1638, %v2254
        %2256 = vmatmul.f32.gmra.mxu0 %v1020
        %v2257 = vpop.f32.mrf.mxu0
        %v2258 = vadd.f32 %v1641, %v2257
        %2259 = vmatmul.f32.gmra.mxu0 %v1023
        %v2260 = vpop.f32.mrf.mxu0
        %v2261 = vadd.f32 %v1644, %v2260
        %2262 = vmatmul.f32.gmra.mxu0 %v1026
        %v2263 = vpop.f32.mrf.mxu0
        %v2264 = vadd.f32 %v1647, %v2263
        %2265 = vmatmul.f32.gmra.mxu0 %v1029
        %v2266 = vpop.f32.mrf.mxu0
        %v2267 = vadd.f32 %v1650, %v2266
        %2268 = vmatmul.f32.gmra.mxu0 %v1032
        %v2269 = vpop.f32.mrf.mxu0
        %v2270 = vadd.f32 %v1653, %v2269
        %2271 = vmatmul.f32.gmra.mxu0 %v1035
        %v2272 = vpop.f32.mrf.mxu0
        %v2273 = vadd.f32 %v1656, %v2272
        %2274 = vmatmul.f32.gmra.mxu0 %v1038
        %v2275 = vpop.f32.mrf.mxu0
        %v2276 = vadd.f32 %v1659, %v2275
        %2277 = vmatmul.f32.gmra.mxu0 %v1041
        %v2278 = vpop.f32.mrf.mxu0
        %v2279 = vadd.f32 %v1662, %v2278
        %2280 = vmatmul.f32.gmra.mxu0 %v1044
        %v2281 = vpop.f32.mrf.mxu0
        %v2282 = vadd.f32 %v1665, %v2281
        %2283 = vmatmul.f32.gmra.mxu0 %v1047
        %v2284 = vpop.f32.mrf.mxu0
        %v2285 = vadd.f32 %v1668, %v2284
        %2286 = vmatmul.f32.gmra.mxu0 %v1050
        %v2287 = vpop.f32.mrf.mxu0
        %v2288 = vadd.f32 %v1671, %v2287
        %2289 = vmatmul.f32.gmra.mxu0 %v1053
        %v2290 = vpop.f32.mrf.mxu0
        %v2291 = vadd.f32 %v1674, %v2290
        %2292 = vmatmul.f32.gmra.mxu0 %v1056
        %v2293 = vpop.f32.mrf.mxu0
        %v2294 = vadd.f32 %v1677, %v2293
        %2295 = vmatmul.f32.gmra.mxu0 %v1059
        %v2296 = vpop.f32.mrf.mxu0
        %v2297 = vadd.f32 %v1680, %v2296
        %2298 = vmatmul.f32.gmra.mxu0 %v1062
        %v2299 = vpop.f32.mrf.mxu0
        %v2300 = vadd.f32 %v1683, %v2299
        %2301 = vmatmul.f32.gmra.mxu0 %v1065
        %v2302 = vpop.f32.mrf.mxu0
        %v2303 = vadd.f32 %v1686, %v2302
        %2304 = vmatmul.f32.gmra.mxu0 %v1068
        %v2305 = vpop.f32.mrf.mxu0
        %v2306 = vadd.f32 %v1689, %v2305
        %2307 = vmatmul.f32.gmra.mxu0 %v1071
        %v2308 = vpop.f32.mrf.mxu0
        %v2309 = vadd.f32 %v1692, %v2308
        %2310 = vmatmul.f32.gmra.mxu0 %v1074
        %v2311 = vpop.f32.mrf.mxu0
        %v2312 = vadd.f32 %v1695, %v2311
        %2313 = vmatmul.f32.gmra.mxu0 %v1077
        %v2314 = vpop.f32.mrf.mxu0
        %v2315 = vadd.f32 %v1698, %v2314
        %2316 = vmatmul.f32.gmra.mxu0 %v1080
        %v2317 = vpop.f32.mrf.mxu0
        %v2318 = vadd.f32 %v1701, %v2317
        %2319 = vmatmul.f32.gmra.mxu0 %v1083
        %v2320 = vpop.f32.mrf.mxu0
        %v2321 = vadd.f32 %v1704, %v2320
        %2322 = vmatmul.f32.gmra.mxu0 %v1086
        %v2323 = vpop.f32.mrf.mxu0
        %v2324 = vadd.f32 %v1707, %v2323
        %2325 = vmatmul.f32.gmra.mxu0 %v1089
        %v2326 = vpop.f32.mrf.mxu0
        %v2327 = vadd.f32 %v1710, %v2326
        %2328 = vmatmul.f32.gmra.mxu0 %v1092
        %v2329 = vpop.f32.mrf.mxu0
        %v2330 = vadd.f32 %v1713, %v2329
        %2331 = vmatmul.f32.gmra.mxu0 %v1095
        %v2332 = vpop.f32.mrf.mxu0
        %v2333 = vadd.f32 %v1716, %v2332
        %2334 = vmatmul.f32.gmra.mxu0 %v1098
        %v2335 = vpop.f32.mrf.mxu0
        %v2336 = vadd.f32 %v1719, %v2335
        %2337 = vmatmul.f32.gmra.mxu0 %v1101
        %v2338 = vpop.f32.mrf.mxu0
        %v2339 = vadd.f32 %v1722, %v2338
        %2340 = vmatmul.f32.gmra.mxu0 %v1104
        %v2341 = vpop.f32.mrf.mxu0
        %v2342 = vadd.f32 %v1725, %v2341
        %2343 = vmatmul.f32.gmra.mxu0 %v1107
        %v2344 = vpop.f32.mrf.mxu0
        %v2345 = vadd.f32 %v1728, %v2344
        %2346 = vmatmul.f32.gmra.mxu0 %v1110
        %v2347 = vpop.f32.mrf.mxu0
        %v2348 = vadd.f32 %v1731, %v2347
        %2349 = vmatmul.f32.gmra.mxu0 %v1113
        %v2350 = vpop.f32.mrf.mxu0
        %v2351 = vadd.f32 %v1734, %v2350
        %2352 = vmatmul.f32.gmra.mxu0 %v1116
        %v2353 = vpop.f32.mrf.mxu0
        %v2354 = vadd.f32 %v1737, %v2353
        %2355 = vmatmul.f32.gmra.mxu0 %v1119
        %v2356 = vpop.f32.mrf.mxu0
        %v2357 = vadd.f32 %v1740, %v2356
        %2358 = vmatmul.f32.gmra.mxu0 %v1122
        %v2359 = vpop.f32.mrf.mxu0
        %v2360 = vadd.f32 %v1743, %v2359
        %2361 = vmatmul.f32.gmra.mxu0 %v1125
        %v2362 = vpop.f32.mrf.mxu0
        %v2363 = vadd.f32 %v1746, %v2362
        %2364 = vmatmul.f32.gmra.mxu0 %v1128
        %v2365 = vpop.f32.mrf.mxu0
        %v2366 = vadd.f32 %v1749, %v2365
        %2367 = vmatmul.f32.gmra.mxu0 %v1131
        %v2368 = vpop.f32.mrf.mxu0
        %v2369 = vadd.f32 %v1752, %v2368
        %2370 = vmatmul.f32.gmra.mxu0 %v1134
        %v2371 = vpop.f32.mrf.mxu0
        %v2372 = vadd.f32 %v1755, %v2371
        %2373 = vmatmul.f32.gmra.mxu0 %v1137
        %v2374 = vpop.f32.mrf.mxu0
        %v2375 = vadd.f32 %v1758, %v2374
        %2376 = vmatmul.f32.gmra.mxu0 %v1140
        %v2377 = vpop.f32.mrf.mxu0
        %v2378 = vadd.f32 %v1761, %v2377
        %2379 = vmatmul.f32.gmra.mxu0 %v1143
        %v2380 = vpop.f32.mrf.mxu0
        %v2381 = vadd.f32 %v1764, %v2380
        %2382 = vmatmul.f32.gmra.mxu0 %v1146
        %v2383 = vpop.f32.mrf.mxu0
        %v2384 = vadd.f32 %v1767, %v2383
        %2385 = vmatmul.f32.gmra.mxu0 %v1149
        %v2386 = vpop.f32.mrf.mxu0
        %v2387 = vadd.f32 %v1770, %v2386
        %2388 = vmatmul.f32.gmra.mxu0 %v1152
        %v2389 = vpop.f32.mrf.mxu0
        %v2390 = vadd.f32 %v1773, %v2389
        %2391 = vmatmul.f32.gmra.mxu0 %v1155
        %v2392 = vpop.f32.mrf.mxu0
        %v2393 = vadd.f32 %v1776, %v2392
        %2394 = vmatmul.f32.gmra.mxu0 %v1158
        %v2395 = vpop.f32.mrf.mxu0
        %v2396 = vadd.f32 %v1779, %v2395
        %2397 = vmatmul.f32.gmra.mxu0 %v1161
        %v2398 = vpop.f32.mrf.mxu0
        %v2399 = vadd.f32 %v1782, %v2398
        %2400 = vmatmul.f32.gmra.mxu0 %v1164
        %v2401 = vpop.f32.mrf.mxu0
        %v2402 = vadd.f32 %v1785, %v2401
        %2403 = vmatmul.f32.gmra.mxu0 %v1167
        %v2404 = vpop.f32.mrf.mxu0
        %v2405 = vadd.f32 %v1788, %v2404
        %2406 = vmatmul.f32.gmra.mxu0 %v1170
        %v2407 = vpop.f32.mrf.mxu0
        %v2408 = vadd.f32 %v1791, %v2407
        %2409 = vmatmul.f32.gmra.mxu0 %v1173
        %v2410 = vpop.f32.mrf.mxu0
        %v2411 = vadd.f32 %v1794, %v2410
        %2412 = vmatmul.f32.gmra.mxu0 %v1176
        %v2413 = vpop.f32.mrf.mxu0
        %v2414 = vadd.f32 %v1797, %v2413
        %2415 = vmatmul.f32.gmra.mxu0 %v1179
        %v2416 = vpop.f32.mrf.mxu0
        %v2417 = vadd.f32 %v1800, %v2416
        %2418 = vmatmul.f32.gmra.mxu0 %v1182
        %v2419 = vpop.f32.mrf.mxu0
        %v2420 = vadd.f32 %v1803, %v2419
        %2421 = vmatmul.f32.gmra.mxu0 %v1185
        %v2422 = vpop.f32.mrf.mxu0
        %v2423 = vadd.f32 %v1806, %v2422
        %2424 = vmatmul.f32.gmra.mxu0 %v1188
        %v2425 = vpop.f32.mrf.mxu0
        %v2426 = vadd.f32 %v1809, %v2425
        %2427 = vmatmul.f32.gmra.mxu0 %v1191
        %v2428 = vpop.f32.mrf.mxu0
        %v2429 = vadd.f32 %v1812, %v2428
        %2430 = vmatmul.f32.gmra.mxu0 %v1194
        %v2431 = vpop.f32.mrf.mxu0
        %v2432 = vadd.f32 %v1815, %v2431
        %2433 = vmatmul.f32.gmra.mxu0 %v1197
        %v2434 = vpop.f32.mrf.mxu0
        %v2435 = vadd.f32 %v1818, %v2434
        %2436 = vmatmul.f32.gmra.mxu0 %v1200
        %v2437 = vpop.f32.mrf.mxu0
        %v2438 = vadd.f32 %v1821, %v2437
        %2439 = vmatmul.f32.gmra.mxu0 %v1203
        %v2440 = vpop.f32.mrf.mxu0
        %v2441 = vadd.f32 %v1824, %v2440
        %2442 = vmatmul.f32.gmra.mxu0 %v1206
        %v2443 = vpop.f32.mrf.mxu0
        %v2444 = vadd.f32 %v1827, %v2443
        %2445 = vmatmul.f32.gmra.mxu0 %v1209
        %v2446 = vpop.f32.mrf.mxu0
        %v2447 = vadd.f32 %v1830, %v2446
        %2448 = vmatmul.f32.gmra.mxu0 %v1212
        %v2449 = vpop.f32.mrf.mxu0
        %v2450 = vadd.f32 %v1833, %v2449
        %2451 = vmatmul.f32.gmra.mxu0 %v1215
        %v2452 = vpop.f32.mrf.mxu0
        %v2453 = vadd.f32 %v1836, %v2452
        %2454 = vmatmul.f32.gmra.mxu0 %v1218
        %v2455 = vpop.f32.mrf.mxu0
        %v2456 = vadd.f32 %v1839, %v2455
        %2457 = vmatmul.f32.gmra.mxu0 %v1221
        %v2458 = vpop.f32.mrf.mxu0
        %v2459 = vadd.f32 %v1842, %v2458
        %2460 = vmatmul.f32.gmra.mxu0 %v1224
        %v2461 = vpop.f32.mrf.mxu0
        %v2462 = vadd.f32 %v1845, %v2461
        %2463 = vmatmul.f32.gmra.mxu0 %v1227
        %v2464 = vpop.f32.mrf.mxu0
        %v2465 = vadd.f32 %v1848, %v2464
        %2466 = vmatmul.f32.gmra.mxu0 %v1230
        %v2467 = vpop.f32.mrf.mxu0
        %v2468 = vadd.f32 %v1851, %v2467
        %2469 = vdwg.mxu0
        %v2470 = vmax.f32 %v1871, 0.0
        %v2471 = vmax.f32 %v1874, 0.0
        %v2472 = vmax.f32 %v1877, 0.0
        %v2473 = vmax.f32 %v1880, 0.0
        %v2474 = vmax.f32 %v1883, 0.0
        %v2475 = vmax.f32 %v1886, 0.0
        %v2476 = vmax.f32 %v1889, 0.0
        %v2477 = vmax.f32 %v1892, 0.0
        %v2478 = vmax.f32 %v1895, 0.0
        %v2479 = vmax.f32 %v1898, 0.0
        %v2480 = vmax.f32 %v1901, 0.0
        %v2481 = vmax.f32 %v1904, 0.0
        %v2482 = vmax.f32 %v1907, 0.0
        %v2483 = vmax.f32 %v1910, 0.0
        %v2484 = vmax.f32 %v1913, 0.0
        %v2485 = vmax.f32 %v1916, 0.0
        %v2486 = vmax.f32 %v1919, 0.0
        %v2487 = vmax.f32 %v1922, 0.0
        %v2488 = vmax.f32 %v1925, 0.0
        %v2489 = vmax.f32 %v1928, 0.0
        %v2490 = vmax.f32 %v1931, 0.0
        %v2491 = vmax.f32 %v1934, 0.0
        %v2492 = vmax.f32 %v1937, 0.0
        %v2493 = vmax.f32 %v1940, 0.0
        %v2494 = vmax.f32 %v1943, 0.0
        %v2495 = vmax.f32 %v1946, 0.0
        %v2496 = vmax.f32 %v1949, 0.0
        %v2497 = vmax.f32 %v1952, 0.0
        %v2498 = vmax.f32 %v1955, 0.0
        %v2499 = vmax.f32 %v1958, 0.0
        %v2500 = vmax.f32 %v1961, 0.0
        %v2501 = vmax.f32 %v1964, 0.0
        %v2502 = vmax.f32 %v1967, 0.0
        %v2503 = vmax.f32 %v1970, 0.0
        %v2504 = vmax.f32 %v1973, 0.0
        %v2505 = vmax.f32 %v1976, 0.0
        %v2506 = vmax.f32 %v1979, 0.0
        %v2507 = vmax.f32 %v1982, 0.0
        %v2508 = vmax.f32 %v1985, 0.0
        %v2509 = vmax.f32 %v1988, 0.0
        %v2510 = vmax.f32 %v1991, 0.0
        %v2511 = vmax.f32 %v1994, 0.0
        %v2512 = vmax.f32 %v1997, 0.0
        %v2513 = vmax.f32 %v2000, 0.0
        %v2514 = vmax.f32 %v2003, 0.0
        %v2515 = vmax.f32 %v2006, 0.0
        %v2516 = vmax.f32 %v2009, 0.0
        %v2517 = vmax.f32 %v2012, 0.0
        %v2518 = vmax.f32 %v2015, 0.0
        %v2519 = vmax.f32 %v2018, 0.0
        %v2520 = vmax.f32 %v2021, 0.0
        %v2521 = vmax.f32 %v2024, 0.0
        %v2522 = vmax.f32 %v2027, 0.0
        %v2523 = vmax.f32 %v2030, 0.0
        %v2524 = vmax.f32 %v2033, 0.0
        %v2525 = vmax.f32 %v2036, 0.0
        %v2526 = vmax.f32 %v2039, 0.0
        %v2527 = vmax.f32 %v2042, 0.0
        %v2528 = vmax.f32 %v2045, 0.0
        %v2529 = vmax.f32 %v2048, 0.0
        %v2530 = vmax.f32 %v2051, 0.0
        %v2531 = vmax.f32 %v2054, 0.0
        %v2532 = vmax.f32 %v2057, 0.0
        %v2533 = vmax.f32 %v2060, 0.0
        %v2534 = vmax.f32 %v2063, 0.0
        %v2535 = vmax.f32 %v2066, 0.0
        %v2536 = vmax.f32 %v2069, 0.0
        %v2537 = vmax.f32 %v2072, 0.0
        %v2538 = vmax.f32 %v2075, 0.0
        %v2539 = vmax.f32 %v2078, 0.0
        %v2540 = vmax.f32 %v2081, 0.0
        %v2541 = vmax.f32 %v2084, 0.0
        %v2542 = vmax.f32 %v2087, 0.0
        %v2543 = vmax.f32 %v2090, 0.0
        %v2544 = vmax.f32 %v2093, 0.0
        %v2545 = vmax.f32 %v2096, 0.0
        %v2546 = vmax.f32 %v2099, 0.0
        %v2547 = vmax.f32 %v2102, 0.0
        %v2548 = vmax.f32 %v2105, 0.0
        %v2549 = vmax.f32 %v2108, 0.0
        %v2550 = vmax.f32 %v2111, 0.0
        %v2551 = vmax.f32 %v2114, 0.0
        %v2552 = vmax.f32 %v2117, 0.0
        %v2553 = vmax.f32 %v2120, 0.0
        %v2554 = vmax.f32 %v2123, 0.0
        %v2555 = vmax.f32 %v2126, 0.0
        %v2556 = vmax.f32 %v2129, 0.0
        %v2557 = vmax.f32 %v2132, 0.0
        %v2558 = vmax.f32 %v2135, 0.0
        %v2559 = vmax.f32 %v2138, 0.0
        %v2560 = vmax.f32 %v2141, 0.0
        %v2561 = vmax.f32 %v2144, 0.0
        %v2562 = vmax.f32 %v2147, 0.0
        %v2563 = vmax.f32 %v2150, 0.0
        %v2564 = vmax.f32 %v2153, 0.0
        %v2565 = vmax.f32 %v2156, 0.0
        %v2566 = vmax.f32 %v2159, 0.0
        %v2567 = vmax.f32 %v2162, 0.0
        %v2568 = vmax.f32 %v2165, 0.0
        %v2569 = vmax.f32 %v2168, 0.0
        %v2570 = vmax.f32 %v2171, 0.0
        %v2571 = vmax.f32 %v2174, 0.0
        %v2572 = vmax.f32 %v2177, 0.0
        %v2573 = vmax.f32 %v2180, 0.0
        %v2574 = vmax.f32 %v2183, 0.0
        %v2575 = vmax.f32 %v2186, 0.0
        %v2576 = vmax.f32 %v2189, 0.0
        %v2577 = vmax.f32 %v2192, 0.0
        %v2578 = vmax.f32 %v2195, 0.0
        %v2579 = vmax.f32 %v2198, 0.0
        %v2580 = vmax.f32 %v2201, 0.0
        %v2581 = vmax.f32 %v2204, 0.0
        %v2582 = vmax.f32 %v2207, 0.0
        %v2583 = vmax.f32 %v2210, 0.0
        %v2584 = vmax.f32 %v2213, 0.0
        %v2585 = vmax.f32 %v2216, 0.0
        %v2586 = vmax.f32 %v2219, 0.0
        %v2587 = vmax.f32 %v2222, 0.0
        %v2588 = vmax.f32 %v2225, 0.0
        %v2589 = vmax.f32 %v2228, 0.0
        %v2590 = vmax.f32 %v2231, 0.0
        %v2591 = vmax.f32 %v2234, 0.0
        %v2592 = vmax.f32 %v2237, 0.0
        %v2593 = vmax.f32 %v2240, 0.0
        %v2594 = vmax.f32 %v2243, 0.0
        %v2595 = vmax.f32 %v2246, 0.0
        %v2596 = vmax.f32 %v2249, 0.0
        %v2597 = vmax.f32 %v2252, 0.0
        %v2598 = vmax.f32 %v2255, 0.0
        %v2599 = vmax.f32 %v2258, 0.0
        %v2600 = vmax.f32 %v2261, 0.0
        %v2601 = vmax.f32 %v2264, 0.0
        %v2602 = vmax.f32 %v2267, 0.0
        %v2603 = vmax.f32 %v2270, 0.0
        %v2604 = vmax.f32 %v2273, 0.0
        %v2605 = vmax.f32 %v2276, 0.0
        %v2606 = vmax.f32 %v2279, 0.0
        %v2607 = vmax.f32 %v2282, 0.0
        %v2608 = vmax.f32 %v2285, 0.0
        %v2609 = vmax.f32 %v2288, 0.0
        %v2610 = vmax.f32 %v2291, 0.0
        %v2611 = vmax.f32 %v2294, 0.0
        %v2612 = vmax.f32 %v2297, 0.0
        %v2613 = vmax.f32 %v2300, 0.0
        %v2614 = vmax.f32 %v2303, 0.0
        %v2615 = vmax.f32 %v2306, 0.0
        %v2616 = vmax.f32 %v2309, 0.0
        %v2617 = vmax.f32 %v2312, 0.0
        %v2618 = vmax.f32 %v2315, 0.0
        %v2619 = vmax.f32 %v2318, 0.0
        %v2620 = vmax.f32 %v2321, 0.0
        %v2621 = vmax.f32 %v2324, 0.0
        %v2622 = vmax.f32 %v2327, 0.0
        %v2623 = vmax.f32 %v2330, 0.0
        %v2624 = vmax.f32 %v2333, 0.0
        %v2625 = vmax.f32 %v2336, 0.0
        %v2626 = vmax.f32 %v2339, 0.0
        %v2627 = vmax.f32 %v2342, 0.0
        %v2628 = vmax.f32 %v2345, 0.0
        %v2629 = vmax.f32 %v2348, 0.0
        %v2630 = vmax.f32 %v2351, 0.0
        %v2631 = vmax.f32 %v2354, 0.0
        %v2632 = vmax.f32 %v2357, 0.0
        %v2633 = vmax.f32 %v2360, 0.0
        %v2634 = vmax.f32 %v2363, 0.0
        %v2635 = vmax.f32 %v2366, 0.0
        %v2636 = vmax.f32 %v2369, 0.0
        %v2637 = vmax.f32 %v2372, 0.0
        %v2638 = vmax.f32 %v2375, 0.0
        %v2639 = vmax.f32 %v2378, 0.0
        %v2640 = vmax.f32 %v2381, 0.0
        %v2641 = vmax.f32 %v2384, 0.0
        %v2642 = vmax.f32 %v2387, 0.0
        %v2643 = vmax.f32 %v2390, 0.0
        %v2644 = vmax.f32 %v2393, 0.0
        %v2645 = vmax.f32 %v2396, 0.0
        %v2646 = vmax.f32 %v2399, 0.0
        %v2647 = vmax.f32 %v2402, 0.0
        %v2648 = vmax.f32 %v2405, 0.0
        %v2649 = vmax.f32 %v2408, 0.0
        %v2650 = vmax.f32 %v2411, 0.0
        %v2651 = vmax.f32 %v2414, 0.0
        %v2652 = vmax.f32 %v2417, 0.0
        %v2653 = vmax.f32 %v2420, 0.0
        %v2654 = vmax.f32 %v2423, 0.0
        %v2655 = vmax.f32 %v2426, 0.0
        %v2656 = vmax.f32 %v2429, 0.0
        %v2657 = vmax.f32 %v2432, 0.0
        %v2658 = vmax.f32 %v2435, 0.0
        %v2659 = vmax.f32 %v2438, 0.0
        %v2660 = vmax.f32 %v2441, 0.0
        %v2661 = vmax.f32 %v2444, 0.0
        %v2662 = vmax.f32 %v2447, 0.0
        %v2663 = vmax.f32 %v2450, 0.0
        %v2664 = vmax.f32 %v2453, 0.0
        %v2665 = vmax.f32 %v2456, 0.0
        %v2666 = vmax.f32 %v2459, 0.0
        %v2667 = vmax.f32 %v2462, 0.0
        %v2668 = vmax.f32 %v2465, 0.0
        %v2669 = vmax.f32 %v2468, 0.0
        %vm2670 = vcmask 64512
        %2671 = vst.msk [vmem:[%s194] sm:$0xff] %vm2670, %v2470
        %2672 = vst.msk [vmem:[%s194 + $0x8] sm:$0xff] %vm2670, %v2471
        %2673 = vst.msk [vmem:[%s194 + $0x10] sm:$0xff] %vm2670, %v2472
        %2674 = vst.msk [vmem:[%s194 + $0x18] sm:$0xff] %vm2670, %v2473
        %2675 = vst.msk [vmem:[%s194 + $0x20] sm:$0xff] %vm2670, %v2474
        %2676 = vst.msk [vmem:[%s194 + $0x28] sm:$0xff] %vm2670, %v2475
        %2677 = vst.msk [vmem:[%s194 + $0x30] sm:$0xff] %vm2670, %v2476
        %2678 = vst.msk [vmem:[%s194 + $0x38] sm:$0xff] %vm2670, %v2477
        %2679 = vst.msk [vmem:[%s194 + $0x40] sm:$0xff] %vm2670, %v2478
        %2680 = vst.msk [vmem:[%s194 + $0x48] sm:$0xff] %vm2670, %v2479
        %2681 = vst.msk [vmem:[%s194 + $0x50] sm:$0xff] %vm2670, %v2480
        %2682 = vst.msk [vmem:[%s194 + $0x58] sm:$0xff] %vm2670, %v2481
        %2683 = vst.msk [vmem:[%s194 + $0x60] sm:$0xff] %vm2670, %v2482
        %2684 = vst.msk [vmem:[%s194 + $0x68] sm:$0xff] %vm2670, %v2483
        %2685 = vst.msk [vmem:[%s194 + $0x70] sm:$0xff] %vm2670, %v2484
        %2686 = vst.msk [vmem:[%s194 + $0x78] sm:$0xff] %vm2670, %v2485
        %2687 = vst.msk [vmem:[%s194 + $0x80] sm:$0xff] %vm2670, %v2486
        %2688 = vst.msk [vmem:[%s194 + $0x88] sm:$0xff] %vm2670, %v2487
        %2689 = vst.msk [vmem:[%s194 + $0x90] sm:$0xff] %vm2670, %v2488
        %2690 = vst.msk [vmem:[%s194 + $0x98] sm:$0xff] %vm2670, %v2489
        %2691 = vst.msk [vmem:[%s194 + $0xa0] sm:$0xff] %vm2670, %v2490
        %2692 = vst.msk [vmem:[%s194 + $0xa8] sm:$0xff] %vm2670, %v2491
        %2693 = vst.msk [vmem:[%s194 + $0xb0] sm:$0xff] %vm2670, %v2492
        %2694 = vst.msk [vmem:[%s194 + $0xb8] sm:$0xff] %vm2670, %v2493
        %2695 = vst.msk [vmem:[%s194 + $0xc0] sm:$0xff] %vm2670, %v2494
        %2696 = vst.msk [vmem:[%s194 + $0xc8] sm:$0xff] %vm2670, %v2495
        %2697 = vst.msk [vmem:[%s194 + $0xd0] sm:$0xff] %vm2670, %v2496
        %2698 = vst.msk [vmem:[%s194 + $0xd8] sm:$0xff] %vm2670, %v2497
        %2699 = vst.msk [vmem:[%s194 + $0xe0] sm:$0xff] %vm2670, %v2498
        %2700 = vst.msk [vmem:[%s194 + $0xe8] sm:$0xff] %vm2670, %v2499
        %2701 = vst.msk [vmem:[%s194 + $0xf0] sm:$0xff] %vm2670, %v2500
        %2702 = vst.msk [vmem:[%s194 + $0xf8] sm:$0xff] %vm2670, %v2501
        %2703 = vst.msk [vmem:[%s194 + $0x100] sm:$0xff] %vm2670, %v2502
        %2704 = vst.msk [vmem:[%s194 + $0x108] sm:$0xff] %vm2670, %v2503
        %2705 = vst.msk [vmem:[%s194 + $0x110] sm:$0xff] %vm2670, %v2504
        %2706 = vst.msk [vmem:[%s194 + $0x118] sm:$0xff] %vm2670, %v2505
        %2707 = vst.msk [vmem:[%s194 + $0x120] sm:$0xff] %vm2670, %v2506
        %2708 = vst.msk [vmem:[%s194 + $0x128] sm:$0xff] %vm2670, %v2507
        %2709 = vst.msk [vmem:[%s194 + $0x130] sm:$0xff] %vm2670, %v2508
        %2710 = vst.msk [vmem:[%s194 + $0x138] sm:$0xff] %vm2670, %v2509
        %2711 = vst.msk [vmem:[%s194 + $0x140] sm:$0xff] %vm2670, %v2510
        %2712 = vst.msk [vmem:[%s194 + $0x148] sm:$0xff] %vm2670, %v2511
        %2713 = vst.msk [vmem:[%s194 + $0x150] sm:$0xff] %vm2670, %v2512
        %2714 = vst.msk [vmem:[%s194 + $0x158] sm:$0xff] %vm2670, %v2513
        %2715 = vst.msk [vmem:[%s194 + $0x160] sm:$0xff] %vm2670, %v2514
        %2716 = vst.msk [vmem:[%s194 + $0x168] sm:$0xff] %vm2670, %v2515
        %2717 = vst.msk [vmem:[%s194 + $0x170] sm:$0xff] %vm2670, %v2516
        %2718 = vst.msk [vmem:[%s194 + $0x178] sm:$0xff] %vm2670, %v2517
        %2719 = vst.msk [vmem:[%s194 + $0x180] sm:$0xff] %vm2670, %v2518
        %2720 = vst.msk [vmem:[%s194 + $0x188] sm:$0xff] %vm2670, %v2519
        %2721 = vst.msk [vmem:[%s194 + $0x190] sm:$0xff] %vm2670, %v2520
        %2722 = vst.msk [vmem:[%s194 + $0x198] sm:$0xff] %vm2670, %v2521
        %2723 = vst.msk [vmem:[%s194 + $0x1a0] sm:$0xff] %vm2670, %v2522
        %2724 = vst.msk [vmem:[%s194 + $0x1a8] sm:$0xff] %vm2670, %v2523
        %2725 = vst.msk [vmem:[%s194 + $0x1b0] sm:$0xff] %vm2670, %v2524
        %2726 = vst.msk [vmem:[%s194 + $0x1b8] sm:$0xff] %vm2670, %v2525
        %2727 = vst.msk [vmem:[%s194 + $0x1c0] sm:$0xff] %vm2670, %v2526
        %2728 = vst.msk [vmem:[%s194 + $0x1c8] sm:$0xff] %vm2670, %v2527
        %2729 = vst.msk [vmem:[%s194 + $0x1d0] sm:$0xff] %vm2670, %v2528
        %2730 = vst.msk [vmem:[%s194 + $0x1d8] sm:$0xff] %vm2670, %v2529
        %2731 = vst.msk [vmem:[%s194 + $0x1e0] sm:$0xff] %vm2670, %v2530
        %2732 = vst.msk [vmem:[%s194 + $0x1e8] sm:$0xff] %vm2670, %v2531
        %2733 = vst.msk [vmem:[%s194 + $0x1f0] sm:$0xff] %vm2670, %v2532
        %2734 = vst.msk [vmem:[%s194 + $0x1f8] sm:$0xff] %vm2670, %v2533
        %2735 = vst.msk [vmem:[%s194 + $0x200] sm:$0xff] %vm2670, %v2534
        %2736 = vst.msk [vmem:[%s194 + $0x208] sm:$0xff] %vm2670, %v2535
        %2737 = vst.msk [vmem:[%s194 + $0x210] sm:$0xff] %vm2670, %v2536
        %2738 = vst.msk [vmem:[%s194 + $0x218] sm:$0xff] %vm2670, %v2537
        %2739 = vst.msk [vmem:[%s194 + $0x220] sm:$0xff] %vm2670, %v2538
        %2740 = vst.msk [vmem:[%s194 + $0x228] sm:$0xff] %vm2670, %v2539
        %2741 = vst.msk [vmem:[%s194 + $0x230] sm:$0xff] %vm2670, %v2540
        %2742 = vst.msk [vmem:[%s194 + $0x238] sm:$0xff] %vm2670, %v2541
        %2743 = vst.msk [vmem:[%s194 + $0x240] sm:$0xff] %vm2670, %v2542
        %2744 = vst.msk [vmem:[%s194 + $0x248] sm:$0xff] %vm2670, %v2543
        %2745 = vst.msk [vmem:[%s194 + $0x250] sm:$0xff] %vm2670, %v2544
        %2746 = vst.msk [vmem:[%s194 + $0x258] sm:$0xff] %vm2670, %v2545
        %2747 = vst.msk [vmem:[%s194 + $0x260] sm:$0xff] %vm2670, %v2546
        %2748 = vst.msk [vmem:[%s194 + $0x268] sm:$0xff] %vm2670, %v2547
        %2749 = vst.msk [vmem:[%s194 + $0x270] sm:$0xff] %vm2670, %v2548
        %2750 = vst.msk [vmem:[%s194 + $0x278] sm:$0xff] %vm2670, %v2549
        %2751 = vst.msk [vmem:[%s194 + $0x280] sm:$0xff] %vm2670, %v2550
        %2752 = vst.msk [vmem:[%s194 + $0x288] sm:$0xff] %vm2670, %v2551
        %2753 = vst.msk [vmem:[%s194 + $0x290] sm:$0xff] %vm2670, %v2552
        %2754 = vst.msk [vmem:[%s194 + $0x298] sm:$0xff] %vm2670, %v2553
        %2755 = vst.msk [vmem:[%s194 + $0x2a0] sm:$0xff] %vm2670, %v2554
        %2756 = vst.msk [vmem:[%s194 + $0x2a8] sm:$0xff] %vm2670, %v2555
        %2757 = vst.msk [vmem:[%s194 + $0x2b0] sm:$0xff] %vm2670, %v2556
        %2758 = vst.msk [vmem:[%s194 + $0x2b8] sm:$0xff] %vm2670, %v2557
        %2759 = vst.msk [vmem:[%s194 + $0x2c0] sm:$0xff] %vm2670, %v2558
        %2760 = vst.msk [vmem:[%s194 + $0x2c8] sm:$0xff] %vm2670, %v2559
        %2761 = vst.msk [vmem:[%s194 + $0x2d0] sm:$0xff] %vm2670, %v2560
        %2762 = vst.msk [vmem:[%s194 + $0x2d8] sm:$0xff] %vm2670, %v2561
        %2763 = vst.msk [vmem:[%s194 + $0x2e0] sm:$0xff] %vm2670, %v2562
        %2764 = vst.msk [vmem:[%s194 + $0x2e8] sm:$0xff] %vm2670, %v2563
        %2765 = vst.msk [vmem:[%s194 + $0x2f0] sm:$0xff] %vm2670, %v2564
        %2766 = vst.msk [vmem:[%s194 + $0x2f8] sm:$0xff] %vm2670, %v2565
        %2767 = vst.msk [vmem:[%s194 + $0x300] sm:$0xff] %vm2670, %v2566
        %2768 = vst.msk [vmem:[%s194 + $0x308] sm:$0xff] %vm2670, %v2567
        %2769 = vst.msk [vmem:[%s194 + $0x310] sm:$0xff] %vm2670, %v2568
        %2770 = vst.msk [vmem:[%s194 + $0x318] sm:$0xff] %vm2670, %v2569
        %2771 = vst.msk [vmem:[%s194 + $0x320] sm:$0xff] %vm2670, %v2570
        %2772 = vst.msk [vmem:[%s194 + $0x328] sm:$0xff] %vm2670, %v2571
        %2773 = vst.msk [vmem:[%s194 + $0x330] sm:$0xff] %vm2670, %v2572
        %2774 = vst.msk [vmem:[%s194 + $0x338] sm:$0xff] %vm2670, %v2573
        %2775 = vst.msk [vmem:[%s194 + $0x340] sm:$0xff] %vm2670, %v2574
        %2776 = vst.msk [vmem:[%s194 + $0x348] sm:$0xff] %vm2670, %v2575
        %2777 = vst.msk [vmem:[%s194 + $0x350] sm:$0xff] %vm2670, %v2576
        %2778 = vst.msk [vmem:[%s194 + $0x358] sm:$0xff] %vm2670, %v2577
        %2779 = vst.msk [vmem:[%s194 + $0x360] sm:$0xff] %vm2670, %v2578
        %2780 = vst.msk [vmem:[%s194 + $0x368] sm:$0xff] %vm2670, %v2579
        %2781 = vst.msk [vmem:[%s194 + $0x370] sm:$0xff] %vm2670, %v2580
        %2782 = vst.msk [vmem:[%s194 + $0x378] sm:$0xff] %vm2670, %v2581
        %2783 = vst.msk [vmem:[%s194 + $0x380] sm:$0xff] %vm2670, %v2582
        %2784 = vst.msk [vmem:[%s194 + $0x388] sm:$0xff] %vm2670, %v2583
        %2785 = vst.msk [vmem:[%s194 + $0x390] sm:$0xff] %vm2670, %v2584
        %2786 = vst.msk [vmem:[%s194 + $0x398] sm:$0xff] %vm2670, %v2585
        %2787 = vst.msk [vmem:[%s194 + $0x3a0] sm:$0xff] %vm2670, %v2586
        %2788 = vst.msk [vmem:[%s194 + $0x3a8] sm:$0xff] %vm2670, %v2587
        %2789 = vst.msk [vmem:[%s194 + $0x3b0] sm:$0xff] %vm2670, %v2588
        %2790 = vst.msk [vmem:[%s194 + $0x3b8] sm:$0xff] %vm2670, %v2589
        %2791 = vst.msk [vmem:[%s194 + $0x3c0] sm:$0xff] %vm2670, %v2590
        %2792 = vst.msk [vmem:[%s194 + $0x3c8] sm:$0xff] %vm2670, %v2591
        %2793 = vst.msk [vmem:[%s194 + $0x3d0] sm:$0xff] %vm2670, %v2592
        %2794 = vst.msk [vmem:[%s194 + $0x3d8] sm:$0xff] %vm2670, %v2593
        %2795 = vst.msk [vmem:[%s194 + $0x3e0] sm:$0xff] %vm2670, %v2594
        %2796 = vst.msk [vmem:[%s194 + $0x3e8] sm:$0xff] %vm2670, %v2595
        %2797 = vst.msk [vmem:[%s194 + $0x3f0] sm:$0xff] %vm2670, %v2596
        %2798 = vst.msk [vmem:[%s194 + $0x3f8] sm:$0xff] %vm2670, %v2597
        %2799 = vst.msk [vmem:[%s194 + $0x400] sm:$0xff] %vm2670, %v2598
        %2800 = vst.msk [vmem:[%s194 + $0x408] sm:$0xff] %vm2670, %v2599
        %2801 = vst.msk [vmem:[%s194 + $0x410] sm:$0xff] %vm2670, %v2600
        %2802 = vst.msk [vmem:[%s194 + $0x418] sm:$0xff] %vm2670, %v2601
        %2803 = vst.msk [vmem:[%s194 + $0x420] sm:$0xff] %vm2670, %v2602
        %2804 = vst.msk [vmem:[%s194 + $0x428] sm:$0xff] %vm2670, %v2603
        %2805 = vst.msk [vmem:[%s194 + $0x430] sm:$0xff] %vm2670, %v2604
        %2806 = vst.msk [vmem:[%s194 + $0x438] sm:$0xff] %vm2670, %v2605
        %2807 = vst.msk [vmem:[%s194 + $0x440] sm:$0xff] %vm2670, %v2606
        %2808 = vst.msk [vmem:[%s194 + $0x448] sm:$0xff] %vm2670, %v2607
        %2809 = vst.msk [vmem:[%s194 + $0x450] sm:$0xff] %vm2670, %v2608
        %2810 = vst.msk [vmem:[%s194 + $0x458] sm:$0xff] %vm2670, %v2609
        %2811 = vst.msk [vmem:[%s194 + $0x460] sm:$0xff] %vm2670, %v2610
        %2812 = vst.msk [vmem:[%s194 + $0x468] sm:$0xff] %vm2670, %v2611
        %2813 = vst.msk [vmem:[%s194 + $0x470] sm:$0xff] %vm2670, %v2612
        %2814 = vst.msk [vmem:[%s194 + $0x478] sm:$0xff] %vm2670, %v2613
        %2815 = vst.msk [vmem:[%s194 + $0x480] sm:$0xff] %vm2670, %v2614
        %2816 = vst.msk [vmem:[%s194 + $0x488] sm:$0xff] %vm2670, %v2615
        %2817 = vst.msk [vmem:[%s194 + $0x490] sm:$0xff] %vm2670, %v2616
        %2818 = vst.msk [vmem:[%s194 + $0x498] sm:$0xff] %vm2670, %v2617
        %2819 = vst.msk [vmem:[%s194 + $0x4a0] sm:$0xff] %vm2670, %v2618
        %2820 = vst.msk [vmem:[%s194 + $0x4a8] sm:$0xff] %vm2670, %v2619
        %2821 = vst.msk [vmem:[%s194 + $0x4b0] sm:$0xff] %vm2670, %v2620
        %2822 = vst.msk [vmem:[%s194 + $0x4b8] sm:$0xff] %vm2670, %v2621
        %2823 = vst.msk [vmem:[%s194 + $0x4c0] sm:$0xff] %vm2670, %v2622
        %2824 = vst.msk [vmem:[%s194 + $0x4c8] sm:$0xff] %vm2670, %v2623
        %2825 = vst.msk [vmem:[%s194 + $0x4d0] sm:$0xff] %vm2670, %v2624
        %2826 = vst.msk [vmem:[%s194 + $0x4d8] sm:$0xff] %vm2670, %v2625
        %2827 = vst.msk [vmem:[%s194 + $0x4e0] sm:$0xff] %vm2670, %v2626
        %2828 = vst.msk [vmem:[%s194 + $0x4e8] sm:$0xff] %vm2670, %v2627
        %2829 = vst.msk [vmem:[%s194 + $0x4f0] sm:$0xff] %vm2670, %v2628
        %2830 = vst.msk [vmem:[%s194 + $0x4f8] sm:$0xff] %vm2670, %v2629
        %2831 = vst.msk [vmem:[%s194 + $0x500] sm:$0xff] %vm2670, %v2630
        %2832 = vst.msk [vmem:[%s194 + $0x508] sm:$0xff] %vm2670, %v2631
        %2833 = vst.msk [vmem:[%s194 + $0x510] sm:$0xff] %vm2670, %v2632
        %2834 = vst.msk [vmem:[%s194 + $0x518] sm:$0xff] %vm2670, %v2633
        %2835 = vst.msk [vmem:[%s194 + $0x520] sm:$0xff] %vm2670, %v2634
        %2836 = vst.msk [vmem:[%s194 + $0x528] sm:$0xff] %vm2670, %v2635
        %2837 = vst.msk [vmem:[%s194 + $0x530] sm:$0xff] %vm2670, %v2636
        %2838 = vst.msk [vmem:[%s194 + $0x538] sm:$0xff] %vm2670, %v2637
        %2839 = vst.msk [vmem:[%s194 + $0x540] sm:$0xff] %vm2670, %v2638
        %2840 = vst.msk [vmem:[%s194 + $0x548] sm:$0xff] %vm2670, %v2639
        %2841 = vst.msk [vmem:[%s194 + $0x550] sm:$0xff] %vm2670, %v2640
        %2842 = vst.msk [vmem:[%s194 + $0x558] sm:$0xff] %vm2670, %v2641
        %2843 = vst.msk [vmem:[%s194 + $0x560] sm:$0xff] %vm2670, %v2642
        %2844 = vst.msk [vmem:[%s194 + $0x568] sm:$0xff] %vm2670, %v2643
        %2845 = vst.msk [vmem:[%s194 + $0x570] sm:$0xff] %vm2670, %v2644
        %2846 = vst.msk [vmem:[%s194 + $0x578] sm:$0xff] %vm2670, %v2645
        %2847 = vst.msk [vmem:[%s194 + $0x580] sm:$0xff] %vm2670, %v2646
        %2848 = vst.msk [vmem:[%s194 + $0x588] sm:$0xff] %vm2670, %v2647
        %2849 = vst.msk [vmem:[%s194 + $0x590] sm:$0xff] %vm2670, %v2648
        %2850 = vst.msk [vmem:[%s194 + $0x598] sm:$0xff] %vm2670, %v2649
        %2851 = vst.msk [vmem:[%s194 + $0x5a0] sm:$0xff] %vm2670, %v2650
        %2852 = vst.msk [vmem:[%s194 + $0x5a8] sm:$0xff] %vm2670, %v2651
        %2853 = vst.msk [vmem:[%s194 + $0x5b0] sm:$0xff] %vm2670, %v2652
        %2854 = vst.msk [vmem:[%s194 + $0x5b8] sm:$0xff] %vm2670, %v2653
        %2855 = vst.msk [vmem:[%s194 + $0x5c0] sm:$0xff] %vm2670, %v2654
        %2856 = vst.msk [vmem:[%s194 + $0x5c8] sm:$0xff] %vm2670, %v2655
        %2857 = vst.msk [vmem:[%s194 + $0x5d0] sm:$0xff] %vm2670, %v2656
        %2858 = vst.msk [vmem:[%s194 + $0x5d8] sm:$0xff] %vm2670, %v2657
        %2859 = vst.msk [vmem:[%s194 + $0x5e0] sm:$0xff] %vm2670, %v2658
        %2860 = vst.msk [vmem:[%s194 + $0x5e8] sm:$0xff] %vm2670, %v2659
        %2861 = vst.msk [vmem:[%s194 + $0x5f0] sm:$0xff] %vm2670, %v2660
        %2862 = vst.msk [vmem:[%s194 + $0x5f8] sm:$0xff] %vm2670, %v2661
        %2863 = vst.msk [vmem:[%s194 + $0x600] sm:$0xff] %vm2670, %v2662
        %2864 = vst.msk [vmem:[%s194 + $0x608] sm:$0xff] %vm2670, %v2663
        %2865 = vst.msk [vmem:[%s194 + $0x610] sm:$0xff] %vm2670, %v2664
        %2866 = vst.msk [vmem:[%s194 + $0x618] sm:$0xff] %vm2670, %v2665
        %2867 = vst.msk [vmem:[%s194 + $0x620] sm:$0xff] %vm2670, %v2666
        %2868 = vst.msk [vmem:[%s194 + $0x628] sm:$0xff] %vm2670, %v2667
        %2869 = vst.msk [vmem:[%s194 + $0x630] sm:$0xff] %vm2670, %v2668
        %2870 = vst.msk [vmem:[%s194 + $0x638] sm:$0xff] %vm2670, %v2669
        %s2871 = smul.u32 200, %s17
        %p2872 = scmp.lt.s32.totalorder %s2871, 399
        %s2873 = scalar_select %p2872, %s2871, 399
        %s2874 = smul.addr %s2873, 8
        %s2875 = scalar_lea.vmem %s3, %s2874
        // Predicated region
        $region37: #{model_b_forward.6} parent=31 // pred_check
          %p2876 = pneg %p103
        $region38: #{model_b_forward.6} parent=31 // pred_check_branch
          %2878 = sbr.rel (%p2876) target = $region40
        $region39: #{model_b_forward.6} parent=31 // pred_region
          %s2879 = smul.u32 200, %s17
        $region40: #{model_b_forward.6} parent=31 // pred_fallthru
          _
      $region32: #{model_b_forward.6} parent=5 // pred_fallthru
        _
      %p2880 = scmp.le.s32.totalorder 2, %s12
      // Predicated region
      $region41: #{model_b_forward.6} parent=5 // pred_check
        %p2881 = pneg %p2880
      $region42: #{model_b_forward.6} parent=5 // pred_check_branch
        %2883 = sbr.rel (%p2881) target = $region44
      $region43: #{model_b_forward.6} parent=5 // pred_region
        %s2884 = ssub.s32 %s12, 2
        // Predicated region
        $region45: #{model_b_forward.6} parent=43 // pred_check
          %p2885 = pneg %p109
        $region46: #{model_b_forward.6} parent=43 // pred_check_branch
          %2887 = sbr.rel (%p2885) target = $region48
        $region47: #{model_b_forward.6} parent=43 // pred_region
          %s2888 = smul.u32 200, %s18
          %p2889 = scmp.lt.s32.totalorder %s2888, 399
          %s2890 = scalar_select %p2889, %s2888, 399
          %s2891 = smul.addr %s2890, 8
          %s2892 = scalar_lea.vmem %s3, %s2891
        $region48: #{model_b_forward.6} parent=43 // pred_fallthru
          _
      $region44: #{model_b_forward.6} parent=5 // pred_fallthru
        _
    $region6: #{model_b_forward.6} parent=1 // loop_footer
      %s16 = sadd.s32 1, %s12
    $region7: #{model_b_forward.6} parent=1 // loop_footer_branch
      %11 = sbr.rel target = $region3
    $region8: #{model_b_forward.6} parent=1 // loop_exit
      _
    %2893 = vsyncpa [#allocation3], 1
    %s2894 = scalar_lea.sflag [#allocation3], 1
    %2895 = vsyncpa %s2894, 1

// kernel: model_b_forward.8
$region0: #{model_b_forward.8}
  #allocation0 [shape = 'u32[]', space=smem, size = 0x4, offset = 0x4, fixed_abs, tag = 'smem constant byte address 0x4 - core index']
  #allocation1 [shape = 'u32[72,128]{1,0:T(1,128)}', space=vmem, size = 0x9000, scoped, tag = 'internal scratch']
  %s0 = inlined_call_operand.vmem [shape: f32[512,200], index: 0, kind: input, shape index: {}]
  %s1 = inlined_call_operand.vmem [shape: f32[200,8], index: 1, kind: input, shape index: {}]
  %s2 = inlined_call_operand.vmem [shape: f32[1,8], index: 2, kind: input, shape index: {}]
  %s3 = inlined_call_operand.vmem [shape: f32[512,8], index: 3, kind: output, shape index: {}]
  %s4 = sld [smem:[#allocation0]]
  $region22: #{model_b_forward.8} parent=0
    _
  %s6 = ssub.s32 1, %s4
  %s7 = scalar_select 0, %s6, %s4
  // Predicated region
  $region2: #{model_b_forward.8} parent=0 // pred_check
    _
  $region3: #{model_b_forward.8} parent=0 // pred_check_branch
    %9 = sbr.rel (0) target = $region5
  $region4: #{model_b_forward.8} parent=0 // pred_region
    _
  $region5: #{model_b_forward.8} parent=0 // pred_fallthru
    _
  // Predicated region
  $region6: #{model_b_forward.8} parent=0 // pred_check
    _
  $region7: #{model_b_forward.8} parent=0 // pred_check_branch
    %11 = sbr.rel (0) target = $region9
  $region8: #{model_b_forward.8} parent=0 // pred_region
    _
  $region9: #{model_b_forward.8} parent=0 // pred_fallthru
    _
  // Predicated region
  $region10: #{model_b_forward.8} parent=0 // pred_check
    _
  $region11: #{model_b_forward.8} parent=0 // pred_check_branch
    %13 = sbr.rel (0) target = $region13
  $region12: #{model_b_forward.8} parent=0 // pred_region
    _
  $region13: #{model_b_forward.8} parent=0 // pred_fallthru
    _
  %v14 = vld [vmem:[%s0] sm:$0xff]
  %v15 = vld [vmem:[%s0 + $0x8] sm:$0xff]
  %v16 = vld [vmem:[%s0 + $0x10] sm:$0xff]
  %v17 = vld [vmem:[%s0 + $0x18] sm:$0xff]
  %v18 = vld [vmem:[%s0 + $0x20] sm:$0xff]
  %v19 = vld [vmem:[%s0 + $0x28] sm:$0xff]
  %v20 = vld [vmem:[%s0 + $0x30] sm:$0xff]
  %v21 = vld [vmem:[%s0 + $0x38] sm:$0xff]
  %v22 = vld [vmem:[%s0 + $0x40] sm:$0xff]
  %v23 = vld [vmem:[%s0 + $0x48] sm:$0xff]
  %v24 = vld [vmem:[%s0 + $0x50] sm:$0xff]
  %v25 = vld [vmem:[%s0 + $0x58] sm:$0xff]
  %v26 = vld [vmem:[%s0 + $0x60] sm:$0xff]
  %v27 = vld [vmem:[%s0 + $0x68] sm:$0xff]
  %v28 = vld [vmem:[%s0 + $0x70] sm:$0xff]
  %v29 = vld [vmem:[%s0 + $0x78] sm:$0xff]
  %v30 = vld [vmem:[%s0 + $0x80] sm:$0xff]
  %v31 = vld [vmem:[%s0 + $0x88] sm:$0xff]
  %v32 = vld [vmem:[%s0 + $0x90] sm:$0xff]
  %v33 = vld [vmem:[%s0 + $0x98] sm:$0xff]
  %v34 = vld [vmem:[%s0 + $0xa0] sm:$0xff]
  %v35 = vld [vmem:[%s0 + $0xa8] sm:$0xff]
  %v36 = vld [vmem:[%s0 + $0xb0] sm:$0xff]
  %v37 = vld [vmem:[%s0 + $0xb8] sm:$0xff]
  %v38 = vld [vmem:[%s0 + $0xc0] sm:$0xff]
  %v39 = vld [vmem:[%s0 + $0xc8] sm:$0xff]
  %v40 = vld [vmem:[%s0 + $0xd0] sm:$0xff]
  %v41 = vld [vmem:[%s0 + $0xd8] sm:$0xff]
  %v42 = vld [vmem:[%s0 + $0xe0] sm:$0xff]
  %v43 = vld [vmem:[%s0 + $0xe8] sm:$0xff]
  %v44 = vld [vmem:[%s0 + $0xf0] sm:$0xff]
  %v45 = vld [vmem:[%s0 + $0xf8] sm:$0xff]
  %v46 = vld [vmem:[%s0 + $0x100] sm:$0xff]
  %v47 = vld [vmem:[%s0 + $0x108] sm:$0xff]
  %v48 = vld [vmem:[%s0 + $0x110] sm:$0xff]
  %v49 = vld [vmem:[%s0 + $0x118] sm:$0xff]
  %v50 = vld [vmem:[%s0 + $0x120] sm:$0xff]
  %v51 = vld [vmem:[%s0 + $0x128] sm:$0xff]
  %v52 = vld [vmem:[%s0 + $0x130] sm:$0xff]
  %v53 = vld [vmem:[%s0 + $0x138] sm:$0xff]
  %v54 = vld [vmem:[%s0 + $0x140] sm:$0xff]
  %v55 = vld [vmem:[%s0 + $0x148] sm:$0xff]
  %v56 = vld [vmem:[%s0 + $0x150] sm:$0xff]
  %v57 = vld [vmem:[%s0 + $0x158] sm:$0xff]
  %v58 = vld [vmem:[%s0 + $0x160] sm:$0xff]
  %v59 = vld [vmem:[%s0 + $0x168] sm:$0xff]
  %v60 = vld [vmem:[%s0 + $0x170] sm:$0xff]
  %v61 = vld [vmem:[%s0 + $0x178] sm:$0xff]
  %v62 = vld [vmem:[%s0 + $0x180] sm:$0xff]
  %v63 = vld [vmem:[%s0 + $0x188] sm:$0xff]
  %v64 = vld [vmem:[%s0 + $0x190] sm:$0xff]
  %v65 = vld [vmem:[%s0 + $0x198] sm:$0xff]
  %v66 = vld [vmem:[%s0 + $0x1a0] sm:$0xff]
  %v67 = vld [vmem:[%s0 + $0x1a8] sm:$0xff]
  %v68 = vld [vmem:[%s0 + $0x1b0] sm:$0xff]
  %v69 = vld [vmem:[%s0 + $0x1b8] sm:$0xff]
  %v70 = vld [vmem:[%s0 + $0x1c0] sm:$0xff]
  %v71 = vld [vmem:[%s0 + $0x1c8] sm:$0xff]
  %v72 = vld [vmem:[%s0 + $0x1d0] sm:$0xff]
  %v73 = vld [vmem:[%s0 + $0x1d8] sm:$0xff]
  %v74 = vld [vmem:[%s0 + $0x1e0] sm:$0xff]
  %v75 = vld [vmem:[%s0 + $0x1e8] sm:$0xff]
  %v76 = vld [vmem:[%s0 + $0x1f0] sm:$0xff]
  %v77 = vld [vmem:[%s0 + $0x1f8] sm:$0xff]
  %v78 = vld [vmem:[%s0 + $0x200] sm:$0xff]
  %v79 = vld [vmem:[%s0 + $0x208] sm:$0xff]
  %v80 = vld [vmem:[%s0 + $0x210] sm:$0xff]
  %v81 = vld [vmem:[%s0 + $0x218] sm:$0xff]
  %v82 = vld [vmem:[%s0 + $0x220] sm:$0xff]
  %v83 = vld [vmem:[%s0 + $0x228] sm:$0xff]
  %v84 = vld [vmem:[%s0 + $0x230] sm:$0xff]
  %v85 = vld [vmem:[%s0 + $0x238] sm:$0xff]
  %v86 = vld [vmem:[%s0 + $0x240] sm:$0xff]
  %v87 = vld [vmem:[%s0 + $0x248] sm:$0xff]
  %v88 = vld [vmem:[%s0 + $0x250] sm:$0xff]
  %v89 = vld [vmem:[%s0 + $0x258] sm:$0xff]
  %v90 = vld [vmem:[%s0 + $0x260] sm:$0xff]
  %v91 = vld [vmem:[%s0 + $0x268] sm:$0xff]
  %v92 = vld [vmem:[%s0 + $0x270] sm:$0xff]
  %v93 = vld [vmem:[%s0 + $0x278] sm:$0xff]
  %v94 = vld [vmem:[%s0 + $0x280] sm:$0xff]
  %v95 = vld [vmem:[%s0 + $0x288] sm:$0xff]
  %v96 = vld [vmem:[%s0 + $0x290] sm:$0xff]
  %v97 = vld [vmem:[%s0 + $0x298] sm:$0xff]
  %v98 = vld [vmem:[%s0 + $0x2a0] sm:$0xff]
  %v99 = vld [vmem:[%s0 + $0x2a8] sm:$0xff]
  %v100 = vld [vmem:[%s0 + $0x2b0] sm:$0xff]
  %v101 = vld [vmem:[%s0 + $0x2b8] sm:$0xff]
  %v102 = vld [vmem:[%s0 + $0x2c0] sm:$0xff]
  %v103 = vld [vmem:[%s0 + $0x2c8] sm:$0xff]
  %v104 = vld [vmem:[%s0 + $0x2d0] sm:$0xff]
  %v105 = vld [vmem:[%s0 + $0x2d8] sm:$0xff]
  %v106 = vld [vmem:[%s0 + $0x2e0] sm:$0xff]
  %v107 = vld [vmem:[%s0 + $0x2e8] sm:$0xff]
  %v108 = vld [vmem:[%s0 + $0x2f0] sm:$0xff]
  %v109 = vld [vmem:[%s0 + $0x2f8] sm:$0xff]
  %v110 = vld [vmem:[%s0 + $0x300] sm:$0xff]
  %v111 = vld [vmem:[%s0 + $0x308] sm:$0xff]
  %v112 = vld [vmem:[%s0 + $0x310] sm:$0xff]
  %v113 = vld [vmem:[%s0 + $0x318] sm:$0xff]
  %v114 = vld [vmem:[%s0 + $0x320] sm:$0xff]
  %v115 = vld [vmem:[%s0 + $0x328] sm:$0xff]
  %v116 = vld [vmem:[%s0 + $0x330] sm:$0xff]
  %v117 = vld [vmem:[%s0 + $0x338] sm:$0xff]
  %v118 = vld [vmem:[%s0 + $0x340] sm:$0xff]
  %v119 = vld [vmem:[%s0 + $0x348] sm:$0xff]
  %v120 = vld [vmem:[%s0 + $0x350] sm:$0xff]
  %v121 = vld [vmem:[%s0 + $0x358] sm:$0xff]
  %v122 = vld [vmem:[%s0 + $0x360] sm:$0xff]
  %v123 = vld [vmem:[%s0 + $0x368] sm:$0xff]
  %v124 = vld [vmem:[%s0 + $0x370] sm:$0xff]
  %v125 = vld [vmem:[%s0 + $0x378] sm:$0xff]
  %v126 = vld [vmem:[%s0 + $0x380] sm:$0xff]
  %v127 = vld [vmem:[%s0 + $0x388] sm:$0xff]
  %v128 = vld [vmem:[%s0 + $0x390] sm:$0xff]
  %v129 = vld [vmem:[%s0 + $0x398] sm:$0xff]
  %v130 = vld [vmem:[%s0 + $0x3a0] sm:$0xff]
  %v131 = vld [vmem:[%s0 + $0x3a8] sm:$0xff]
  %v132 = vld [vmem:[%s0 + $0x3b0] sm:$0xff]
  %v133 = vld [vmem:[%s0 + $0x3b8] sm:$0xff]
  %v134 = vld [vmem:[%s0 + $0x3c0] sm:$0xff]
  %v135 = vld [vmem:[%s0 + $0x3c8] sm:$0xff]
  %v136 = vld [vmem:[%s0 + $0x3d0] sm:$0xff]
  %v137 = vld [vmem:[%s0 + $0x3d8] sm:$0xff]
  %v138 = vld [vmem:[%s0 + $0x3e0] sm:$0xff]
  %v139 = vld [vmem:[%s0 + $0x3e8] sm:$0xff]
  %v140 = vld [vmem:[%s0 + $0x3f0] sm:$0xff]
  %v141 = vld [vmem:[%s0 + $0x3f8] sm:$0xff]
  %v142 = vld [vmem:[%s1] sm:$0xff]
  %v143 = vld [vmem:[%s1 + $0x8] sm:$0xff]
  %v144 = vld [vmem:[%s1 + $0x10] sm:$0xff]
  %v145 = vld [vmem:[%s1 + $0x18] sm:$0xff]
  %v146 = vld [vmem:[%s1 + $0x20] sm:$0xff]
  %v147 = vld [vmem:[%s1 + $0x28] sm:$0xff]
  %v148 = vld [vmem:[%s1 + $0x30] sm:$0xff]
  %v149 = vld [vmem:[%s1 + $0x38] sm:$0xff]
  %v150 = vld [vmem:[%s1 + $0x40] sm:$0xff]
  %v151 = vld [vmem:[%s1 + $0x48] sm:$0xff]
  %v152 = vld [vmem:[%s1 + $0x50] sm:$0xff]
  %v153 = vld [vmem:[%s1 + $0x58] sm:$0xff]
  %v154 = vld [vmem:[%s1 + $0x60] sm:$0xff]
  %v155 = vld [vmem:[%s1 + $0x68] sm:$0xff]
  %v156 = vld [vmem:[%s1 + $0x70] sm:$0xff]
  %v157 = vld [vmem:[%s1 + $0x78] sm:$0xff]
  %v158 = vld [vmem:[%s1 + $0x80] sm:$0xff]
  %v159 = vld [vmem:[%s1 + $0x88] sm:$0xff]
  %v160 = vld [vmem:[%s1 + $0x90] sm:$0xff]
  %v161 = vld [vmem:[%s1 + $0x98] sm:$0xff]
  %v162 = vld [vmem:[%s1 + $0xa0] sm:$0xff]
  %v163 = vld [vmem:[%s1 + $0xa8] sm:$0xff]
  %v164 = vld [vmem:[%s1 + $0xb0] sm:$0xff]
  %v165 = vld [vmem:[%s1 + $0xb8] sm:$0xff]
  %v166 = vld [vmem:[%s1 + $0xc0] sm:$0xff]
  %v167 = vld [vmem:[%s2] sm:$0x1]
  %v169 = vperm.slane %v167, 0
  %vm171 = vcmask 588800
  %v173 = vsel %vm171, %v15, 0
  %v176 = vsel %vm171, %v17, 0
  %v179 = vsel %vm171, %v19, 0
  %v182 = vsel %vm171, %v21, 0
  %v185 = vsel %vm171, %v23, 0
  %v188 = vsel %vm171, %v25, 0
  %v191 = vsel %vm171, %v27, 0
  %v194 = vsel %vm171, %v29, 0
  %v197 = vsel %vm171, %v31, 0
  %v200 = vsel %vm171, %v33, 0
  %v203 = vsel %vm171, %v35, 0
  %v206 = vsel %vm171, %v37, 0
  %v209 = vsel %vm171, %v39, 0
  %v212 = vsel %vm171, %v41, 0
  %v215 = vsel %vm171, %v43, 0
  %v218 = vsel %vm171, %v45, 0
  %v221 = vsel %vm171, %v47, 0
  %v224 = vsel %vm171, %v49, 0
  %v227 = vsel %vm171, %v51, 0
  %v230 = vsel %vm171, %v53, 0
  %v233 = vsel %vm171, %v55, 0
  %v236 = vsel %vm171, %v57, 0
  %v239 = vsel %vm171, %v59, 0
  %v242 = vsel %vm171, %v61, 0
  %v245 = vsel %vm171, %v63, 0
  %v248 = vsel %vm171, %v65, 0
  %v251 = vsel %vm171, %v67, 0
  %v254 = vsel %vm171, %v69, 0
  %v257 = vsel %vm171, %v71, 0
  %v260 = vsel %vm171, %v73, 0
  %v263 = vsel %vm171, %v75, 0
  %v266 = vsel %vm171, %v77, 0
  %v269 = vsel %vm171, %v79, 0
  %v272 = vsel %vm171, %v81, 0
  %v275 = vsel %vm171, %v83, 0
  %v278 = vsel %vm171, %v85, 0
  %v281 = vsel %vm171, %v87, 0
  %v284 = vsel %vm171, %v89, 0
  %v287 = vsel %vm171, %v91, 0
  %v290 = vsel %vm171, %v93, 0
  %v293 = vsel %vm171, %v95, 0
  %v296 = vsel %vm171, %v97, 0
  %v299 = vsel %vm171, %v99, 0
  %v302 = vsel %vm171, %v101, 0
  %v305 = vsel %vm171, %v103, 0
  %v308 = vsel %vm171, %v105, 0
  %v311 = vsel %vm171, %v107, 0
  %v314 = vsel %vm171, %v109, 0
  %v317 = vsel %vm171, %v111, 0
  %v320 = vsel %vm171, %v113, 0
  %v323 = vsel %vm171, %v115, 0
  %v326 = vsel %vm171, %v117, 0
  %v329 = vsel %vm171, %v119, 0
  %v332 = vsel %vm171, %v121, 0
  %v335 = vsel %vm171, %v123, 0
  %v338 = vsel %vm171, %v125, 0
  %v341 = vsel %vm171, %v127, 0
  %v344 = vsel %vm171, %v129, 0
  %v347 = vsel %vm171, %v131, 0
  %v350 = vsel %vm171, %v133, 0
  %v353 = vsel %vm171, %v135, 0
  %v356 = vsel %vm171, %v137, 0
  %v359 = vsel %vm171, %v139, 0
  %v362 = vsel %vm171, %v141, 0
  %364 = vmatpush.msra.mxu0 %v157
  %365 = vmatpush.msra.mxu0 %v156
  %366 = vmatpush.msra.mxu0 %v155
  %367 = vmatpush.msra.mxu0 %v154
  %368 = vmatpush.msra.mxu0 %v153
  %369 = vmatpush.msra.mxu0 %v152
  %370 = vmatpush.msra.mxu0 %v151
  %371 = vmatpush.msra.mxu0 %v150
  %372 = vmatpush.msra.mxu0 %v149
  %373 = vmatpush.msra.mxu0 %v148
  %374 = vmatpush.msra.mxu0 %v147
  %375 = vmatpush.msra.mxu0 %v146
  %376 = vmatpush.msra.mxu0 %v145
  %377 = vmatpush.msra.mxu0 %v144
  %378 = vmatpush.msra.mxu0 %v143
  %379 = vmatpush.msra.mxu0 %v142
  %380 = vmatmul.f32.gmra.mxu0 %v14
  %v381 = vpop.f32.mrf.mxu0
  %v382 = vadd.f32 %v169, %v381
  %383 = vmatmul.f32.gmra.mxu0 %v16
  %v384 = vpop.f32.mrf.mxu0
  %v385 = vadd.f32 %v169, %v384
  %386 = vmatmul.f32.gmra.mxu0 %v18
  %v387 = vpop.f32.mrf.mxu0
  %v388 = vadd.f32 %v169, %v387
  %389 = vmatmul.f32.gmra.mxu0 %v20
  %v390 = vpop.f32.mrf.mxu0
  %v391 = vadd.f32 %v169, %v390
  %392 = vmatmul.f32.gmra.mxu0 %v22
  %v393 = vpop.f32.mrf.mxu0
  %v394 = vadd.f32 %v169, %v393
  %395 = vmatmul.f32.gmra.mxu0 %v24
  %v396 = vpop.f32.mrf.mxu0
  %v397 = vadd.f32 %v169, %v396
  %398 = vmatmul.f32.gmra.mxu0 %v26
  %v399 = vpop.f32.mrf.mxu0
  %v400 = vadd.f32 %v169, %v399
  %401 = vmatmul.f32.gmra.mxu0 %v28
  %v402 = vpop.f32.mrf.mxu0
  %v403 = vadd.f32 %v169, %v402
  %404 = vmatmul.f32.gmra.mxu0 %v30
  %v405 = vpop.f32.mrf.mxu0
  %v406 = vadd.f32 %v169, %v405
  %407 = vmatmul.f32.gmra.mxu0 %v32
  %v408 = vpop.f32.mrf.mxu0
  %v409 = vadd.f32 %v169, %v408
  %410 = vmatmul.f32.gmra.mxu0 %v34
  %v411 = vpop.f32.mrf.mxu0
  %v412 = vadd.f32 %v169, %v411
  %413 = vmatmul.f32.gmra.mxu0 %v36
  %v414 = vpop.f32.mrf.mxu0
  %v415 = vadd.f32 %v169, %v414
  %416 = vmatmul.f32.gmra.mxu0 %v38
  %v417 = vpop.f32.mrf.mxu0
  %v418 = vadd.f32 %v169, %v417
  %419 = vmatmul.f32.gmra.mxu0 %v40
  %v420 = vpop.f32.mrf.mxu0
  %v421 = vadd.f32 %v169, %v420
  %422 = vmatmul.f32.gmra.mxu0 %v42
  %v423 = vpop.f32.mrf.mxu0
  %v424 = vadd.f32 %v169, %v423
  %425 = vmatmul.f32.gmra.mxu0 %v44
  %v426 = vpop.f32.mrf.mxu0
  %v427 = vadd.f32 %v169, %v426
  %428 = vmatmul.f32.gmra.mxu0 %v46
  %v429 = vpop.f32.mrf.mxu0
  %v430 = vadd.f32 %v169, %v429
  %431 = vmatmul.f32.gmra.mxu0 %v48
  %v432 = vpop.f32.mrf.mxu0
  %v433 = vadd.f32 %v169, %v432
  %434 = vmatmul.f32.gmra.mxu0 %v50
  %v435 = vpop.f32.mrf.mxu0
  %v436 = vadd.f32 %v169, %v435
  %437 = vmatmul.f32.gmra.mxu0 %v52
  %v438 = vpop.f32.mrf.mxu0
  %v439 = vadd.f32 %v169, %v438
  %440 = vmatmul.f32.gmra.mxu0 %v54
  %v441 = vpop.f32.mrf.mxu0
  %v442 = vadd.f32 %v169, %v441
  %443 = vmatmul.f32.gmra.mxu0 %v56
  %v444 = vpop.f32.mrf.mxu0
  %v445 = vadd.f32 %v169, %v444
  %446 = vmatmul.f32.gmra.mxu0 %v58
  %v447 = vpop.f32.mrf.mxu0
  %v448 = vadd.f32 %v169, %v447
  %449 = vmatmul.f32.gmra.mxu0 %v60
  %v450 = vpop.f32.mrf.mxu0
  %v451 = vadd.f32 %v169, %v450
  %452 = vmatmul.f32.gmra.mxu0 %v62
  %v453 = vpop.f32.mrf.mxu0
  %v454 = vadd.f32 %v169, %v453
  %455 = vmatmul.f32.gmra.mxu0 %v64
  %v456 = vpop.f32.mrf.mxu0
  %v457 = vadd.f32 %v169, %v456
  %458 = vmatmul.f32.gmra.mxu0 %v66
  %v459 = vpop.f32.mrf.mxu0
  %v460 = vadd.f32 %v169, %v459
  %461 = vmatmul.f32.gmra.mxu0 %v68
  %v462 = vpop.f32.mrf.mxu0
  %v463 = vadd.f32 %v169, %v462
  %464 = vmatmul.f32.gmra.mxu0 %v70
  %v465 = vpop.f32.mrf.mxu0
  %v466 = vadd.f32 %v169, %v465
  %467 = vmatmul.f32.gmra.mxu0 %v72
  %v468 = vpop.f32.mrf.mxu0
  %v469 = vadd.f32 %v169, %v468
  %470 = vmatmul.f32.gmra.mxu0 %v74
  %v471 = vpop.f32.mrf.mxu0
  %v472 = vadd.f32 %v169, %v471
  %473 = vmatmul.f32.gmra.mxu0 %v76
  %v474 = vpop.f32.mrf.mxu0
  %v475 = vadd.f32 %v169, %v474
  %476 = vmatmul.f32.gmra.mxu0 %v78
  %v477 = vpop.f32.mrf.mxu0
  %v478 = vadd.f32 %v169, %v477
  %479 = vmatmul.f32.gmra.mxu0 %v80
  %v480 = vpop.f32.mrf.mxu0
  %v481 = vadd.f32 %v169, %v480
  %482 = vmatmul.f32.gmra.mxu0 %v82
  %v483 = vpop.f32.mrf.mxu0
  %v484 = vadd.f32 %v169, %v483
  %485 = vmatmul.f32.gmra.mxu0 %v84
  %v486 = vpop.f32.mrf.mxu0
  %v487 = vadd.f32 %v169, %v486
  %488 = vmatmul.f32.gmra.mxu0 %v86
  %v489 = vpop.f32.mrf.mxu0
  %v490 = vadd.f32 %v169, %v489
  %491 = vmatmul.f32.gmra.mxu0 %v88
  %v492 = vpop.f32.mrf.mxu0
  %v493 = vadd.f32 %v169, %v492
  %494 = vmatmul.f32.gmra.mxu0 %v90
  %v495 = vpop.f32.mrf.mxu0
  %v496 = vadd.f32 %v169, %v495
  %497 = vmatmul.f32.gmra.mxu0 %v92
  %v498 = vpop.f32.mrf.mxu0
  %v499 = vadd.f32 %v169, %v498
  %500 = vmatmul.f32.gmra.mxu0 %v94
  %v501 = vpop.f32.mrf.mxu0
  %v502 = vadd.f32 %v169, %v501
  %503 = vmatmul.f32.gmra.mxu0 %v96
  %v504 = vpop.f32.mrf.mxu0
  %v505 = vadd.f32 %v169, %v504
  %506 = vmatmul.f32.gmra.mxu0 %v98
  %v507 = vpop.f32.mrf.mxu0
  %v508 = vadd.f32 %v169, %v507
  %509 = vmatmul.f32.gmra.mxu0 %v100
  %v510 = vpop.f32.mrf.mxu0
  %v511 = vadd.f32 %v169, %v510
  %512 = vmatmul.f32.gmra.mxu0 %v102
  %v513 = vpop.f32.mrf.mxu0
  %v514 = vadd.f32 %v169, %v513
  %515 = vmatmul.f32.gmra.mxu0 %v104
  %v516 = vpop.f32.mrf.mxu0
  %v517 = vadd.f32 %v169, %v516
  %518 = vmatmul.f32.gmra.mxu0 %v106
  %v519 = vpop.f32.mrf.mxu0
  %v520 = vadd.f32 %v169, %v519
  %521 = vmatmul.f32.gmra.mxu0 %v108
  %v522 = vpop.f32.mrf.mxu0
  %v523 = vadd.f32 %v169, %v522
  %524 = vmatmul.f32.gmra.mxu0 %v110
  %v525 = vpop.f32.mrf.mxu0
  %v526 = vadd.f32 %v169, %v525
  %527 = vmatmul.f32.gmra.mxu0 %v112
  %v528 = vpop.f32.mrf.mxu0
  %v529 = vadd.f32 %v169, %v528
  %530 = vmatmul.f32.gmra.mxu0 %v114
  %v531 = vpop.f32.mrf.mxu0
  %v532 = vadd.f32 %v169, %v531
  %533 = vmatmul.f32.gmra.mxu0 %v116
  %v534 = vpop.f32.mrf.mxu0
  %v535 = vadd.f32 %v169, %v534
  %536 = vmatmul.f32.gmra.mxu0 %v118
  %v537 = vpop.f32.mrf.mxu0
  %v538 = vadd.f32 %v169, %v537
  %539 = vmatmul.f32.gmra.mxu0 %v120
  %v540 = vpop.f32.mrf.mxu0
  %v541 = vadd.f32 %v169, %v540
  %542 = vmatmul.f32.gmra.mxu0 %v122
  %v543 = vpop.f32.mrf.mxu0
  %v544 = vadd.f32 %v169, %v543
  %545 = vmatmul.f32.gmra.mxu0 %v124
  %v546 = vpop.f32.mrf.mxu0
  %v547 = vadd.f32 %v169, %v546
  %548 = vmatmul.f32.gmra.mxu0 %v126
  %v549 = vpop.f32.mrf.mxu0
  %v550 = vadd.f32 %v169, %v549
  %551 = vmatmul.f32.gmra.mxu0 %v128
  %v552 = vpop.f32.mrf.mxu0
  %v553 = vadd.f32 %v169, %v552
  %554 = vmatmul.f32.gmra.mxu0 %v130
  %v555 = vpop.f32.mrf.mxu0
  %v556 = vadd.f32 %v169, %v555
  %557 = vmatmul.f32.gmra.mxu0 %v132
  %v558 = vpop.f32.mrf.mxu0
  %v559 = vadd.f32 %v169, %v558
  %560 = vmatmul.f32.gmra.mxu0 %v134
  %v561 = vpop.f32.mrf.mxu0
  %v562 = vadd.f32 %v169, %v561
  %563 = vmatmul.f32.gmra.mxu0 %v136
  %v564 = vpop.f32.mrf.mxu0
  %v565 = vadd.f32 %v169, %v564
  %566 = vmatmul.f32.gmra.mxu0 %v138
  %v567 = vpop.f32.mrf.mxu0
  %v568 = vadd.f32 %v169, %v567
  %569 = vmatmul.f32.gmra.mxu0 %v140
  %v570 = vpop.f32.mrf.mxu0
  %v571 = vadd.f32 %v169, %v570
  %572 = vdwg.mxu0
  %573 = vmatpush.msra.mxu0 0.0
  %574 = vmatpush.msra.mxu0 0.0
  %575 = vmatpush.msra.mxu0 0.0
  %576 = vmatpush.msra.mxu0 0.0
  %577 = vmatpush.msra.mxu0 0.0
  %578 = vmatpush.msra.mxu0 0.0
  %579 = vmatpush.msra.mxu0 0.0
  %580 = vmatpush.msra.mxu0 %v166
  %581 = vmatpush.msra.mxu0 %v165
  %582 = vmatpush.msra.mxu0 %v164
  %583 = vmatpush.msra.mxu0 %v163
  %584 = vmatpush.msra.mxu0 %v162
  %585 = vmatpush.msra.mxu0 %v161
  %586 = vmatpush.msra.mxu0 %v160
  %587 = vmatpush.msra.mxu0 %v159
  %588 = vmatpush.msra.mxu0 %v158
  %589 = vmatmul.f32.gmra.mxu0 %v173
  %v590 = vpop.f32.mrf.mxu0
  %v591 = vadd.f32 %v382, %v590
  %592 = vmatmul.f32.gmra.mxu0 %v176
  %v593 = vpop.f32.mrf.mxu0
  %v594 = vadd.f32 %v385, %v593
  %595 = vmatmul.f32.gmra.mxu0 %v179
  %v596 = vpop.f32.mrf.mxu0
  %v597 = vadd.f32 %v388, %v596
  %598 = vmatmul.f32.gmra.mxu0 %v182
  %v599 = vpop.f32.mrf.mxu0
  %v600 = vadd.f32 %v391, %v599
  %601 = vmatmul.f32.gmra.mxu0 %v185
  %v602 = vpop.f32.mrf.mxu0
  %v603 = vadd.f32 %v394, %v602
  %604 = vmatmul.f32.gmra.mxu0 %v188
  %v605 = vpop.f32.mrf.mxu0
  %v606 = vadd.f32 %v397, %v605
  %607 = vmatmul.f32.gmra.mxu0 %v191
  %v608 = vpop.f32.mrf.mxu0
  %v609 = vadd.f32 %v400, %v608
  %610 = vmatmul.f32.gmra.mxu0 %v194
  %v611 = vpop.f32.mrf.mxu0
  %v612 = vadd.f32 %v403, %v611
  %613 = vmatmul.f32.gmra.mxu0 %v197
  %v614 = vpop.f32.mrf.mxu0
  %v615 = vadd.f32 %v406, %v614
  %616 = vmatmul.f32.gmra.mxu0 %v200
  %v617 = vpop.f32.mrf.mxu0
  %v618 = vadd.f32 %v409, %v617
  %619 = vmatmul.f32.gmra.mxu0 %v203
  %v620 = vpop.f32.mrf.mxu0
  %v621 = vadd.f32 %v412, %v620
  %622 = vmatmul.f32.gmra.mxu0 %v206
  %v623 = vpop.f32.mrf.mxu0
  %v624 = vadd.f32 %v415, %v623
  %625 = vmatmul.f32.gmra.mxu0 %v209
  %v626 = vpop.f32.mrf.mxu0
  %v627 = vadd.f32 %v418, %v626
  %628 = vmatmul.f32.gmra.mxu0 %v212
  %v629 = vpop.f32.mrf.mxu0
  %v630 = vadd.f32 %v421, %v629
  %631 = vmatmul.f32.gmra.mxu0 %v215
  %v632 = vpop.f32.mrf.mxu0
  %v633 = vadd.f32 %v424, %v632
  %634 = vmatmul.f32.gmra.mxu0 %v218
  %v635 = vpop.f32.mrf.mxu0
  %v636 = vadd.f32 %v427, %v635
  %637 = vmatmul.f32.gmra.mxu0 %v221
  %v638 = vpop.f32.mrf.mxu0
  %v639 = vadd.f32 %v430, %v638
  %640 = vmatmul.f32.gmra.mxu0 %v224
  %v641 = vpop.f32.mrf.mxu0
  %v642 = vadd.f32 %v433, %v641
  %643 = vmatmul.f32.gmra.mxu0 %v227
  %v644 = vpop.f32.mrf.mxu0
  %v645 = vadd.f32 %v436, %v644
  %646 = vmatmul.f32.gmra.mxu0 %v230
  %v647 = vpop.f32.mrf.mxu0
  %v648 = vadd.f32 %v439, %v647
  %649 = vmatmul.f32.gmra.mxu0 %v233
  %v650 = vpop.f32.mrf.mxu0
  %v651 = vadd.f32 %v442, %v650
  %652 = vmatmul.f32.gmra.mxu0 %v236
  %v653 = vpop.f32.mrf.mxu0
  %v654 = vadd.f32 %v445, %v653
  %655 = vmatmul.f32.gmra.mxu0 %v239
  %v656 = vpop.f32.mrf.mxu0
  %v657 = vadd.f32 %v448, %v656
  %658 = vmatmul.f32.gmra.mxu0 %v242
  %v659 = vpop.f32.mrf.mxu0
  %v660 = vadd.f32 %v451, %v659
  %661 = vmatmul.f32.gmra.mxu0 %v245
  %v662 = vpop.f32.mrf.mxu0
  %v663 = vadd.f32 %v454, %v662
  %664 = vmatmul.f32.gmra.mxu0 %v248
  %v665 = vpop.f32.mrf.mxu0
  %v666 = vadd.f32 %v457, %v665
  %667 = vmatmul.f32.gmra.mxu0 %v251
  %v668 = vpop.f32.mrf.mxu0
  %v669 = vadd.f32 %v460, %v668
  %670 = vmatmul.f32.gmra.mxu0 %v254
  %v671 = vpop.f32.mrf.mxu0
  %v672 = vadd.f32 %v463, %v671
  %673 = vmatmul.f32.gmra.mxu0 %v257
  %v674 = vpop.f32.mrf.mxu0
  %v675 = vadd.f32 %v466, %v674
  %676 = vmatmul.f32.gmra.mxu0 %v260
  %v677 = vpop.f32.mrf.mxu0
  %v678 = vadd.f32 %v469, %v677
  %679 = vmatmul.f32.gmra.mxu0 %v263
  %v680 = vpop.f32.mrf.mxu0
  %v681 = vadd.f32 %v472, %v680
  %682 = vmatmul.f32.gmra.mxu0 %v266
  %v683 = vpop.f32.mrf.mxu0
  %v684 = vadd.f32 %v475, %v683
  %685 = vmatmul.f32.gmra.mxu0 %v269
  %v686 = vpop.f32.mrf.mxu0
  %v687 = vadd.f32 %v478, %v686
  %688 = vmatmul.f32.gmra.mxu0 %v272
  %v689 = vpop.f32.mrf.mxu0
  %v690 = vadd.f32 %v481, %v689
  %691 = vmatmul.f32.gmra.mxu0 %v275
  %v692 = vpop.f32.mrf.mxu0
  %v693 = vadd.f32 %v484, %v692
  %694 = vmatmul.f32.gmra.mxu0 %v278
  %v695 = vpop.f32.mrf.mxu0
  %v696 = vadd.f32 %v487, %v695
  %697 = vmatmul.f32.gmra.mxu0 %v281
  %v698 = vpop.f32.mrf.mxu0
  %v699 = vadd.f32 %v490, %v698
  %700 = vmatmul.f32.gmra.mxu0 %v284
  %v701 = vpop.f32.mrf.mxu0
  %v702 = vadd.f32 %v493, %v701
  %703 = vmatmul.f32.gmra.mxu0 %v287
  %v704 = vpop.f32.mrf.mxu0
  %v705 = vadd.f32 %v496, %v704
  %706 = vmatmul.f32.gmra.mxu0 %v290
  %v707 = vpop.f32.mrf.mxu0
  %v708 = vadd.f32 %v499, %v707
  %709 = vmatmul.f32.gmra.mxu0 %v293
  %v710 = vpop.f32.mrf.mxu0
  %v711 = vadd.f32 %v502, %v710
  %712 = vmatmul.f32.gmra.mxu0 %v296
  %v713 = vpop.f32.mrf.mxu0
  %v714 = vadd.f32 %v505, %v713
  %715 = vmatmul.f32.gmra.mxu0 %v299
  %v716 = vpop.f32.mrf.mxu0
  %v717 = vadd.f32 %v508, %v716
  %718 = vmatmul.f32.gmra.mxu0 %v302
  %v719 = vpop.f32.mrf.mxu0
  %v720 = vadd.f32 %v511, %v719
  %721 = vmatmul.f32.gmra.mxu0 %v305
  %v722 = vpop.f32.mrf.mxu0
  %v723 = vadd.f32 %v514, %v722
  %724 = vmatmul.f32.gmra.mxu0 %v308
  %v725 = vpop.f32.mrf.mxu0
  %v726 = vadd.f32 %v517, %v725
  %727 = vmatmul.f32.gmra.mxu0 %v311
  %v728 = vpop.f32.mrf.mxu0
  %v729 = vadd.f32 %v520, %v728
  %730 = vmatmul.f32.gmra.mxu0 %v314
  %v731 = vpop.f32.mrf.mxu0
  %v732 = vadd.f32 %v523, %v731
  %733 = vmatmul.f32.gmra.mxu0 %v317
  %v734 = vpop.f32.mrf.mxu0
  %v735 = vadd.f32 %v526, %v734
  %736 = vmatmul.f32.gmra.mxu0 %v320
  %v737 = vpop.f32.mrf.mxu0
  %v738 = vadd.f32 %v529, %v737
  %739 = vmatmul.f32.gmra.mxu0 %v323
  %v740 = vpop.f32.mrf.mxu0
  %v741 = vadd.f32 %v532, %v740
  %742 = vmatmul.f32.gmra.mxu0 %v326
  %v743 = vpop.f32.mrf.mxu0
  %v744 = vadd.f32 %v535, %v743
  %745 = vmatmul.f32.gmra.mxu0 %v329
  %v746 = vpop.f32.mrf.mxu0
  %v747 = vadd.f32 %v538, %v746
  %748 = vmatmul.f32.gmra.mxu0 %v332
  %v749 = vpop.f32.mrf.mxu0
  %v750 = vadd.f32 %v541, %v749
  %751 = vmatmul.f32.gmra.mxu0 %v335
  %v752 = vpop.f32.mrf.mxu0
  %v753 = vadd.f32 %v544, %v752
  %754 = vmatmul.f32.gmra.mxu0 %v338
  %v755 = vpop.f32.mrf.mxu0
  %v756 = vadd.f32 %v547, %v755
  %757 = vmatmul.f32.gmra.mxu0 %v341
  %v758 = vpop.f32.mrf.mxu0
  %v759 = vadd.f32 %v550, %v758
  %760 = vmatmul.f32.gmra.mxu0 %v344
  %v761 = vpop.f32.mrf.mxu0
  %v762 = vadd.f32 %v553, %v761
  %763 = vmatmul.f32.gmra.mxu0 %v347
  %v764 = vpop.f32.mrf.mxu0
  %v765 = vadd.f32 %v556, %v764
  %766 = vmatmul.f32.gmra.mxu0 %v350
  %v767 = vpop.f32.mrf.mxu0
  %v768 = vadd.f32 %v559, %v767
  %769 = vmatmul.f32.gmra.mxu0 %v353
  %v770 = vpop.f32.mrf.mxu0
  %v771 = vadd.f32 %v562, %v770
  %772 = vmatmul.f32.gmra.mxu0 %v356
  %v773 = vpop.f32.mrf.mxu0
  %v774 = vadd.f32 %v565, %v773
  %775 = vmatmul.f32.gmra.mxu0 %v359
  %v776 = vpop.f32.mrf.mxu0
  %v777 = vadd.f32 %v568, %v776
  %778 = vmatmul.f32.gmra.mxu0 %v362
  %v779 = vpop.f32.mrf.mxu0
  %v780 = vadd.f32 %v571, %v779
  %781 = vdwg.mxu0
  %v782 = vmax.f32 %v591, 0.0
  %v783 = vmax.f32 %v594, 0.0
  %v784 = vmax.f32 %v597, 0.0
  %v785 = vmax.f32 %v600, 0.0
  %v786 = vmax.f32 %v603, 0.0
  %v787 = vmax.f32 %v606, 0.0
  %v788 = vmax.f32 %v609, 0.0
  %v789 = vmax.f32 %v612, 0.0
  %v790 = vmax.f32 %v615, 0.0
  %v791 = vmax.f32 %v618, 0.0
  %v792 = vmax.f32 %v621, 0.0
  %v793 = vmax.f32 %v624, 0.0
  %v794 = vmax.f32 %v627, 0.0
  %v795 = vmax.f32 %v630, 0.0
  %v796 = vmax.f32 %v633, 0.0
  %v797 = vmax.f32 %v636, 0.0
  %v798 = vmax.f32 %v639, 0.0
  %v799 = vmax.f32 %v642, 0.0
  %v800 = vmax.f32 %v645, 0.0
  %v801 = vmax.f32 %v648, 0.0
  %v802 = vmax.f32 %v651, 0.0
  %v803 = vmax.f32 %v654, 0.0
  %v804 = vmax.f32 %v657, 0.0
  %v805 = vmax.f32 %v660, 0.0
  %v806 = vmax.f32 %v663, 0.0
  %v807 = vmax.f32 %v666, 0.0
  %v808 = vmax.f32 %v669, 0.0
  %v809 = vmax.f32 %v672, 0.0
  %v810 = vmax.f32 %v675, 0.0
  %v811 = vmax.f32 %v678, 0.0
  %v812 = vmax.f32 %v681, 0.0
  %v813 = vmax.f32 %v684, 0.0
  %v814 = vmax.f32 %v687, 0.0
  %v815 = vmax.f32 %v690, 0.0
  %v816 = vmax.f32 %v693, 0.0
  %v817 = vmax.f32 %v696, 0.0
  %v818 = vmax.f32 %v699, 0.0
  %v819 = vmax.f32 %v702, 0.0
  %v820 = vmax.f32 %v705, 0.0
  %v821 = vmax.f32 %v708, 0.0
  %v822 = vmax.f32 %v711, 0.0
  %v823 = vmax.f32 %v714, 0.0
  %v824 = vmax.f32 %v717, 0.0
  %v825 = vmax.f32 %v720, 0.0
  %v826 = vmax.f32 %v723, 0.0
  %v827 = vmax.f32 %v726, 0.0
  %v828 = vmax.f32 %v729, 0.0
  %v829 = vmax.f32 %v732, 0.0
  %v830 = vmax.f32 %v735, 0.0
  %v831 = vmax.f32 %v738, 0.0
  %v832 = vmax.f32 %v741, 0.0
  %v833 = vmax.f32 %v744, 0.0
  %v834 = vmax.f32 %v747, 0.0
  %v835 = vmax.f32 %v750, 0.0
  %v836 = vmax.f32 %v753, 0.0
  %v837 = vmax.f32 %v756, 0.0
  %v838 = vmax.f32 %v759, 0.0
  %v839 = vmax.f32 %v762, 0.0
  %v840 = vmax.f32 %v765, 0.0
  %v841 = vmax.f32 %v768, 0.0
  %v842 = vmax.f32 %v771, 0.0
  %v843 = vmax.f32 %v774, 0.0
  %v844 = vmax.f32 %v777, 0.0
  %v845 = vmax.f32 %v780, 0.0
  %vm846 = vcmask 64512
  %847 = vst.msk [vmem:[%s3] sm:$0xff] %vm846, %v782
  %848 = vst.msk [vmem:[%s3 + $0x8] sm:$0xff] %vm846, %v783
  %849 = vst.msk [vmem:[%s3 + $0x10] sm:$0xff] %vm846, %v784
  %850 = vst.msk [vmem:[%s3 + $0x18] sm:$0xff] %vm846, %v785
  %851 = vst.msk [vmem:[%s3 + $0x20] sm:$0xff] %vm846, %v786
  %852 = vst.msk [vmem:[%s3 + $0x28] sm:$0xff] %vm846, %v787
  %853 = vst.msk [vmem:[%s3 + $0x30] sm:$0xff] %vm846, %v788
  %854 = vst.msk [vmem:[%s3 + $0x38] sm:$0xff] %vm846, %v789
  %855 = vst.msk [vmem:[%s3 + $0x40] sm:$0xff] %vm846, %v790
  %856 = vst.msk [vmem:[%s3 + $0x48] sm:$0xff] %vm846, %v791
  %857 = vst.msk [vmem:[%s3 + $0x50] sm:$0xff] %vm846, %v792
  %858 = vst.msk [vmem:[%s3 + $0x58] sm:$0xff] %vm846, %v793
  %859 = vst.msk [vmem:[%s3 + $0x60] sm:$0xff] %vm846, %v794
  %860 = vst.msk [vmem:[%s3 + $0x68] sm:$0xff] %vm846, %v795
  %861 = vst.msk [vmem:[%s3 + $0x70] sm:$0xff] %vm846, %v796
  %862 = vst.msk [vmem:[%s3 + $0x78] sm:$0xff] %vm846, %v797
  %863 = vst.msk [vmem:[%s3 + $0x80] sm:$0xff] %vm846, %v798
  %864 = vst.msk [vmem:[%s3 + $0x88] sm:$0xff] %vm846, %v799
  %865 = vst.msk [vmem:[%s3 + $0x90] sm:$0xff] %vm846, %v800
  %866 = vst.msk [vmem:[%s3 + $0x98] sm:$0xff] %vm846, %v801
  %867 = vst.msk [vmem:[%s3 + $0xa0] sm:$0xff] %vm846, %v802
  %868 = vst.msk [vmem:[%s3 + $0xa8] sm:$0xff] %vm846, %v803
  %869 = vst.msk [vmem:[%s3 + $0xb0] sm:$0xff] %vm846, %v804
  %870 = vst.msk [vmem:[%s3 + $0xb8] sm:$0xff] %vm846, %v805
  %871 = vst.msk [vmem:[%s3 + $0xc0] sm:$0xff] %vm846, %v806
  %872 = vst.msk [vmem:[%s3 + $0xc8] sm:$0xff] %vm846, %v807
  %873 = vst.msk [vmem:[%s3 + $0xd0] sm:$0xff] %vm846, %v808
  %874 = vst.msk [vmem:[%s3 + $0xd8] sm:$0xff] %vm846, %v809
  %875 = vst.msk [vmem:[%s3 + $0xe0] sm:$0xff] %vm846, %v810
  %876 = vst.msk [vmem:[%s3 + $0xe8] sm:$0xff] %vm846, %v811
  %877 = vst.msk [vmem:[%s3 + $0xf0] sm:$0xff] %vm846, %v812
  %878 = vst.msk [vmem:[%s3 + $0xf8] sm:$0xff] %vm846, %v813
  %879 = vst.msk [vmem:[%s3 + $0x100] sm:$0xff] %vm846, %v814
  %880 = vst.msk [vmem:[%s3 + $0x108] sm:$0xff] %vm846, %v815
  %881 = vst.msk [vmem:[%s3 + $0x110] sm:$0xff] %vm846, %v816
  %882 = vst.msk [vmem:[%s3 + $0x118] sm:$0xff] %vm846, %v817
  %883 = vst.msk [vmem:[%s3 + $0x120] sm:$0xff] %vm846, %v818
  %884 = vst.msk [vmem:[%s3 + $0x128] sm:$0xff] %vm846, %v819
  %885 = vst.msk [vmem:[%s3 + $0x130] sm:$0xff] %vm846, %v820
  %886 = vst.msk [vmem:[%s3 + $0x138] sm:$0xff] %vm846, %v821
  %887 = vst.msk [vmem:[%s3 + $0x140] sm:$0xff] %vm846, %v822
  %888 = vst.msk [vmem:[%s3 + $0x148] sm:$0xff] %vm846, %v823
  %889 = vst.msk [vmem:[%s3 + $0x150] sm:$0xff] %vm846, %v824
  %890 = vst.msk [vmem:[%s3 + $0x158] sm:$0xff] %vm846, %v825
  %891 = vst.msk [vmem:[%s3 + $0x160] sm:$0xff] %vm846, %v826
  %892 = vst.msk [vmem:[%s3 + $0x168] sm:$0xff] %vm846, %v827
  %893 = vst.msk [vmem:[%s3 + $0x170] sm:$0xff] %vm846, %v828
  %894 = vst.msk [vmem:[%s3 + $0x178] sm:$0xff] %vm846, %v829
  %895 = vst.msk [vmem:[%s3 + $0x180] sm:$0xff] %vm846, %v830
  %896 = vst.msk [vmem:[%s3 + $0x188] sm:$0xff] %vm846, %v831
  %897 = vst.msk [vmem:[%s3 + $0x190] sm:$0xff] %vm846, %v832
  %898 = vst.msk [vmem:[%s3 + $0x198] sm:$0xff] %vm846, %v833
  %899 = vst.msk [vmem:[%s3 + $0x1a0] sm:$0xff] %vm846, %v834
  %900 = vst.msk [vmem:[%s3 + $0x1a8] sm:$0xff] %vm846, %v835
  %901 = vst.msk [vmem:[%s3 + $0x1b0] sm:$0xff] %vm846, %v836
  %902 = vst.msk [vmem:[%s3 + $0x1b8] sm:$0xff] %vm846, %v837
  %903 = vst.msk [vmem:[%s3 + $0x1c0] sm:$0xff] %vm846, %v838
  %904 = vst.msk [vmem:[%s3 + $0x1c8] sm:$0xff] %vm846, %v839
  %905 = vst.msk [vmem:[%s3 + $0x1d0] sm:$0xff] %vm846, %v840
  %906 = vst.msk [vmem:[%s3 + $0x1d8] sm:$0xff] %vm846, %v841
  %907 = vst.msk [vmem:[%s3 + $0x1e0] sm:$0xff] %vm846, %v842
  %908 = vst.msk [vmem:[%s3 + $0x1e8] sm:$0xff] %vm846, %v843
  %909 = vst.msk [vmem:[%s3 + $0x1f0] sm:$0xff] %vm846, %v844
  %910 = vst.msk [vmem:[%s3 + $0x1f8] sm:$0xff] %vm846, %v845
  // Predicated region
  $region14: #{model_b_forward.8} parent=0 // pred_check
    _
  $region15: #{model_b_forward.8} parent=0 // pred_check_branch
    %912 = sbr.rel (0) target = $region17
  $region16: #{model_b_forward.8} parent=0 // pred_region
    _
  $region17: #{model_b_forward.8} parent=0 // pred_fallthru
    _
  // Predicated region
  $region18: #{model_b_forward.8} parent=0 // pred_check
    _
  $region19: #{model_b_forward.8} parent=0 // pred_check_branch
    %914 = sbr.rel (0) target = $region21
  $region20: #{model_b_forward.8} parent=0 // pred_region
    _
  $region21: #{model_b_forward.8} parent=0 // pred_fallthru
    _

// kernel: model_b_forward.9
$region0: #{model_b_forward.9}
  #allocation0 [shape = 'u32[]', space=smem, size = 0x4, offset = 0x4, fixed_abs, tag = 'smem constant byte address 0x4 - core index']
  #allocation1 [shape = 'u32[72,128]{1,0:T(1,128)}', space=vmem, size = 0x9000, scoped, tag = 'internal scratch']
  %s0 = inlined_call_operand.vmem [shape: f32[8,128], index: 0, kind: input, shape index: {}]
  %s1 = inlined_call_operand.vmem [shape: f32[8,128], index: 1, kind: input, shape index: {}]
  %s2 = inlined_call_operand.vmem [shape: f32[8,128], index: 2, kind: input, shape index: {}]
  %s3 = inlined_call_operand.vmem [shape: f32[8,128], index: 3, kind: input, shape index: {}]
  %s4 = inlined_call_operand.vmem [shape: f32[8,128], index: 4, kind: output, shape index: {}]
  %s5 = sld [smem:[#allocation0]]
  $region26: #{model_b_forward.9} parent=0
    _
  %s7 = ssub.s32 1, %s5
  %s8 = scalar_select 0, %s7, %s5
  // Predicated region
  $region2: #{model_b_forward.9} parent=0 // pred_check
    _
  $region3: #{model_b_forward.9} parent=0 // pred_check_branch
    %10 = sbr.rel (0) target = $region5
  $region4: #{model_b_forward.9} parent=0 // pred_region
    _
  $region5: #{model_b_forward.9} parent=0 // pred_fallthru
    _
  // Predicated region
  $region6: #{model_b_forward.9} parent=0 // pred_check
    _
  $region7: #{model_b_forward.9} parent=0 // pred_check_branch
    %12 = sbr.rel (0) target = $region9
  $region8: #{model_b_forward.9} parent=0 // pred_region
    _
  $region9: #{model_b_forward.9} parent=0 // pred_fallthru
    _
  // Predicated region
  $region10: #{model_b_forward.9} parent=0 // pred_check
    _
  $region11: #{model_b_forward.9} parent=0 // pred_check_branch
    %14 = sbr.rel (0) target = $region13
  $region12: #{model_b_forward.9} parent=0 // pred_region
    _
  $region13: #{model_b_forward.9} parent=0 // pred_fallthru
    _
  // Predicated region
  $region14: #{model_b_forward.9} parent=0 // pred_check
    _
  $region15: #{model_b_forward.9} parent=0 // pred_check_branch
    %16 = sbr.rel (0) target = $region17
  $region16: #{model_b_forward.9} parent=0 // pred_region
    _
  $region17: #{model_b_forward.9} parent=0 // pred_fallthru
    _
  %v17 = vld [vmem:[%s0] sm:$0xff]
  %v18 = vld [vmem:[%s1] sm:$0xff]
  %v19 = vmax.f32 %v17, %v18
  %v20 = vld [vmem:[%s2] sm:$0xff]
  %v21 = vld [vmem:[%s3] sm:$0xff]
  %v22 = vmax.f32 %v20, %v21
  %v23 = vmax.f32 %v19, %v22
  %24 = vst [vmem:[%s4] sm:$0xff] %v23
  // Predicated region
  $region18: #{model_b_forward.9} parent=0 // pred_check
    _
  $region19: #{model_b_forward.9} parent=0 // pred_check_branch
    %26 = sbr.rel (0) target = $region21
  $region20: #{model_b_forward.9} parent=0 // pred_region
    _
  $region21: #{model_b_forward.9} parent=0 // pred_fallthru
    _
  // Predicated region
  $region22: #{model_b_forward.9} parent=0 // pred_check
    _
  $region23: #{model_b_forward.9} parent=0 // pred_check_branch
    %28 = sbr.rel (0) target = $region25
  $region24: #{model_b_forward.9} parent=0 // pred_region
    _
  $region25: #{model_b_forward.9} parent=0 // pred_fallthru
    _

// kernel: model_b_forward.10
$region0: #{model_b_forward.10}
  #allocation0 [shape = 'u32[]', space=smem, size = 0x4, offset = 0x4, fixed_abs, tag = 'smem constant byte address 0x4 - core index']
  #allocation1 [shape = 'u32[72,128]{1,0:T(1,128)}', space=vmem, size = 0x9000, scoped, tag = 'internal scratch']
  %s0 = inlined_call_operand.vmem [shape: f32[72,72], index: 0, kind: input, shape index: {}]
  %s1 = inlined_call_operand.vmem [shape: f32[72,8], index: 1, kind: input, shape index: {}]
  %s2 = inlined_call_operand.vmem [shape: f32[1,8], index: 2, kind: input, shape index: {}]
  %s3 = inlined_call_operand.vmem [shape: f32[72,8], index: 3, kind: output, shape index: {}]
  %s4 = sld [smem:[#allocation0]]
  $region22: #{model_b_forward.10} parent=0
    _
  %s6 = ssub.s32 1, %s4
  %s7 = scalar_select 0, %s6, %s4
  // Predicated region
  $region2: #{model_b_forward.10} parent=0 // pred_check
    _
  $region3: #{model_b_forward.10} parent=0 // pred_check_branch
    %9 = sbr.rel (0) target = $region5
  $region4: #{model_b_forward.10} parent=0 // pred_region
    _
  $region5: #{model_b_forward.10} parent=0 // pred_fallthru
    _
  // Predicated region
  $region6: #{model_b_forward.10} parent=0 // pred_check
    _
  $region7: #{model_b_forward.10} parent=0 // pred_check_branch
    %11 = sbr.rel (0) target = $region9
  $region8: #{model_b_forward.10} parent=0 // pred_region
    _
  $region9: #{model_b_forward.10} parent=0 // pred_fallthru
    _
  // Predicated region
  $region10: #{model_b_forward.10} parent=0 // pred_check
    _
  $region11: #{model_b_forward.10} parent=0 // pred_check_branch
    %13 = sbr.rel (0) target = $region13
  $region12: #{model_b_forward.10} parent=0 // pred_region
    _
  $region13: #{model_b_forward.10} parent=0 // pred_fallthru
    _
  %v14 = vld [vmem:[%s0] sm:$0xff]
  %v15 = vld [vmem:[%s0 + $0x8] sm:$0xff]
  %v16 = vld [vmem:[%s0 + $0x10] sm:$0xff]
  %v17 = vld [vmem:[%s0 + $0x18] sm:$0xff]
  %v18 = vld [vmem:[%s0 + $0x20] sm:$0xff]
  %v19 = vld [vmem:[%s0 + $0x28] sm:$0xff]
  %v20 = vld [vmem:[%s0 + $0x30] sm:$0xff]
  %v21 = vld [vmem:[%s0 + $0x38] sm:$0xff]
  %v22 = vld [vmem:[%s0 + $0x40] sm:$0xff]
  %v23 = vld [vmem:[%s1] sm:$0xff]
  %v24 = vld [vmem:[%s1 + $0x8] sm:$0xff]
  %v25 = vld [vmem:[%s1 + $0x10] sm:$0xff]
  %v26 = vld [vmem:[%s1 + $0x18] sm:$0xff]
  %v27 = vld [vmem:[%s1 + $0x20] sm:$0xff]
  %v28 = vld [vmem:[%s1 + $0x28] sm:$0xff]
  %v29 = vld [vmem:[%s1 + $0x30] sm:$0xff]
  %v30 = vld [vmem:[%s1 + $0x38] sm:$0xff]
  %v31 = vld [vmem:[%s1 + $0x40] sm:$0xff]
  %v32 = vld [vmem:[%s2] sm:$0x1]
  %v34 = vperm.slane %v32, 0
  %vm36 = vcmask 588800
  %v38 = vsel %vm36, %v14, 0
  %v41 = vsel %vm36, %v15, 0
  %v44 = vsel %vm36, %v16, 0
  %v47 = vsel %vm36, %v17, 0
  %v50 = vsel %vm36, %v18, 0
  %v53 = vsel %vm36, %v19, 0
  %v56 = vsel %vm36, %v20, 0
  %v59 = vsel %vm36, %v21, 0
  %v62 = vsel %vm36, %v22, 0
  %64 = vmatpush.msra.mxu0 0.0
  %65 = vmatpush.msra.mxu0 0.0
  %66 = vmatpush.msra.mxu0 0.0
  %67 = vmatpush.msra.mxu0 0.0
  %68 = vmatpush.msra.mxu0 0.0
  %69 = vmatpush.msra.mxu0 0.0
  %70 = vmatpush.msra.mxu0 0.0
  %71 = vmatpush.msra.mxu0 %v31
  %72 = vmatpush.msra.mxu0 %v30
  %73 = vmatpush.msra.mxu0 %v29
  %74 = vmatpush.msra.mxu0 %v28
  %75 = vmatpush.msra.mxu0 %v27
  %76 = vmatpush.msra.mxu0 %v26
  %77 = vmatpush.msra.mxu0 %v25
  %78 = vmatpush.msra.mxu0 %v24
  %79 = vmatpush.msra.mxu0 %v23
  %80 = vmatmul.f32.gmra.mxu0 %v38
  %v81 = vpop.f32.mrf.mxu0
  %v82 = vadd.f32 %v34, %v81
  %83 = vmatmul.f32.gmra.mxu0 %v41
  %v84 = vpop.f32.mrf.mxu0
  %v85 = vadd.f32 %v34, %v84
  %86 = vmatmul.f32.gmra.mxu0 %v44
  %v87 = vpop.f32.mrf.mxu0
  %v88 = vadd.f32 %v34, %v87
  %89 = vmatmul.f32.gmra.mxu0 %v47
  %v90 = vpop.f32.mrf.mxu0
  %v91 = vadd.f32 %v34, %v90
  %92 = vmatmul.f32.gmra.mxu0 %v50
  %v93 = vpop.f32.mrf.mxu0
  %v94 = vadd.f32 %v34, %v93
  %95 = vmatmul.f32.gmra.mxu0 %v53
  %v96 = vpop.f32.mrf.mxu0
  %v97 = vadd.f32 %v34, %v96
  %98 = vmatmul.f32.gmra.mxu0 %v56
  %v99 = vpop.f32.mrf.mxu0
  %v100 = vadd.f32 %v34, %v99
  %101 = vmatmul.f32.gmra.mxu0 %v59
  %v102 = vpop.f32.mrf.mxu0
  %v103 = vadd.f32 %v34, %v102
  %104 = vmatmul.f32.gmra.mxu0 %v62
  %v105 = vpop.f32.mrf.mxu0
  %v106 = vadd.f32 %v34, %v105
  %107 = vdwg.mxu0
  %v108 = vmax.f32 %v82, 0.0
  %v109 = vmax.f32 %v85, 0.0
  %v110 = vmax.f32 %v88, 0.0
  %v111 = vmax.f32 %v91, 0.0
  %v112 = vmax.f32 %v94, 0.0
  %v113 = vmax.f32 %v97, 0.0
  %v114 = vmax.f32 %v100, 0.0
  %v115 = vmax.f32 %v103, 0.0
  %v116 = vmax.f32 %v106, 0.0
  %vm117 = vcmask 64512
  %118 = vst.msk [vmem:[%s3] sm:$0xff] %vm117, %v108
  %119 = vst.msk [vmem:[%s3 + $0x8] sm:$0xff] %vm117, %v109
  %120 = vst.msk [vmem:[%s3 + $0x10] sm:$0xff] %vm117, %v110
  %121 = vst.msk [vmem:[%s3 + $0x18] sm:$0xff] %vm117, %v111
  %122 = vst.msk [vmem:[%s3 + $0x20] sm:$0xff] %vm117, %v112
  %123 = vst.msk [vmem:[%s3 + $0x28] sm:$0xff] %vm117, %v113
  %124 = vst.msk [vmem:[%s3 + $0x30] sm:$0xff] %vm117, %v114
  %125 = vst.msk [vmem:[%s3 + $0x38] sm:$0xff] %vm117, %v115
  %126 = vst.msk [vmem:[%s3 + $0x40] sm:$0xff] %vm117, %v116
  // Predicated region
  $region14: #{model_b_forward.10} parent=0 // pred_check
    _
  $region15: #{model_b_forward.10} parent=0 // pred_check_branch
    %128 = sbr.rel (0) target = $region17
  $region16: #{model_b_forward.10} parent=0 // pred_region
    _
  $region17: #{model_b_forward.10} parent=0 // pred_fallthru
    _
  // Predicated region
  $region18: #{model_b_forward.10} parent=0 // pred_check
    _
  $region19: #{model_b_forward.10} parent=0 // pred_check_branch
    %130 = sbr.rel (0) target = $region21
  $region20: #{model_b_forward.10} parent=0 // pred_region
    _
  $region21: #{model_b_forward.10} parent=0 // pred_fallthru
    _

// kernel: model_b_forward.11
$region0: #{model_b_forward.11}
  #allocation0 [shape = 'u32[]', space=smem, size = 0x4, offset = 0x4, fixed_abs, tag = 'smem constant byte address 0x4 - core index']
  #allocation1 [shape = 'u32[72,128]{1,0:T(1,128)}', space=vmem, size = 0x9000, scoped, tag = 'internal scratch']
  %s0 = inlined_call_operand.vmem [shape: f32[2,2336], index: 0, kind: input, shape index: {}]
  %s1 = inlined_call_operand.vmem [shape: f32[2336,32], index: 1, kind: input, shape index: {}]
  %s2 = inlined_call_operand.vmem [shape: f32[1,32], index: 2, kind: input, shape index: {}]
  %s3 = inlined_call_operand.vmem [shape: f32[32,24], index: 3, kind: input, shape index: {}]
  %s4 = inlined_call_operand.vmem [shape: f32[1,24], index: 4, kind: input, shape index: {}]
  %s5 = inlined_call_operand.hbm [shape: f32[2,24], index: 5, kind: output, shape index: {}]
  %s6 = sld [smem:[#allocation0]]
  $region30: #{model_b_forward.11} parent=0
    _
  %s8 = ssub.s32 1, %s6
  %s9 = scalar_select 0, %s8, %s6
  $region1: #{model_b_forward.11} parent=0
    #allocation2 [shape = 'u8[1024]{0}', space=vmem, size = 0x400, scoped, tag = 'output window, operand 0, single buffered']
    #allocation3 [shape = 's32[1]{0}', space=sflag, size = 0x4, scoped, tag = 'scoped memory for model_b_forward.11']
    %10 = vsyncpa [#allocation3], 0
    // Predicated region
    $region2: #{model_b_forward.11} parent=1 // pred_check
      _
    $region3: #{model_b_forward.11} parent=1 // pred_check_branch
      %12 = sbr.rel (0) target = $region5
    $region4: #{model_b_forward.11} parent=1 // pred_region
      _
    $region5: #{model_b_forward.11} parent=1 // pred_fallthru
      _
    // Predicated region
    $region6: #{model_b_forward.11} parent=1 // pred_check
      _
    $region7: #{model_b_forward.11} parent=1 // pred_check_branch
      %14 = sbr.rel (0) target = $region9
    $region8: #{model_b_forward.11} parent=1 // pred_region
      _
    $region9: #{model_b_forward.11} parent=1 // pred_fallthru
      _
    // Predicated region
    $region10: #{model_b_forward.11} parent=1 // pred_check
      _
    $region11: #{model_b_forward.11} parent=1 // pred_check_branch
      %16 = sbr.rel (0) target = $region13
    $region12: #{model_b_forward.11} parent=1 // pred_region
      _
    $region13: #{model_b_forward.11} parent=1 // pred_fallthru
      _
    // Predicated region
    $region14: #{model_b_forward.11} parent=1 // pred_check
      _
    $region15: #{model_b_forward.11} parent=1 // pred_check_branch
      %18 = sbr.rel (0) target = $region17
    $region16: #{model_b_forward.11} parent=1 // pred_region
      _
    $region17: #{model_b_forward.11} parent=1 // pred_fallthru
      _
    // Predicated region
    $region18: #{model_b_forward.11} parent=1 // pred_check
      _
    $region19: #{model_b_forward.11} parent=1 // pred_check_branch
      %20 = sbr.rel (0) target = $region21
    $region20: #{model_b_forward.11} parent=1 // pred_region
      _
    $region21: #{model_b_forward.11} parent=1 // pred_fallthru
      _
    %v21 = vld [vmem:[%s0] sm:$0xff]
    %v22 = vld [vmem:[%s0 + $0x8] sm:$0xff]
    %v23 = vld [vmem:[%s0 + $0x10] sm:$0xff]
    %v24 = vld [vmem:[%s0 + $0x18] sm:$0xff]
    %v25 = vld [vmem:[%s0 + $0x20] sm:$0x3f]
    %v26 = vld [vmem:[%s1] sm:$0xff]
    %v27 = vld [vmem:[%s1 + $0x8] sm:$0xff]
    %v28 = vld [vmem:[%s1 + $0x10] sm:$0xff]
    %v29 = vld [vmem:[%s1 + $0x18] sm:$0xff]
    %v30 = vld [vmem:[%s1 + $0x20] sm:$0xff]
    %v31 = vld [vmem:[%s1 + $0x28] sm:$0xff]
    %v32 = vld [vmem:[%s1 + $0x30] sm:$0xff]
    %v33 = vld [vmem:[%s1 + $0x38] sm:$0xff]
    %v34 = vld [vmem:[%s1 + $0x40] sm:$0xff]
    %v35 = vld [vmem:[%s1 + $0x48] sm:$0xff]
    %v36 = vld [vmem:[%s1 + $0x50] sm:$0xff]
    %v37 = vld [vmem:[%s1 + $0x58] sm:$0xff]
    %v38 = vld [vmem:[%s1 + $0x60] sm:$0xff]
    %v39 = vld [vmem:[%s1 + $0x68] sm:$0xff]
    %v40 = vld [vmem:[%s1 + $0x70] sm:$0xff]
    %v41 = vld [vmem:[%s1 + $0x78] sm:$0xff]
    %v42 = vld [vmem:[%s1 + $0x80] sm:$0xff]
    %v43 = vld [vmem:[%s1 + $0x88] sm:$0xff]
    %v44 = vld [vmem:[%s1 + $0x90] sm:$0xff]
    %v45 = vld [vmem:[%s1 + $0x98] sm:$0xff]
    %v46 = vld [vmem:[%s1 + $0xa0] sm:$0xff]
    %v47 = vld [vmem:[%s1 + $0xa8] sm:$0xff]
    %v48 = vld [vmem:[%s1 + $0xb0] sm:$0xff]
    %v49 = vld [vmem:[%s1 + $0xb8] sm:$0xff]
    %v50 = vld [vmem:[%s1 + $0xc0] sm:$0xff]
    %v51 = vld [vmem:[%s1 + $0xc8] sm:$0xff]
    %v52 = vld [vmem:[%s1 + $0xd0] sm:$0xff]
    %v53 = vld [vmem:[%s1 + $0xd8] sm:$0xff]
    %v54 = vld [vmem:[%s1 + $0xe0] sm:$0xff]
    %v55 = vld [vmem:[%s1 + $0xe8] sm:$0xff]
    %v56 = vld [vmem:[%s1 + $0xf0] sm:$0xff]
    %v57 = vld [vmem:[%s1 + $0xf8] sm:$0xff]
    %v58 = vld [vmem:[%s1 + $0x100] sm:$0xff]
    %v59 = vld [vmem:[%s1 + $0x108] sm:$0xff]
    %v60 = vld [vmem:[%s1 + $0x110] sm:$0xff]
    %v61 = vld [vmem:[%s1 + $0x118] sm:$0xff]
    %v62 = vld [vmem:[%s1 + $0x120] sm:$0xff]
    %v63 = vld [vmem:[%s1 + $0x128] sm:$0xff]
    %v64 = vld [vmem:[%s1 + $0x130] sm:$0xff]
    %v65 = vld [vmem:[%s1 + $0x138] sm:$0xff]
    %v66 = vld [vmem:[%s1 + $0x140] sm:$0xff]
    %v67 = vld [vmem:[%s1 + $0x148] sm:$0xff]
    %v68 = vld [vmem:[%s1 + $0x150] sm:$0xff]
    %v69 = vld [vmem:[%s1 + $0x158] sm:$0xff]
    %v70 = vld [vmem:[%s1 + $0x160] sm:$0xff]
    %v71 = vld [vmem:[%s1 + $0x168] sm:$0xff]
    %v72 = vld [vmem:[%s1 + $0x170] sm:$0xff]
    %v73 = vld [vmem:[%s1 + $0x178] sm:$0xff]
    %v74 = vld [vmem:[%s1 + $0x180] sm:$0xff]
    %v75 = vld [vmem:[%s1 + $0x188] sm:$0xff]
    %v76 = vld [vmem:[%s1 + $0x190] sm:$0xff]
    %v77 = vld [vmem:[%s1 + $0x198] sm:$0xff]
    %v78 = vld [vmem:[%s1 + $0x1a0] sm:$0xff]
    %v79 = vld [vmem:[%s1 + $0x1a8] sm:$0xff]
    %v80 = vld [vmem:[%s1 + $0x1b0] sm:$0xff]
    %v81 = vld [vmem:[%s1 + $0x1b8] sm:$0xff]
    %v82 = vld [vmem:[%s1 + $0x1c0] sm:$0xff]
    %v83 = vld [vmem:[%s1 + $0x1c8] sm:$0xff]
    %v84 = vld [vmem:[%s1 + $0x1d0] sm:$0xff]
    %v85 = vld [vmem:[%s1 + $0x1d8] sm:$0xff]
    %v86 = vld [vmem:[%s1 + $0x1e0] sm:$0xff]
    %v87 = vld [vmem:[%s1 + $0x1e8] sm:$0xff]
    %v88 = vld [vmem:[%s1 + $0x1f0] sm:$0xff]
    %v89 = vld [vmem:[%s1 + $0x1f8] sm:$0xff]
    %v90 = vld [vmem:[%s1 + $0x200] sm:$0xff]
    %v91 = vld [vmem:[%s1 + $0x208] sm:$0xff]
    %v92 = vld [vmem:[%s1 + $0x210] sm:$0xff]
    %v93 = vld [vmem:[%s1 + $0x218] sm:$0xff]
    %v94 = vld [vmem:[%s1 + $0x220] sm:$0xff]
    %v95 = vld [vmem:[%s1 + $0x228] sm:$0xff]
    %v96 = vld [vmem:[%s1 + $0x230] sm:$0xff]
    %v97 = vld [vmem:[%s1 + $0x238] sm:$0xff]
    %v98 = vld [vmem:[%s1 + $0x240] sm:$0xff]
    %v99 = vld [vmem:[%s1 + $0x248] sm:$0xff]
    %v100 = vld [vmem:[%s1 + $0x250] sm:$0xff]
    %v101 = vld [vmem:[%s1 + $0x258] sm:$0xff]
    %v102 = vld [vmem:[%s1 + $0x260] sm:$0xff]
    %v103 = vld [vmem:[%s1 + $0x268] sm:$0xff]
    %v104 = vld [vmem:[%s1 + $0x270] sm:$0xff]
    %v105 = vld [vmem:[%s1 + $0x278] sm:$0xff]
    %v106 = vld [vmem:[%s1 + $0x280] sm:$0xff]
    %v107 = vld [vmem:[%s1 + $0x288] sm:$0xff]
    %v108 = vld [vmem:[%s1 + $0x290] sm:$0xff]
    %v109 = vld [vmem:[%s1 + $0x298] sm:$0xff]
    %v110 = vld [vmem:[%s1 + $0x2a0] sm:$0xff]
    %v111 = vld [vmem:[%s1 + $0x2a8] sm:$0xff]
    %v112 = vld [vmem:[%s1 + $0x2b0] sm:$0xff]
    %v113 = vld [vmem:[%s1 + $0x2b8] sm:$0xff]
    %v114 = vld [vmem:[%s1 + $0x2c0] sm:$0xff]
    %v115 = vld [vmem:[%s1 + $0x2c8] sm:$0xff]
    %v116 = vld [vmem:[%s1 + $0x2d0] sm:$0xff]
    %v117 = vld [vmem:[%s1 + $0x2d8] sm:$0xff]
    %v118 = vld [vmem:[%s1 + $0x2e0] sm:$0xff]
    %v119 = vld [vmem:[%s1 + $0x2e8] sm:$0xff]
    %v120 = vld [vmem:[%s1 + $0x2f0] sm:$0xff]
    %v121 = vld [vmem:[%s1 + $0x2f8] sm:$0xff]
    %v122 = vld [vmem:[%s1 + $0x300] sm:$0xff]
    %v123 = vld [vmem:[%s1 + $0x308] sm:$0xff]
    %v124 = vld [vmem:[%s1 + $0x310] sm:$0xff]
    %v125 = vld [vmem:[%s1 + $0x318] sm:$0xff]
    %v126 = vld [vmem:[%s1 + $0x320] sm:$0xff]
    %v127 = vld [vmem:[%s1 + $0x328] sm:$0xff]
    %v128 = vld [vmem:[%s1 + $0x330] sm:$0xff]
    %v129 = vld [vmem:[%s1 + $0x338] sm:$0xff]
    %v130 = vld [vmem:[%s1 + $0x340] sm:$0xff]
    %v131 = vld [vmem:[%s1 + $0x348] sm:$0xff]
    %v132 = vld [vmem:[%s1 + $0x350] sm:$0xff]
    %v133 = vld [vmem:[%s1 + $0x358] sm:$0xff]
    %v134 = vld [vmem:[%s1 + $0x360] sm:$0xff]
    %v135 = vld [vmem:[%s1 + $0x368] sm:$0xff]
    %v136 = vld [vmem:[%s1 + $0x370] sm:$0xff]
    %v137 = vld [vmem:[%s1 + $0x378] sm:$0xff]
    %v138 = vld [vmem:[%s1 + $0x380] sm:$0xff]
    %v139 = vld [vmem:[%s1 + $0x388] sm:$0xff]
    %v140 = vld [vmem:[%s1 + $0x390] sm:$0xff]
    %v141 = vld [vmem:[%s1 + $0x398] sm:$0xff]
    %v142 = vld [vmem:[%s1 + $0x3a0] sm:$0xff]
    %v143 = vld [vmem:[%s1 + $0x3a8] sm:$0xff]
    %v144 = vld [vmem:[%s1 + $0x3b0] sm:$0xff]
    %v145 = vld [vmem:[%s1 + $0x3b8] sm:$0xff]
    %v146 = vld [vmem:[%s1 + $0x3c0] sm:$0xff]
    %v147 = vld [vmem:[%s1 + $0x3c8] sm:$0xff]
    %v148 = vld [vmem:[%s1 + $0x3d0] sm:$0xff]
    %v149 = vld [vmem:[%s1 + $0x3d8] sm:$0xff]
    %v150 = vld [vmem:[%s1 + $0x3e0] sm:$0xff]
    %v151 = vld [vmem:[%s1 + $0x3e8] sm:$0xff]
    %v152 = vld [vmem:[%s1 + $0x3f0] sm:$0xff]
    %v153 = vld [vmem:[%s1 + $0x3f8] sm:$0xff]
    %v154 = vld [vmem:[%s1 + $0x400] sm:$0xff]
    %v155 = vld [vmem:[%s1 + $0x408] sm:$0xff]
    %v156 = vld [vmem:[%s1 + $0x410] sm:$0xff]
    %v157 = vld [vmem:[%s1 + $0x418] sm:$0xff]
    %v158 = vld [vmem:[%s1 + $0x420] sm:$0xff]
    %v159 = vld [vmem:[%s1 + $0x428] sm:$0xff]
    %v160 = vld [vmem:[%s1 + $0x430] sm:$0xff]
    %v161 = vld [vmem:[%s1 + $0x438] sm:$0xff]
    %v162 = vld [vmem:[%s1 + $0x440] sm:$0xff]
    %v163 = vld [vmem:[%s1 + $0x448] sm:$0xff]
    %v164 = vld [vmem:[%s1 + $0x450] sm:$0xff]
    %v165 = vld [vmem:[%s1 + $0x458] sm:$0xff]
    %v166 = vld [vmem:[%s1 + $0x460] sm:$0xff]
    %v167 = vld [vmem:[%s1 + $0x468] sm:$0xff]
    %v168 = vld [vmem:[%s1 + $0x470] sm:$0xff]
    %v169 = vld [vmem:[%s1 + $0x478] sm:$0xff]
    %v170 = vld [vmem:[%s1 + $0x480] sm:$0xff]
    %v171 = vld [vmem:[%s1 + $0x488] sm:$0xff]
    %v172 = vld [vmem:[%s1 + $0x490] sm:$0xff]
    %v173 = vld [vmem:[%s1 + $0x498] sm:$0xff]
    %v174 = vld [vmem:[%s1 + $0x4a0] sm:$0xff]
    %v175 = vld [vmem:[%s1 + $0x4a8] sm:$0xff]
    %v176 = vld [vmem:[%s1 + $0x4b0] sm:$0xff]
    %v177 = vld [vmem:[%s1 + $0x4b8] sm:$0xff]
    %v178 = vld [vmem:[%s1 + $0x4c0] sm:$0xff]
    %v179 = vld [vmem:[%s1 + $0x4c8] sm:$0xff]
    %v180 = vld [vmem:[%s1 + $0x4d0] sm:$0xff]
    %v181 = vld [vmem:[%s1 + $0x4d8] sm:$0xff]
    %v182 = vld [vmem:[%s1 + $0x4e0] sm:$0xff]
    %v183 = vld [vmem:[%s1 + $0x4e8] sm:$0xff]
    %v184 = vld [vmem:[%s1 + $0x4f0] sm:$0xff]
    %v185 = vld [vmem:[%s1 + $0x4f8] sm:$0xff]
    %v186 = vld [vmem:[%s1 + $0x500] sm:$0xff]
    %v187 = vld [vmem:[%s1 + $0x508] sm:$0xff]
    %v188 = vld [vmem:[%s1 + $0x510] sm:$0xff]
    %v189 = vld [vmem:[%s1 + $0x518] sm:$0xff]
    %v190 = vld [vmem:[%s1 + $0x520] sm:$0xff]
    %v191 = vld [vmem:[%s1 + $0x528] sm:$0xff]
    %v192 = vld [vmem:[%s1 + $0x530] sm:$0xff]
    %v193 = vld [vmem:[%s1 + $0x538] sm:$0xff]
    %v194 = vld [vmem:[%s1 + $0x540] sm:$0xff]
    %v195 = vld [vmem:[%s1 + $0x548] sm:$0xff]
    %v196 = vld [vmem:[%s1 + $0x550] sm:$0xff]
    %v197 = vld [vmem:[%s1 + $0x558] sm:$0xff]
    %v198 = vld [vmem:[%s1 + $0x560] sm:$0xff]
    %v199 = vld [vmem:[%s1 + $0x568] sm:$0xff]
    %v200 = vld [vmem:[%s1 + $0x570] sm:$0xff]
    %v201 = vld [vmem:[%s1 + $0x578] sm:$0xff]
    %v202 = vld [vmem:[%s1 + $0x580] sm:$0xff]
    %v203 = vld [vmem:[%s1 + $0x588] sm:$0xff]
    %v204 = vld [vmem:[%s1 + $0x590] sm:$0xff]
    %v205 = vld [vmem:[%s1 + $0x598] sm:$0xff]
    %v206 = vld [vmem:[%s1 + $0x5a0] sm:$0xff]
    %v207 = vld [vmem:[%s1 + $0x5a8] sm:$0xff]
    %v208 = vld [vmem:[%s1 + $0x5b0] sm:$0xff]
    %v209 = vld [vmem:[%s1 + $0x5b8] sm:$0xff]
    %v210 = vld [vmem:[%s1 + $0x5c0] sm:$0xff]
    %v211 = vld [vmem:[%s1 + $0x5c8] sm:$0xff]
    %v212 = vld [vmem:[%s1 + $0x5d0] sm:$0xff]
    %v213 = vld [vmem:[%s1 + $0x5d8] sm:$0xff]
    %v214 = vld [vmem:[%s1 + $0x5e0] sm:$0xff]
    %v215 = vld [vmem:[%s1 + $0x5e8] sm:$0xff]
    %v216 = vld [vmem:[%s1 + $0x5f0] sm:$0xff]
    %v217 = vld [vmem:[%s1 + $0x5f8] sm:$0xff]
    %v218 = vld [vmem:[%s1 + $0x600] sm:$0xff]
    %v219 = vld [vmem:[%s1 + $0x608] sm:$0xff]
    %v220 = vld [vmem:[%s1 + $0x610] sm:$0xff]
    %v221 = vld [vmem:[%s1 + $0x618] sm:$0xff]
    %v222 = vld [vmem:[%s1 + $0x620] sm:$0xff]
    %v223 = vld [vmem:[%s1 + $0x628] sm:$0xff]
    %v224 = vld [vmem:[%s1 + $0x630] sm:$0xff]
    %v225 = vld [vmem:[%s1 + $0x638] sm:$0xff]
    %v226 = vld [vmem:[%s1 + $0x640] sm:$0xff]
    %v227 = vld [vmem:[%s1 + $0x648] sm:$0xff]
    %v228 = vld [vmem:[%s1 + $0x650] sm:$0xff]
    %v229 = vld [vmem:[%s1 + $0x658] sm:$0xff]
    %v230 = vld [vmem:[%s1 + $0x660] sm:$0xff]
    %v231 = vld [vmem:[%s1 + $0x668] sm:$0xff]
    %v232 = vld [vmem:[%s1 + $0x670] sm:$0xff]
    %v233 = vld [vmem:[%s1 + $0x678] sm:$0xff]
    %v234 = vld [vmem:[%s1 + $0x680] sm:$0xff]
    %v235 = vld [vmem:[%s1 + $0x688] sm:$0xff]
    %v236 = vld [vmem:[%s1 + $0x690] sm:$0xff]
    %v237 = vld [vmem:[%s1 + $0x698] sm:$0xff]
    %v238 = vld [vmem:[%s1 + $0x6a0] sm:$0xff]
    %v239 = vld [vmem:[%s1 + $0x6a8] sm:$0xff]
    %v240 = vld [vmem:[%s1 + $0x6b0] sm:$0xff]
    %v241 = vld [vmem:[%s1 + $0x6b8] sm:$0xff]
    %v242 = vld [vmem:[%s1 + $0x6c0] sm:$0xff]
    %v243 = vld [vmem:[%s1 + $0x6c8] sm:$0xff]
    %v244 = vld [vmem:[%s1 + $0x6d0] sm:$0xff]
    %v245 = vld [vmem:[%s1 + $0x6d8] sm:$0xff]
    %v246 = vld [vmem:[%s1 + $0x6e0] sm:$0xff]
    %v247 = vld [vmem:[%s1 + $0x6e8] sm:$0xff]
    %v248 = vld [vmem:[%s1 + $0x6f0] sm:$0xff]
    %v249 = vld [vmem:[%s1 + $0x6f8] sm:$0xff]
    %v250 = vld [vmem:[%s1 + $0x700] sm:$0xff]
    %v251 = vld [vmem:[%s1 + $0x708] sm:$0xff]
    %v252 = vld [vmem:[%s1 + $0x710] sm:$0xff]
    %v253 = vld [vmem:[%s1 + $0x718] sm:$0xff]
    %v254 = vld [vmem:[%s1 + $0x720] sm:$0xff]
    %v255 = vld [vmem:[%s1 + $0x728] sm:$0xff]
    %v256 = vld [vmem:[%s1 + $0x730] sm:$0xff]
    %v257 = vld [vmem:[%s1 + $0x738] sm:$0xff]
    %v258 = vld [vmem:[%s1 + $0x740] sm:$0xff]
    %v259 = vld [vmem:[%s1 + $0x748] sm:$0xff]
    %v260 = vld [vmem:[%s1 + $0x750] sm:$0xff]
    %v261 = vld [vmem:[%s1 + $0x758] sm:$0xff]
    %v262 = vld [vmem:[%s1 + $0x760] sm:$0xff]
    %v263 = vld [vmem:[%s1 + $0x768] sm:$0xff]
    %v264 = vld [vmem:[%s1 + $0x770] sm:$0xff]
    %v265 = vld [vmem:[%s1 + $0x778] sm:$0xff]
    %v266 = vld [vmem:[%s1 + $0x780] sm:$0xff]
    %v267 = vld [vmem:[%s1 + $0x788] sm:$0xff]
    %v268 = vld [vmem:[%s1 + $0x790] sm:$0xff]
    %v269 = vld [vmem:[%s1 + $0x798] sm:$0xff]
    %v270 = vld [vmem:[%s1 + $0x7a0] sm:$0xff]
    %v271 = vld [vmem:[%s1 + $0x7a8] sm:$0xff]
    %v272 = vld [vmem:[%s1 + $0x7b0] sm:$0xff]
    %v273 = vld [vmem:[%s1 + $0x7b8] sm:$0xff]
    %v274 = vld [vmem:[%s1 + $0x7c0] sm:$0xff]
    %v275 = vld [vmem:[%s1 + $0x7c8] sm:$0xff]
    %v276 = vld [vmem:[%s1 + $0x7d0] sm:$0xff]
    %v277 = vld [vmem:[%s1 + $0x7d8] sm:$0xff]
    %v278 = vld [vmem:[%s1 + $0x7e0] sm:$0xff]
    %v279 = vld [vmem:[%s1 + $0x7e8] sm:$0xff]
    %v280 = vld [vmem:[%s1 + $0x7f0] sm:$0xff]
    %v281 = vld [vmem:[%s1 + $0x7f8] sm:$0xff]
    %v282 = vld [vmem:[%s1 + $0x800] sm:$0xff]
    %v283 = vld [vmem:[%s1 + $0x808] sm:$0xff]
    %v284 = vld [vmem:[%s1 + $0x810] sm:$0xff]
    %v285 = vld [vmem:[%s1 + $0x818] sm:$0xff]
    %v286 = vld [vmem:[%s1 + $0x820] sm:$0xff]
    %v287 = vld [vmem:[%s1 + $0x828] sm:$0xff]
    %v288 = vld [vmem:[%s1 + $0x830] sm:$0xff]
    %v289 = vld [vmem:[%s1 + $0x838] sm:$0xff]
    %v290 = vld [vmem:[%s1 + $0x840] sm:$0xff]
    %v291 = vld [vmem:[%s1 + $0x848] sm:$0xff]
    %v292 = vld [vmem:[%s1 + $0x850] sm:$0xff]
    %v293 = vld [vmem:[%s1 + $0x858] sm:$0xff]
    %v294 = vld [vmem:[%s1 + $0x860] sm:$0xff]
    %v295 = vld [vmem:[%s1 + $0x868] sm:$0xff]
    %v296 = vld [vmem:[%s1 + $0x870] sm:$0xff]
    %v297 = vld [vmem:[%s1 + $0x878] sm:$0xff]
    %v298 = vld [vmem:[%s1 + $0x880] sm:$0xff]
    %v299 = vld [vmem:[%s1 + $0x888] sm:$0xff]
    %v300 = vld [vmem:[%s1 + $0x890] sm:$0xff]
    %v301 = vld [vmem:[%s1 + $0x898] sm:$0xff]
    %v302 = vld [vmem:[%s1 + $0x8a0] sm:$0xff]
    %v303 = vld [vmem:[%s1 + $0x8a8] sm:$0xff]
    %v304 = vld [vmem:[%s1 + $0x8b0] sm:$0xff]
    %v305 = vld [vmem:[%s1 + $0x8b8] sm:$0xff]
    %v306 = vld [vmem:[%s1 + $0x8c0] sm:$0xff]
    %v307 = vld [vmem:[%s1 + $0x8c8] sm:$0xff]
    %v308 = vld [vmem:[%s1 + $0x8d0] sm:$0xff]
    %v309 = vld [vmem:[%s1 + $0x8d8] sm:$0xff]
    %v310 = vld [vmem:[%s1 + $0x8e0] sm:$0xff]
    %v311 = vld [vmem:[%s1 + $0x8e8] sm:$0xff]
    %v312 = vld [vmem:[%s1 + $0x8f0] sm:$0xff]
    %v313 = vld [vmem:[%s1 + $0x8f8] sm:$0xff]
    %v314 = vld [vmem:[%s1 + $0x900] sm:$0xff]
    %v315 = vld [vmem:[%s1 + $0x908] sm:$0xff]
    %v316 = vld [vmem:[%s1 + $0x910] sm:$0xff]
    %v317 = vld [vmem:[%s1 + $0x918] sm:$0xff]
    %v318 = vld [vmem:[%s2] sm:$0x1]
    %v320 = vperm.slane %v318, 0
    %327 = vst [vmem:[#allocation1] ss:$4 sm:$0xff] %v21
    %s328 = scalar_lea.vmem [#allocation1], 32
    %329 = vst [vmem:[%s328] ss:$4 sm:$0xff] %v22
    %v330 = vld.sshfl [vmem:[#allocation1] sm:$0xff pattern:$0x73625140]
    %v331 = vld.sshfl [vmem:[#allocation1 + $0x8] sm:$0xff pattern:$0x73625140]
    %v332 = vld.sshfl [vmem:[#allocation1 + $0x10] sm:$0xff pattern:$0x73625140]
    %v333 = vld.sshfl [vmem:[#allocation1 + $0x18] sm:$0xff pattern:$0x73625140]
    %v334 = vld.sshfl [vmem:[#allocation1 + $0x20] sm:$0xff pattern:$0x73625140]
    %v335 = vld.sshfl [vmem:[#allocation1 + $0x28] sm:$0xff pattern:$0x73625140]
    %v336 = vld.sshfl [vmem:[#allocation1 + $0x30] sm:$0xff pattern:$0x73625140]
    %v337 = vld.sshfl [vmem:[#allocation1 + $0x38] sm:$0xff pattern:$0x73625140]
    %338 = vst [vmem:[#allocation1] ss:$4 sm:$0xff] %v23
    %339 = vst [vmem:[%s328] ss:$4 sm:$0xff] %v24
    %v340 = vld.sshfl [vmem:[#allocation1] sm:$0xff pattern:$0x73625140]
    %v341 = vld.sshfl [vmem:[#allocation1 + $0x8] sm:$0xff pattern:$0x73625140]
    %v342 = vld.sshfl [vmem:[#allocation1 + $0x10] sm:$0xff pattern:$0x73625140]
    %v343 = vld.sshfl [vmem:[#allocation1 + $0x18] sm:$0xff pattern:$0x73625140]
    %v344 = vld.sshfl [vmem:[#allocation1 + $0x20] sm:$0xff pattern:$0x73625140]
    %v345 = vld.sshfl [vmem:[#allocation1 + $0x28] sm:$0xff pattern:$0x73625140]
    %v346 = vld.sshfl [vmem:[#allocation1 + $0x30] sm:$0xff pattern:$0x73625140]
    %v347 = vld.sshfl [vmem:[#allocation1 + $0x38] sm:$0xff pattern:$0x73625140]
    %348 = vst [vmem:[#allocation1] ss:$4 sm:$0xff] %v25
    %v349 = vld.sshfl [vmem:[#allocation1] sm:$0xff pattern:$0x73625140]
    %v350 = vld.sshfl [vmem:[#allocation1 + $0x8] sm:$0xff pattern:$0x73625140]
    %v351 = vld.sshfl [vmem:[#allocation1 + $0x10] sm:$0xff pattern:$0x73625140]
    %vm370 = vcmask 261120
    %v371 = vsel %vm370, %v351, 0
    %373 = vmatpush.msra.mxu0 %v41
    %374 = vmatpush.msra.mxu0 %v40
    %375 = vmatpush.msra.mxu0 %v39
    %376 = vmatpush.msra.mxu0 %v38
    %377 = vmatpush.msra.mxu0 %v37
    %378 = vmatpush.msra.mxu0 %v36
    %379 = vmatpush.msra.mxu0 %v35
    %380 = vmatpush.msra.mxu0 %v34
    %381 = vmatpush.msra.mxu0 %v33
    %382 = vmatpush.msra.mxu0 %v32
    %383 = vmatpush.msra.mxu0 %v31
    %384 = vmatpush.msra.mxu0 %v30
    %385 = vmatpush.msra.mxu0 %v29
    %386 = vmatpush.msra.mxu0 %v28
    %387 = vmatpush.msra.mxu0 %v27
    %388 = vmatpush.msra.mxu0 %v26
    %389 = vmatmul.f32.gmra.mxu0 %v330
    %v390 = vpop.f32.mrf.mxu0
    %v391 = vadd.f32 %v320, %v390
    %392 = vdwg.mxu0
    %393 = vmatpush.msra.mxu0 %v57
    %394 = vmatpush.msra.mxu0 %v56
    %395 = vmatpush.msra.mxu0 %v55
    %396 = vmatpush.msra.mxu0 %v54
    %397 = vmatpush.msra.mxu0 %v53
    %398 = vmatpush.msra.mxu0 %v52
    %399 = vmatpush.msra.mxu0 %v51
    %400 = vmatpush.msra.mxu0 %v50
    %401 = vmatpush.msra.mxu0 %v49
    %402 = vmatpush.msra.mxu0 %v48
    %403 = vmatpush.msra.mxu0 %v47
    %404 = vmatpush.msra.mxu0 %v46
    %405 = vmatpush.msra.mxu0 %v45
    %406 = vmatpush.msra.mxu0 %v44
    %407 = vmatpush.msra.mxu0 %v43
    %408 = vmatpush.msra.mxu0 %v42
    %409 = vmatmul.f32.gmra.mxu0 %v331
    %v410 = vpop.f32.mrf.mxu0
    %v411 = vadd.f32 %v391, %v410
    %412 = vdwg.mxu0
    %413 = vmatpush.msra.mxu0 %v73
    %414 = vmatpush.msra.mxu0 %v72
    %415 = vmatpush.msra.mxu0 %v71
    %416 = vmatpush.msra.mxu0 %v70
    %417 = vmatpush.msra.mxu0 %v69
    %418 = vmatpush.msra.mxu0 %v68
    %419 = vmatpush.msra.mxu0 %v67
    %420 = vmatpush.msra.mxu0 %v66
    %421 = vmatpush.msra.mxu0 %v65
    %422 = vmatpush.msra.mxu0 %v64
    %423 = vmatpush.msra.mxu0 %v63
    %424 = vmatpush.msra.mxu0 %v62
    %425 = vmatpush.msra.mxu0 %v61
    %426 = vmatpush.msra.mxu0 %v60
    %427 = vmatpush.msra.mxu0 %v59
    %428 = vmatpush.msra.mxu0 %v58
    %429 = vmatmul.f32.gmra.mxu0 %v332
    %v430 = vpop.f32.mrf.mxu0
    %v431 = vadd.f32 %v411, %v430
    %432 = vdwg.mxu0
    %433 = vmatpush.msra.mxu0 %v89
    %434 = vmatpush.msra.mxu0 %v88
    %435 = vmatpush.msra.mxu0 %v87
    %436 = vmatpush.msra.mxu0 %v86
    %437 = vmatpush.msra.mxu0 %v85
    %438 = vmatpush.msra.mxu0 %v84
    %439 = vmatpush.msra.mxu0 %v83
    %440 = vmatpush.msra.mxu0 %v82
    %441 = vmatpush.msra.mxu0 %v81
    %442 = vmatpush.msra.mxu0 %v80
    %443 = vmatpush.msra.mxu0 %v79
    %444 = vmatpush.msra.mxu0 %v78
    %445 = vmatpush.msra.mxu0 %v77
    %446 = vmatpush.msra.mxu0 %v76
    %447 = vmatpush.msra.mxu0 %v75
    %448 = vmatpush.msra.mxu0 %v74
    %449 = vmatmul.f32.gmra.mxu0 %v333
    %v450 = vpop.f32.mrf.mxu0
    %v451 = vadd.f32 %v431, %v450
    %452 = vdwg.mxu0
    %453 = vmatpush.msra.mxu0 %v105
    %454 = vmatpush.msra.mxu0 %v104
    %455 = vmatpush.msra.mxu0 %v103
    %456 = vmatpush.msra.mxu0 %v102
    %457 = vmatpush.msra.mxu0 %v101
    %458 = vmatpush.msra.mxu0 %v100
    %459 = vmatpush.msra.mxu0 %v99
    %460 = vmatpush.msra.mxu0 %v98
    %461 = vmatpush.msra.mxu0 %v97
    %462 = vmatpush.msra.mxu0 %v96
    %463 = vmatpush.msra.mxu0 %v95
    %464 = vmatpush.msra.mxu0 %v94
    %465 = vmatpush.msra.mxu0 %v93
    %466 = vmatpush.msra.mxu0 %v92
    %467 = vmatpush.msra.mxu0 %v91
    %468 = vmatpush.msra.mxu0 %v90
    %469 = vmatmul.f32.gmra.mxu0 %v334
    %v470 = vpop.f32.mrf.mxu0
    %v471 = vadd.f32 %v451, %v470
    %472 = vdwg.mxu0
    %473 = vmatpush.msra.mxu0 %v121
    %474 = vmatpush.msra.mxu0 %v120
    %475 = vmatpush.msra.mxu0 %v119
    %476 = vmatpush.msra.mxu0 %v118
    %477 = vmatpush.msra.mxu0 %v117
    %478 = vmatpush.msra.mxu0 %v116
    %479 = vmatpush.msra.mxu0 %v115
    %480 = vmatpush.msra.mxu0 %v114
    %481 = vmatpush.msra.mxu0 %v113
    %482 = vmatpush.msra.mxu0 %v112
    %483 = vmatpush.msra.mxu0 %v111
    %484 = vmatpush.msra.mxu0 %v110
    %485 = vmatpush.msra.mxu0 %v109
    %486 = vmatpush.msra.mxu0 %v108
    %487 = vmatpush.msra.mxu0 %v107
    %488 = vmatpush.msra.mxu0 %v106
    %489 = vmatmul.f32.gmra.mxu0 %v335
    %v490 = vpop.f32.mrf.mxu0
    %v491 = vadd.f32 %v471, %v490
    %492 = vdwg.mxu0
    %493 = vmatpush.msra.mxu0 %v137
    %494 = vmatpush.msra.mxu0 %v136
    %495 = vmatpush.msra.mxu0 %v135
    %496 = vmatpush.msra.mxu0 %v134
    %497 = vmatpush.msra.mxu0 %v133
    %498 = vmatpush.msra.mxu0 %v132
    %499 = vmatpush.msra.mxu0 %v131
    %500 = vmatpush.msra.mxu0 %v130
    %501 = vmatpush.msra.mxu0 %v129
    %502 = vmatpush.msra.mxu0 %v128
    %503 = vmatpush.msra.mxu0 %v127
    %504 = vmatpush.msra.mxu0 %v126
    %505 = vmatpush.msra.mxu0 %v125
    %506 = vmatpush.msra.mxu0 %v124
    %507 = vmatpush.msra.mxu0 %v123
    %508 = vmatpush.msra.mxu0 %v122
    %509 = vmatmul.f32.gmra.mxu0 %v336
    %v510 = vpop.f32.mrf.mxu0
    %v511 = vadd.f32 %v491, %v510
    %512 = vdwg.mxu0
    %513 = vmatpush.msra.mxu0 %v153
    %514 = vmatpush.msra.mxu0 %v152
    %515 = vmatpush.msra.mxu0 %v151
    %516 = vmatpush.msra.mxu0 %v150
    %517 = vmatpush.msra.mxu0 %v149
    %518 = vmatpush.msra.mxu0 %v148
    %519 = vmatpush.msra.mxu0 %v147
    %520 = vmatpush.msra.mxu0 %v146
    %521 = vmatpush.msra.mxu0 %v145
    %522 = vmatpush.msra.mxu0 %v144
    %523 = vmatpush.msra.mxu0 %v143
    %524 = vmatpush.msra.mxu0 %v142
    %525 = vmatpush.msra.mxu0 %v141
    %526 = vmatpush.msra.mxu0 %v140
    %527 = vmatpush.msra.mxu0 %v139
    %528 = vmatpush.msra.mxu0 %v138
    %529 = vmatmul.f32.gmra.mxu0 %v337
    %v530 = vpop.f32.mrf.mxu0
    %v531 = vadd.f32 %v511, %v530
    %532 = vdwg.mxu0
    %533 = vmatpush.msra.mxu0 %v169
    %534 = vmatpush.msra.mxu0 %v168
    %535 = vmatpush.msra.mxu0 %v167
    %536 = vmatpush.msra.mxu0 %v166
    %537 = vmatpush.msra.mxu0 %v165
    %538 = vmatpush.msra.mxu0 %v164
    %539 = vmatpush.msra.mxu0 %v163
    %540 = vmatpush.msra.mxu0 %v162
    %541 = vmatpush.msra.mxu0 %v161
    %542 = vmatpush.msra.mxu0 %v160
    %543 = vmatpush.msra.mxu0 %v159
    %544 = vmatpush.msra.mxu0 %v158
    %545 = vmatpush.msra.mxu0 %v157
    %546 = vmatpush.msra.mxu0 %v156
    %547 = vmatpush.msra.mxu0 %v155
    %548 = vmatpush.msra.mxu0 %v154
    %549 = vmatmul.f32.gmra.mxu0 %v340
    %v550 = vpop.f32.mrf.mxu0
    %v551 = vadd.f32 %v531, %v550
    %552 = vdwg.mxu0
    %553 = vmatpush.msra.mxu0 %v185
    %554 = vmatpush.msra.mxu0 %v184
    %555 = vmatpush.msra.mxu0 %v183
    %556 = vmatpush.msra.mxu0 %v182
    %557 = vmatpush.msra.mxu0 %v181
    %558 = vmatpush.msra.mxu0 %v180
    %559 = vmatpush.msra.mxu0 %v179
    %560 = vmatpush.msra.mxu0 %v178
    %561 = vmatpush.msra.mxu0 %v177
    %562 = vmatpush.msra.mxu0 %v176
    %563 = vmatpush.msra.mxu0 %v175
    %564 = vmatpush.msra.mxu0 %v174
    %565 = vmatpush.msra.mxu0 %v173
    %566 = vmatpush.msra.mxu0 %v172
    %567 = vmatpush.msra.mxu0 %v171
    %568 = vmatpush.msra.mxu0 %v170
    %569 = vmatmul.f32.gmra.mxu0 %v341
    %v570 = vpop.f32.mrf.mxu0
    %v571 = vadd.f32 %v551, %v570
    %572 = vdwg.mxu0
    %573 = vmatpush.msra.mxu0 %v201
    %574 = vmatpush.msra.mxu0 %v200
    %575 = vmatpush.msra.mxu0 %v199
    %576 = vmatpush.msra.mxu0 %v198
    %577 = vmatpush.msra.mxu0 %v197
    %578 = vmatpush.msra.mxu0 %v196
    %579 = vmatpush.msra.mxu0 %v195
    %580 = vmatpush.msra.mxu0 %v194
    %581 = vmatpush.msra.mxu0 %v193
    %582 = vmatpush.msra.mxu0 %v192
    %583 = vmatpush.msra.mxu0 %v191
    %584 = vmatpush.msra.mxu0 %v190
    %585 = vmatpush.msra.mxu0 %v189
    %586 = vmatpush.msra.mxu0 %v188
    %587 = vmatpush.msra.mxu0 %v187
    %588 = vmatpush.msra.mxu0 %v186
    %589 = vmatmul.f32.gmra.mxu0 %v342
    %v590 = vpop.f32.mrf.mxu0
    %v591 = vadd.f32 %v571, %v590
    %592 = vdwg.mxu0
    %593 = vmatpush.msra.mxu0 %v217
    %594 = vmatpush.msra.mxu0 %v216
    %595 = vmatpush.msra.mxu0 %v215
    %596 = vmatpush.msra.mxu0 %v214
    %597 = vmatpush.msra.mxu0 %v213
    %598 = vmatpush.msra.mxu0 %v212
    %599 = vmatpush.msra.mxu0 %v211
    %600 = vmatpush.msra.mxu0 %v210
    %601 = vmatpush.msra.mxu0 %v209
    %602 = vmatpush.msra.mxu0 %v208
    %603 = vmatpush.msra.mxu0 %v207
    %604 = vmatpush.msra.mxu0 %v206
    %605 = vmatpush.msra.mxu0 %v205
    %606 = vmatpush.msra.mxu0 %v204
    %607 = vmatpush.msra.mxu0 %v203
    %608 = vmatpush.msra.mxu0 %v202
    %609 = vmatmul.f32.gmra.mxu0 %v343
    %v610 = vpop.f32.mrf.mxu0
    %v611 = vadd.f32 %v591, %v610
    %612 = vdwg.mxu0
    %613 = vmatpush.msra.mxu0 %v233
    %614 = vmatpush.msra.mxu0 %v232
    %615 = vmatpush.msra.mxu0 %v231
    %616 = vmatpush.msra.mxu0 %v230
    %617 = vmatpush.msra.mxu0 %v229
    %618 = vmatpush.msra.mxu0 %v228
    %619 = vmatpush.msra.mxu0 %v227
    %620 = vmatpush.msra.mxu0 %v226
    %621 = vmatpush.msra.mxu0 %v225
    %622 = vmatpush.msra.mxu0 %v224
    %623 = vmatpush.msra.mxu0 %v223
    %624 = vmatpush.msra.mxu0 %v222
    %625 = vmatpush.msra.mxu0 %v221
    %626 = vmatpush.msra.mxu0 %v220
    %627 = vmatpush.msra.mxu0 %v219
    %628 = vmatpush.msra.mxu0 %v218
    %629 = vmatmul.f32.gmra.mxu0 %v344
    %v630 = vpop.f32.mrf.mxu0
    %v631 = vadd.f32 %v611, %v630
    %632 = vdwg.mxu0
    %633 = vmatpush.msra.mxu0 %v249
    %634 = vmatpush.msra.mxu0 %v248
    %635 = vmatpush.msra.mxu0 %v247
    %636 = vmatpush.msra.mxu0 %v246
    %637 = vmatpush.msra.mxu0 %v245
    %638 = vmatpush.msra.mxu0 %v244
    %639 = vmatpush.msra.mxu0 %v243
    %640 = vmatpush.msra.mxu0 %v242
    %641 = vmatpush.msra.mxu0 %v241
    %642 = vmatpush.msra.mxu0 %v240
    %643 = vmatpush.msra.mxu0 %v239
    %644 = vmatpush.msra.mxu0 %v238
    %645 = vmatpush.msra.mxu0 %v237
    %646 = vmatpush.msra.mxu0 %v236
    %647 = vmatpush.msra.mxu0 %v235
    %648 = vmatpush.msra.mxu0 %v234
    %649 = vmatmul.f32.gmra.mxu0 %v345
    %v650 = vpop.f32.mrf.mxu0
    %v651 = vadd.f32 %v631, %v650
    %652 = vdwg.mxu0
    %653 = vmatpush.msra.mxu0 %v265
    %654 = vmatpush.msra.mxu0 %v264
    %655 = vmatpush.msra.mxu0 %v263
    %656 = vmatpush.msra.mxu0 %v262
    %657 = vmatpush.msra.mxu0 %v261
    %658 = vmatpush.msra.mxu0 %v260
    %659 = vmatpush.msra.mxu0 %v259
    %660 = vmatpush.msra.mxu0 %v258
    %661 = vmatpush.msra.mxu0 %v257
    %662 = vmatpush.msra.mxu0 %v256
    %663 = vmatpush.msra.mxu0 %v255
    %664 = vmatpush.msra.mxu0 %v254
    %665 = vmatpush.msra.mxu0 %v253
    %666 = vmatpush.msra.mxu0 %v252
    %667 = vmatpush.msra.mxu0 %v251
    %668 = vmatpush.msra.mxu0 %v250
    %669 = vmatmul.f32.gmra.mxu0 %v346
    %v670 = vpop.f32.mrf.mxu0
    %v671 = vadd.f32 %v651, %v670
    %672 = vdwg.mxu0
    %673 = vmatpush.msra.mxu0 %v281
    %674 = vmatpush.msra.mxu0 %v280
    %675 = vmatpush.msra.mxu0 %v279
    %676 = vmatpush.msra.mxu0 %v278
    %677 = vmatpush.msra.mxu0 %v277
    %678 = vmatpush.msra.mxu0 %v276
    %679 = vmatpush.msra.mxu0 %v275
    %680 = vmatpush.msra.mxu0 %v274
    %681 = vmatpush.msra.mxu0 %v273
    %682 = vmatpush.msra.mxu0 %v272
    %683 = vmatpush.msra.mxu0 %v271
    %684 = vmatpush.msra.mxu0 %v270
    %685 = vmatpush.msra.mxu0 %v269
    %686 = vmatpush.msra.mxu0 %v268
    %687 = vmatpush.msra.mxu0 %v267
    %688 = vmatpush.msra.mxu0 %v266
    %689 = vmatmul.f32.gmra.mxu0 %v347
    %v690 = vpop.f32.mrf.mxu0
    %v691 = vadd.f32 %v671, %v690
    %692 = vdwg.mxu0
    %693 = vmatpush.msra.mxu0 %v297
    %694 = vmatpush.msra.mxu0 %v296
    %695 = vmatpush.msra.mxu0 %v295
    %696 = vmatpush.msra.mxu0 %v294
    %697 = vmatpush.msra.mxu0 %v293
    %698 = vmatpush.msra.mxu0 %v292
    %699 = vmatpush.msra.mxu0 %v291
    %700 = vmatpush.msra.mxu0 %v290
    %701 = vmatpush.msra.mxu0 %v289
    %702 = vmatpush.msra.mxu0 %v288
    %703 = vmatpush.msra.mxu0 %v287
    %704 = vmatpush.msra.mxu0 %v286
    %705 = vmatpush.msra.mxu0 %v285
    %706 = vmatpush.msra.mxu0 %v284
    %707 = vmatpush.msra.mxu0 %v283
    %708 = vmatpush.msra.mxu0 %v282
    %709 = vmatmul.f32.gmra.mxu0 %v349
    %v710 = vpop.f32.mrf.mxu0
    %v711 = vadd.f32 %v691, %v710
    %712 = vdwg.mxu0
    %713 = vmatpush.msra.mxu0 %v313
    %714 = vmatpush.msra.mxu0 %v312
    %715 = vmatpush.msra.mxu0 %v311
    %716 = vmatpush.msra.mxu0 %v310
    %717 = vmatpush.msra.mxu0 %v309
    %718 = vmatpush.msra.mxu0 %v308
    %719 = vmatpush.msra.mxu0 %v307
    %720 = vmatpush.msra.mxu0 %v306
    %721 = vmatpush.msra.mxu0 %v305
    %722 = vmatpush.msra.mxu0 %v304
    %723 = vmatpush.msra.mxu0 %v303
    %724 = vmatpush.msra.mxu0 %v302
    %725 = vmatpush.msra.mxu0 %v301
    %726 = vmatpush.msra.mxu0 %v300
    %727 = vmatpush.msra.mxu0 %v299
    %728 = vmatpush.msra.mxu0 %v298
    %729 = vmatmul.f32.gmra.mxu0 %v350
    %v730 = vpop.f32.mrf.mxu0
    %v731 = vadd.f32 %v711, %v730
    %732 = vdwg.mxu0
    %733 = vmatpush.msra.mxu0 0.0
    %734 = vmatpush.msra.mxu0 0.0
    %735 = vmatpush.msra.mxu0 0.0
    %736 = vmatpush.msra.mxu0 0.0
    %737 = vmatpush.msra.mxu0 0.0
    %738 = vmatpush.msra.mxu0 0.0
    %739 = vmatpush.msra.mxu0 0.0
    %740 = vmatpush.msra.mxu0 0.0
    %741 = vmatpush.msra.mxu0 0.0
    %742 = vmatpush.msra.mxu0 0.0
    %743 = vmatpush.msra.mxu0 0.0
    %744 = vmatpush.msra.mxu0 0.0
    %745 = vmatpush.msra.mxu0 %v317
    %746 = vmatpush.msra.mxu0 %v316
    %747 = vmatpush.msra.mxu0 %v315
    %748 = vmatpush.msra.mxu0 %v314
    %749 = vmatmul.f32.gmra.mxu0 %v371
    %v750 = vpop.f32.mrf.mxu0
    %v751 = vadd.f32 %v731, %v750
    %752 = vdwg.mxu0
    %v753 = vmax.f32 %v751, 0.0
    %v754 = vld [vmem:[%s3] sm:$0xff]
    %v755 = vld [vmem:[%s3 + $0x8] sm:$0xff]
    %v756 = vld [vmem:[%s3 + $0x10] sm:$0xff]
    %v757 = vld [vmem:[%s3 + $0x18] sm:$0xff]
    %v758 = vld [vmem:[%s4] sm:$0x1]
    %v760 = vperm.slane %v758, 0
    %v763 = vsel %vm370, %v753, 0
    %765 = vmatpush.msra.mxu0 0.0
    %766 = vmatpush.msra.mxu0 0.0
    %767 = vmatpush.msra.mxu0 0.0
    %768 = vmatpush.msra.mxu0 0.0
    %769 = vmatpush.msra.mxu0 0.0
    %770 = vmatpush.msra.mxu0 0.0
    %771 = vmatpush.msra.mxu0 0.0
    %772 = vmatpush.msra.mxu0 0.0
    %773 = vmatpush.msra.mxu0 0.0
    %774 = vmatpush.msra.mxu0 0.0
    %775 = vmatpush.msra.mxu0 0.0
    %776 = vmatpush.msra.mxu0 0.0
    %777 = vmatpush.msra.mxu0 %v757
    %778 = vmatpush.msra.mxu0 %v756
    %779 = vmatpush.msra.mxu0 %v755
    %780 = vmatpush.msra.mxu0 %v754
    %781 = vmatmul.f32.gmra.mxu0 %v763
    %v782 = vpop.f32.mrf.mxu0
    %v783 = vadd.f32 %v760, %v782
    %784 = vdwg.mxu0
    %vm785 = vcmask 189440
    %786 = vst.msk [vmem:[#allocation2] sm:$0x3] %vm785, %v783
    // Predicated region
    $region22: #{model_b_forward.11} parent=1 // pred_check
      _
    $region23: #{model_b_forward.11} parent=1 // pred_check_branch
      %788 = sbr.rel (0) target = $region25
    $region24: #{model_b_forward.11} parent=1 // pred_region
      %790 = vsyncadd [#allocation3], 0
      %s792 = sshll.u32 [#allocation2], 4
      %s793 = int_to_ptr.vmem [resolvable:$true] %s792
      %s794 = sshll.u32 %s5, 4
      %s795 = int_to_ptr.hbm [resolvable:$true] %s794
      %797 = dma.vmem_to_hbm [thread:$0]  %s793, 32, %s795, [#allocation3]
    $region25: #{model_b_forward.11} parent=1 // pred_fallthru
      _
    // Predicated region
    $region26: #{model_b_forward.11} parent=1 // pred_check
      _
    $region27: #{model_b_forward.11} parent=1 // pred_check_branch
      %799 = sbr.rel (0) target = $region29
    $region28: #{model_b_forward.11} parent=1 // pred_region
      %801 = dma.done [#allocation3], 32
    $region29: #{model_b_forward.11} parent=1 // pred_fallthru
      _
    %802 = vsyncpa [#allocation3], 1

</llo_original>
